<compile_context>
chip_gen: v5e
topology: v5e:2x2
jax: 0.10.0
libtpu: 0.0.40
codegen_flags: <defaults>
</compile_context>

<pallas_src>
import math
from functools import partial

import jax
import jax.numpy as jnp
from jax.experimental import pallas as pl
from jax.experimental.pallas import tpu as pltpu


# --------------------------------------------------------------------------- shared math

def _mm(x, w):
    # bf16 MXU matmul with f32 accumulation (used identically by kernel & reference).
    return jnp.dot(x.astype(jnp.bfloat16), w.astype(jnp.bfloat16),
                   preferred_element_type=jnp.float32)


def _silu(x):
    return x * jax.nn.sigmoid(x)


def _edge_features(dist, n_idx, cutoff):
    # sinc_expansion: sin(n*pi*d/cutoff)/d  (torch.sinc limit n*pi/cutoff at d == 0)
    safe_d = jnp.where(dist > 0.0, dist, 1.0)
    es = jnp.where(dist > 0.0,
                   jnp.sin(n_idx * (math.pi / cutoff) * dist) / safe_d,
                   n_idx * (math.pi / cutoff))
    # cosine_cutoff
    cutval = jnp.where(dist < cutoff,
                       0.5 * (jnp.cos(math.pi * dist / cutoff) + 1.0),
                       0.0)
    return es, cutval


# --------------------------------------------------------------------------- Pallas kernel

def painn_layer_kernel(
        # scalar-prefetch (SMEM)
        send_ref, recv_ref,
        # inputs (VMEM; all resident except dd_ref which is tiled over edges)
        ns_ref, nv_ref, dd_ref,
        wf_ref, bf_ref, wm1_ref, bm1_ref, wm2_ref, bm2_ref,
        wu_ref, wv_ref, wc1a_ref, wc1b_ref, bc1_ref, wc2_ref, bc2_ref,
        # output:  (N, 4H)  [:, :H] scalar state, [:, H:4H] flattened vector state
        out_ref,
        # VMEM scratch (persistent across the edge grid)
        node_cat, acc, gath, msg,
        *, H, S, cutoff, tile_e):
    t = pl.program_id(0)
    last = pl.num_programs(0) - 1

    # ---- first edge tile: zero accumulator + per-node scalar-message MLP + pack ----
    @pl.when(t == 0)
    def _init():
        ns = ns_ref[...]                                            # (N, H)
        h = _silu(_mm(ns, wm1_ref[...]) + bm1_ref[...])
        so = _mm(h, wm2_ref[...]) + bm2_ref[...]                    # (N, 3H)
        node_cat[...] = jnp.concatenate([ns, so, nv_ref[...]], axis=1)  # (N, 7H)
        acc[...] = jnp.zeros_like(acc)                              # (N, 4H)

    e0 = t * tile_e

    # ---- gather sender rows for this edge tile (one wide row copy per edge) ----
    def gather_body(i, carry):
        s = send_ref[e0 + i]
        gath[pl.ds(i, 1), :] = node_cat[pl.ds(s, 1), :]
        return carry

    jax.lax.fori_loop(0, tile_e, gather_body, 0, unroll=True)

    # ---- vectorized per-edge message math (edge features fused in-kernel) ----
    dd = dd_ref[...]                                                # (tE, 4)
    dist = dd[:, 0:1]
    dx = dd[:, 1:2]
    dy = dd[:, 2:3]
    dz = dd[:, 3:4]
    n_idx = (jax.lax.broadcasted_iota(jnp.int32, (tile_e, S), 1) + 1).astype(jnp.float32)
    es, cutval = _edge_features(dist, n_idx, cutoff)
    filt = (_mm(es, wf_ref[...]) + bf_ref[...]) * cutval            # (tE, 3H)

    g = gath[...]                                                   # (tE, 7H)
    gath_s = g[:, 0:H]
    gath_so = g[:, H:4 * H]
    gath_v = g[:, 4 * H:7 * H]

    fo = filt * gath_so
    gsv = fo[:, 0:H]
    gev = fo[:, H:2 * H]
    gns = fo[:, 2 * H:3 * H]

    norm = jnp.maximum(jnp.sqrt(dx * dx + dy * dy + dz * dz), 1e-9)
    dnx = dx / norm
    dny = dy / norm
    dnz = dz / norm

    msg_s = gath_s * gns                                            # (tE, H)
    msg_v = jnp.concatenate([gath_v[:, 0:H] * gsv + gev * dnx,
                             gath_v[:, H:2 * H] * gsv + gev * dny,
                             gath_v[:, 2 * H:3 * H] * gsv + gev * dnz], axis=1)
    msg[...] = jnp.concatenate([msg_s, msg_v], axis=1)              # (tE, 4H)

    # ---- scatter-add messages into the VMEM accumulator (one RMW row per edge) ----
    def scatter_body(i, carry):
        r = recv_ref[e0 + i]
        acc[pl.ds(r, 1), :] = acc[pl.ds(r, 1), :] + msg[pl.ds(i, 1), :]
        return carry

    jax.lax.fori_loop(0, tile_e, scatter_body, 0, unroll=True)

    # ---- last edge tile: residual + PaiNNUpdate + lane-dense writeback ----
    @pl.when(t == last)
    def _final():
        a_all = acc[...]
        new_s = ns_ref[...] + a_all[:, 0:H]                         # (N, H)
        new_v = nv_ref[...] + a_all[:, H:4 * H]                     # (N, 3H)
        vx = new_v[:, 0:H]
        vy = new_v[:, H:2 * H]
        vz = new_v[:, 2 * H:3 * H]
        wu = wu_ref[...]
        wv = wv_ref[...]
        uvx = _mm(vx, wu)
        uvy = _mm(vy, wu)
        uvz = _mm(vz, wu)
        vvx = _mm(vx, wv)
        vvy = _mm(vy, wv)
        vvz = _mm(vz, wv)
        vv_norm = jnp.sqrt(vvx * vvx + vvy * vvy + vvz * vvz)
        a = _silu(_mm(new_s, wc1a_ref[...]) + _mm(vv_norm, wc1b_ref[...]) + bc1_ref[...])
        mo = _mm(a, wc2_ref[...]) + bc2_ref[...]                    # (N, 3H)
        a_ss = mo[:, 0:H]
        a_sv = mo[:, H:2 * H]
        a_vv = mo[:, 2 * H:3 * H]
        inner = uvx * vvx + uvy * vvy + uvz * vvz
        out_s = new_s + a_ss + a_sv * inner
        out_v = jnp.concatenate([vx + a_vv * uvx,
                                 vy + a_vv * uvy,
                                 vz + a_vv * uvz], axis=1)
        out_ref[...] = jnp.concatenate([out_s, out_v], axis=1)


# --------------------------------------------------------------------------- Pallas wrapper

_WMAT = ['W_f', 'W_m1', 'W_m2', 'W_U', 'W_V', 'W_c1a', 'W_c1b', 'W_c2']
_ORDER = ['W_f', 'b_f', 'W_m1', 'b_m1', 'W_m2', 'b_m2',
          'W_U', 'W_V', 'W_c1a', 'W_c1b', 'b_c1', 'W_c2', 'b_c2']


def painn_layer_pallas(ns, nv, dd, send, recv, p, *, cutoff, edge_size, tile_e):
    N, H = ns.shape
    nv_flat = jnp.reshape(nv, (N, 3 * H))
    Epad = dd.shape[0]
    T = Epad // tile_e
    # matmul weights pre-cast to bf16 (halves VMEM / HBM traffic); biases stay f32.
    wlist = [p[k].astype(jnp.bfloat16) if k in _WMAT else p[k] for k in _ORDER]

    res2 = lambda t, s, r: (0, 0)
    in_specs = [pl.BlockSpec((N, H), res2),
                pl.BlockSpec((N, 3 * H), res2),
                pl.BlockSpec((tile_e, 4), lambda t, s, r: (t, 0))]
    in_specs += [pl.BlockSpec(w.shape, res2) for w in wlist]

    grid_spec = pltpu.PrefetchScalarGridSpec(
        num_scalar_prefetch=2,
        grid=(T,),
        in_specs=in_specs,
        out_specs=pl.BlockSpec((N, 4 * H), res2),
        scratch_shapes=[
            pltpu.VMEM((N, 7 * H), jnp.float32),        # node_cat  [ns | so | nv]
            pltpu.VMEM((N, 4 * H), jnp.float32),        # acc       [msg_s | msg_v]
            pltpu.VMEM((tile_e, 7 * H), jnp.float32),   # gath
            pltpu.VMEM((tile_e, 4 * H), jnp.float32),   # msg
        ],
    )

    out = pl.pallas_call(
        partial(painn_layer_kernel, H=H, S=edge_size, cutoff=cutoff, tile_e=tile_e),
        grid_spec=grid_spec,
        out_shape=jax.ShapeDtypeStruct((N, 4 * H), jnp.float32),
        compiler_params=pltpu.CompilerParams(dimension_semantics=("arbitrary",)),
    )(send, recv, ns, nv_flat, dd, *wlist)

    out_s = out[:, 0:H]
    out_v = jnp.reshape(out[:, H:4 * H], (N, 3, H))
    return out_s, out_v


# --------------------------------------------------------------------------- pure-JAX reference

def painn_layer_ref(ns, nv, dd, send, recv, p, *, cutoff, edge_size, tile_e=None):
    N, H = ns.shape
    dist = dd[:, 0:1]
    dx = dd[:, 1:2]
    dy = dd[:, 2:3]
    dz = dd[:, 3:4]
    n_idx = (jnp.arange(edge_size, dtype=jnp.float32) + 1.0)[None, :]
    es, cutval = _edge_features(dist, n_idx, cutoff)
    filt = (_mm(es, p['W_f']) + p['b_f']) * cutval                  # (E, 3H)
    so = _mm(_silu(_mm(ns, p['W_m1']) + p['b_m1']), p['W_m2']) + p['b_m2']
    fo = filt * so[send]
    gsv, gev, gns = fo[:, 0:H], fo[:, H:2 * H], fo[:, 2 * H:3 * H]
    norm = jnp.maximum(jnp.sqrt(dx * dx + dy * dy + dz * dz), 1e-9)
    dn = jnp.concatenate([dx / norm, dy / norm, dz / norm], axis=1)  # (E, 3)
    msg_s = ns[send] * gns
    msg_v = nv[send] * gsv[:, None, :] + gev[:, None, :] * dn[:, :, None]
    new_s = ns + jnp.zeros_like(ns).at[recv].add(msg_s)
    new_v = nv + jnp.zeros_like(nv).at[recv].add(msg_v)
    # PaiNNUpdate
    Uv = _mm(new_v, p['W_U'])
    Vv = _mm(new_v, p['W_V'])
    vv_norm = jnp.sqrt(jnp.sum(Vv * Vv, axis=1))
    a = _silu(_mm(new_s, p['W_c1a']) + _mm(vv_norm, p['W_c1b']) + p['b_c1'])
    mo = _mm(a, p['W_c2']) + p['b_c2']
    a_ss, a_sv, a_vv = mo[:, 0:H], mo[:, H:2 * H], mo[:, 2 * H:3 * H]
    inner = jnp.sum(Uv * Vv, axis=1)
    out_s = new_s + a_ss + a_sv * inner
    out_v = new_v + a_vv[:, None, :] * Uv
    return out_s, out_v


# --------------------------------------------------------------------------- model forward (glue + kernels)

def painn_atom_representation_forward(input_dict, params, *, cutoff, edge_size,
                                       tile_e, layer_fn):
    num_nodes = list(input_dict['num_nodes'])          # python ints (static glue)
    num_edges = list(input_dict['num_atom_edges'])
    B = len(num_nodes)

    def unpad_and_cat(x, counts):
        return jnp.concatenate([x[i, :counts[i]] for i in range(B)], axis=0)

    edges_displacement = unpad_and_cat(input_dict['atom_edges_displacement'], num_edges)
    edge_offset = jnp.cumsum(jnp.array([0] + num_nodes[:-1], dtype=jnp.int32))
    edges = input_dict['atom_edges'] + edge_offset[:, None, None]
    edges = unpad_and_cat(edges, num_edges)                          # (E, 2) global
    atom_xyz = unpad_and_cat(input_dict['atom_xyz'], num_nodes)      # (N, 3)
    nodes_z = unpad_and_cat(input_dict['nodes'], num_nodes)          # (N,)
    ns = params['atom_embeddings'][nodes_z]                          # (N, H)
    N, H = ns.shape
    nv = jnp.zeros((N, 3, H), jnp.float32)

    # calc_distance
    cells_rep = jnp.repeat(input_dict['cell'], jnp.array(num_edges), axis=0,
                           total_repeat_length=sum(num_edges))       # (E, 3, 3)
    disp = jnp.einsum('ej,ejk->ek', edges_displacement, cells_rep)
    neigh_abs_pos = atom_xyz[edges[:, 0]] + disp
    this_pos = atom_xyz[edges[:, 1]]
    diff = this_pos - neigh_abs_pos
    dist = jnp.sqrt(jnp.sum(diff * diff, axis=1, keepdims=True))     # (E, 1)

    # pack [dist, dx, dy, dz] and pad the edge axis to a multiple of tile_e;
    # padded edges have dist >= cutoff -> cosine cutoff zeroes their messages.
    E = dist.shape[0]
    Epad = ((E + tile_e - 1) // tile_e) * tile_e
    pad = Epad - E
    dd = jnp.concatenate([dist, diff], axis=1).astype(jnp.float32)   # (E, 4)
    send = edges[:, 0].astype(jnp.int32)
    recv = edges[:, 1].astype(jnp.int32)
    if pad > 0:
        dd_pad = jnp.concatenate([jnp.full((pad, 1), 2.0 * cutoff, jnp.float32),
                                  jnp.zeros((pad, 3), jnp.float32)], axis=1)
        dd = jnp.concatenate([dd, dd_pad], axis=0)
        send = jnp.concatenate([send, jnp.zeros((pad,), jnp.int32)])
        recv = jnp.concatenate([recv, jnp.zeros((pad,), jnp.int32)])

    list_s, list_v = [], []
    for lp in params['layers']:
        ns, nv = layer_fn(ns, nv, dd, send, recv, lp,
                          cutoff=cutoff, edge_size=edge_size, tile_e=tile_e)
        list_s.append(ns)
        list_v.append(nv)
    return list_s, list_v


# --------------------------------------------------------------------------- parameter init

def init_params(key, num_interactions, H, S, num_species=119):
    keys = jax.random.split(key, 1 + num_interactions)
    params = {
        'atom_embeddings': 0.1 * jax.random.normal(keys[0], (num_species, H), jnp.float32),
        'layers': [],
    }

    def lin(k, din, dout):
        kw, kb = jax.random.split(k)
        s = 1.0 / math.sqrt(din)
        return (jax.random.uniform(kw, (din, dout), jnp.float32, -s, s),
                jax.random.uniform(kb, (1, dout), jnp.float32, -s, s))

    for li in range(num_interactions):
        ks = jax.random.split(keys[1 + li], 8)
        W_f, b_f = lin(ks[0], S, 3 * H)
        W_m1, b_m1 = lin(ks[1], H, H)
        W_m2, b_m2 = lin(ks[2], H, 3 * H)
        W_U, _ = lin(ks[3], H, H)          # bias-free in the model
        W_V, _ = lin(ks[4], H, H)
        s2 = 1.0 / math.sqrt(2 * H)        # combined_mlp Linear(2H, H) split in halves
        k5a, k5b, k5c = jax.random.split(ks[5], 3)
        W_c1a = jax.random.uniform(k5a, (H, H), jnp.float32, -s2, s2)
        W_c1b = jax.random.uniform(k5b, (H, H), jnp.float32, -s2, s2)
        b_c1 = jax.random.uniform(k5c, (1, H), jnp.float32, -s2, s2)
        W_c2, b_c2 = lin(ks[6], H, 3 * H)
        params['layers'].append(dict(
            W_f=W_f, b_f=b_f, W_m1=W_m1, b_m1=b_m1, W_m2=W_m2, b_m2=b_m2,
            W_U=W_U, W_V=W_V, W_c1a=W_c1a, W_c1b=W_c1b, b_c1=b_c1,
            W_c2=W_c2, b_c2=b_c2))
    return params


# --------------------------------------------------------------------------- main

if __name__ == "__main__":
    key = jax.random.PRNGKey(0)
    k_xyz, k_z, k_edge, k_disp, k_param = jax.random.split(key, 5)

    # small synthetic config
    num_interactions = 2
    H = 32
    cutoff = 4.0
    distance_embedding_size = 16
    tile_e = 32

    B = 2
    max_nodes, max_edges = 10, 48
    num_nodes = [8, 8]                                 # total N = 16
    num_atom_edges = [24, 40]                          # total E = 64

    cell = jnp.tile(5.0 * jnp.eye(3, dtype=jnp.float32)[None], (B, 1, 1))
    atom_xyz = jax.random.uniform(k_xyz, (B, max_nodes, 3), jnp.float32, 0.0, 5.0)
    nodes_z = jax.random.randint(k_z, (B, max_nodes), 1, 95, dtype=jnp.int32)
    atom_edges = jax.random.randint(k_edge, (B, max_edges, 2), 0, 8, dtype=jnp.int32)
    atom_edges_displacement = jax.random.randint(
        k_disp, (B, max_edges, 3), -1, 2).astype(jnp.float32)

    input_dict = {
        'atom_edges': atom_edges,
        'atom_edges_displacement': atom_edges_displacement,
        'num_atom_edges': num_atom_edges,
        'atom_xyz': atom_xyz,
        'nodes': nodes_z,
        'num_nodes': num_nodes,
        'cell': cell,
    }

    params = init_params(k_param, num_interactions, H, distance_embedding_size)

    fwd = partial(painn_atom_representation_forward,
                  cutoff=cutoff, edge_size=distance_embedding_size, tile_e=tile_e)

    # Pallas-kernel forward
    out_s_list, out_v_list = fwd(input_dict, params, layer_fn=painn_layer_pallas)
    (out_s_list, out_v_list) = jax.block_until_ready((out_s_list, out_v_list))

    # pure-JAX reference (same bf16-matmul / f32-accumulate precision policy)
    ref_s_list, ref_v_list = fwd(input_dict, params, layer_fn=painn_layer_ref)
    (ref_s_list, ref_v_list) = jax.block_until_ready((ref_s_list, ref_v_list))

    for o, r in zip(out_s_list + out_v_list, ref_s_list + ref_v_list):
        assert o.shape == r.shape and o.dtype == r.dtype, (o.shape, r.shape, o.dtype, r.dtype)
        err = float(jnp.max(jnp.abs(o - r)))
        assert jnp.allclose(o, r, atol=1e-2, rtol=1e-2), err

    print("KERNEL_OK")
</pallas_src>

<mosaic_0001>
module attributes {stable_mosaic.version = 11 : i64} {
  func.func @painn_layer_kernel(%arg0: i32, %arg1: memref<64xi32, #tpu.memory_space<smem>>, %arg2: memref<64xi32, #tpu.memory_space<smem>>, %arg3: memref<16x32xf32, #tpu.memory_space<vmem>>, %arg4: memref<16x96xf32, #tpu.memory_space<vmem>>, %arg5: memref<32x4xf32, #tpu.memory_space<vmem>>, %arg6: memref<16x96xbf16, #tpu.memory_space<vmem>>, %arg7: memref<1x96xf32, #tpu.memory_space<vmem>>, %arg8: memref<32x32xbf16, #tpu.memory_space<vmem>>, %arg9: memref<1x32xf32, #tpu.memory_space<vmem>>, %arg10: memref<32x96xbf16, #tpu.memory_space<vmem>>, %arg11: memref<1x96xf32, #tpu.memory_space<vmem>>, %arg12: memref<32x32xbf16, #tpu.memory_space<vmem>>, %arg13: memref<32x32xbf16, #tpu.memory_space<vmem>>, %arg14: memref<32x32xbf16, #tpu.memory_space<vmem>>, %arg15: memref<32x32xbf16, #tpu.memory_space<vmem>>, %arg16: memref<1x32xf32, #tpu.memory_space<vmem>>, %arg17: memref<32x96xbf16, #tpu.memory_space<vmem>>, %arg18: memref<1x96xf32, #tpu.memory_space<vmem>>, %arg19: memref<16x128xf32, #tpu.memory_space<vmem>>, %arg20: memref<16x224xf32, #tpu.memory_space<vmem>>, %arg21: memref<16x128xf32, #tpu.memory_space<vmem>>, %arg22: memref<32x224xf32, #tpu.memory_space<vmem>>, %arg23: memref<32x128xf32, #tpu.memory_space<vmem>>) attributes {dimension_semantics = [#tpu.dimension_semantics<arbitrary>], iteration_bounds = array<i64: 2>, scalar_prefetch = 2 : i64, scratch_operands = 4 : i64, tpu.core_type = #tpu.core_type<tc>, window_params = [{pipeline_mode = #tpu.pipeline_mode<synchronous>, transform_indices = @transform_0, window_bounds = array<i64: 16, 32>}, {pipeline_mode = #tpu.pipeline_mode<synchronous>, transform_indices = @transform_1, window_bounds = array<i64: 16, 96>}, {transform_indices = @transform_2, window_bounds = array<i64: 32, 4>}, {pipeline_mode = #tpu.pipeline_mode<synchronous>, transform_indices = @transform_3, window_bounds = array<i64: 16, 96>}, {pipeline_mode = #tpu.pipeline_mode<synchronous>, transform_indices = @transform_4, window_bounds = array<i64: 1, 96>}, {pipeline_mode = #tpu.pipeline_mode<synchronous>, transform_indices = @transform_5, window_bounds = array<i64: 32, 32>}, {pipeline_mode = #tpu.pipeline_mode<synchronous>, transform_indices = @transform_6, window_bounds = array<i64: 1, 32>}, {pipeline_mode = #tpu.pipeline_mode<synchronous>, transform_indices = @transform_7, window_bounds = array<i64: 32, 96>}, {pipeline_mode = #tpu.pipeline_mode<synchronous>, transform_indices = @transform_8, window_bounds = array<i64: 1, 96>}, {pipeline_mode = #tpu.pipeline_mode<synchronous>, transform_indices = @transform_9, window_bounds = array<i64: 32, 32>}, {pipeline_mode = #tpu.pipeline_mode<synchronous>, transform_indices = @transform_10, window_bounds = array<i64: 32, 32>}, {pipeline_mode = #tpu.pipeline_mode<synchronous>, transform_indices = @transform_11, window_bounds = array<i64: 32, 32>}, {pipeline_mode = #tpu.pipeline_mode<synchronous>, transform_indices = @transform_12, window_bounds = array<i64: 32, 32>}, {pipeline_mode = #tpu.pipeline_mode<synchronous>, transform_indices = @transform_13, window_bounds = array<i64: 1, 32>}, {pipeline_mode = #tpu.pipeline_mode<synchronous>, transform_indices = @transform_14, window_bounds = array<i64: 32, 96>}, {pipeline_mode = #tpu.pipeline_mode<synchronous>, transform_indices = @transform_15, window_bounds = array<i64: 1, 96>}, {pipeline_mode = #tpu.pipeline_mode<synchronous>, transform_indices = @transform_16, window_bounds = array<i64: 16, 128>}]} {
    %c0_i32 = arith.constant 0 : i32
    %0 = arith.cmpi eq, %arg0, %c0_i32 : i32
    %1 = arith.extui %0 : i1 to i32
    %c0_i32_0 = arith.constant 0 : i32
    %2 = arith.cmpi ne, %1, %c0_i32_0 : i32
    scf.if %2 {
      %c0_220 = arith.constant 0 : index
      %c0_221 = arith.constant 0 : index
      %637 = vector.load %arg3[%c0_220, %c0_221] : memref<16x32xf32, #tpu.memory_space<vmem>>, vector<16x32xf32>
      %c0_222 = arith.constant 0 : index
      %c0_223 = arith.constant 0 : index
      %638 = vector.load %arg8[%c0_222, %c0_223] : memref<32x32xbf16, #tpu.memory_space<vmem>>, vector<32x32xbf16>
      %639 = arith.truncf %637 : vector<16x32xf32> to vector<16x32xbf16>
      %cst_224 = arith.constant dense<0.000000e+00> : vector<16x32xf32>
      %640 = tpu.matmul %639, %638, %cst_224 {dimension_numbers = #tpu.dot_dimension_numbers<[1], [0], [0], [1], [0, 0, 1, 1], [], []>} : vector<16x32xbf16>, vector<32x32xbf16>, vector<16x32xf32> -> vector<16x32xf32>
      %c0_225 = arith.constant 0 : index
      %c0_226 = arith.constant 0 : index
      %641 = vector.load %arg9[%c0_225, %c0_226] : memref<1x32xf32, #tpu.memory_space<vmem>>, vector<1x32xf32>
      %642 = vector.broadcast %641 : vector<1x32xf32> to vector<16x32xf32>
      %643 = arith.addf %640, %642 : vector<16x32xf32>
      %644 = arith.negf %643 : vector<16x32xf32>
      %645 = math.exp %644 : vector<16x32xf32>
      %cst_227 = arith.constant 1.000000e+00 : f32
      %646 = vector.broadcast %cst_227 : f32 to vector<16x32xf32>
      %647 = arith.addf %646, %645 : vector<16x32xf32>
      %648 = arith.divf %646, %647 : vector<16x32xf32>
      %649 = arith.mulf %643, %648 : vector<16x32xf32>
      %c0_228 = arith.constant 0 : index
      %c0_229 = arith.constant 0 : index
      %650 = vector.load %arg10[%c0_228, %c0_229] : memref<32x96xbf16, #tpu.memory_space<vmem>>, vector<32x96xbf16>
      %651 = arith.truncf %649 : vector<16x32xf32> to vector<16x32xbf16>
      %cst_230 = arith.constant dense<0.000000e+00> : vector<16x96xf32>
      %652 = tpu.matmul %651, %650, %cst_230 {dimension_numbers = #tpu.dot_dimension_numbers<[1], [0], [0], [1], [0, 0, 1, 1], [], []>} : vector<16x32xbf16>, vector<32x96xbf16>, vector<16x96xf32> -> vector<16x96xf32>
      %c0_231 = arith.constant 0 : index
      %c0_232 = arith.constant 0 : index
      %653 = vector.load %arg11[%c0_231, %c0_232] : memref<1x96xf32, #tpu.memory_space<vmem>>, vector<1x96xf32>
      %654 = vector.broadcast %653 : vector<1x96xf32> to vector<16x96xf32>
      %655 = arith.addf %652, %654 : vector<16x96xf32>
      %c0_233 = arith.constant 0 : index
      %c0_234 = arith.constant 0 : index
      %656 = vector.load %arg4[%c0_233, %c0_234] : memref<16x96xf32, #tpu.memory_space<vmem>>, vector<16x96xf32>
      %657 = tpu.concatenate %637, %655, %656 in 1 : vector<16x32xf32>, vector<16x96xf32>, vector<16x96xf32> -> vector<16x224xf32>
      %c0_235 = arith.constant 0 : index
      %c0_236 = arith.constant 0 : index
      %658 = vector.load %arg20[%c0_235, %c0_236] : memref<16x224xf32, #tpu.memory_space<vmem>>, vector<16x224xf32>
      tpu.vector_store %arg20[%c0_235, %c0_236], %657 {strides = array<i32>} : memref<16x224xf32, #tpu.memory_space<vmem>>, vector<16x224xf32>,
      %cst_237 = arith.constant 0.000000e+00 : f32
      %659 = vector.broadcast %cst_237 : f32 to vector<16x128xf32>
      %c0_238 = arith.constant 0 : index
      %c0_239 = arith.constant 0 : index
      %660 = vector.load %arg21[%c0_238, %c0_239] : memref<16x128xf32, #tpu.memory_space<vmem>>, vector<16x128xf32>
      tpu.vector_store %arg21[%c0_238, %c0_239], %659 {strides = array<i32>} : memref<16x128xf32, #tpu.memory_space<vmem>>, vector<16x128xf32>,
    } else {
    }
    %c32_i32 = arith.constant 32 : i32
    %3 = arith.muli %arg0, %c32_i32 : i32
    %c0_i32_1 = arith.constant 0 : i32
    %4 = arith.addi %3, %c0_i32_1 : i32
    %5 = arith.index_cast %4 : i32 to index
    %6 = memref.load %arg1[%5] : memref<64xi32, #tpu.memory_space<smem>>
    %7 = arith.index_cast %6 : i32 to index
    %c0 = arith.constant 0 : index
    %8 = vector.load %arg20[%7, %c0] : memref<16x224xf32, #tpu.memory_space<vmem>>, vector<1x224xf32>
    %9 = arith.index_cast %c0_i32_1 : i32 to index
    %c0_2 = arith.constant 0 : index
    %10 = vector.load %arg22[%9, %c0_2] : memref<32x224xf32, #tpu.memory_space<vmem>>, vector<1x224xf32>
    tpu.vector_store %arg22[%9, %c0_2], %8 {strides = array<i32>} : memref<32x224xf32, #tpu.memory_space<vmem>>, vector<1x224xf32>,
    %c1_i32 = arith.constant 1 : i32
    %11 = arith.addi %3, %c1_i32 : i32
    %12 = arith.index_cast %11 : i32 to index
    %13 = memref.load %arg1[%12] : memref<64xi32, #tpu.memory_space<smem>>
    %14 = arith.index_cast %13 : i32 to index
    %c0_3 = arith.constant 0 : index
    %15 = vector.load %arg20[%14, %c0_3] : memref<16x224xf32, #tpu.memory_space<vmem>>, vector<1x224xf32>
    %16 = arith.index_cast %c1_i32 : i32 to index
    %c0_4 = arith.constant 0 : index
    %17 = vector.load %arg22[%16, %c0_4] : memref<32x224xf32, #tpu.memory_space<vmem>>, vector<1x224xf32>
    tpu.vector_store %arg22[%16, %c0_4], %15 {strides = array<i32>} : memref<32x224xf32, #tpu.memory_space<vmem>>, vector<1x224xf32>,
    %c2_i32 = arith.constant 2 : i32
    %18 = arith.addi %3, %c2_i32 : i32
    %19 = arith.index_cast %18 : i32 to index
    %20 = memref.load %arg1[%19] : memref<64xi32, #tpu.memory_space<smem>>
    %21 = arith.index_cast %20 : i32 to index
    %c0_5 = arith.constant 0 : index
    %22 = vector.load %arg20[%21, %c0_5] : memref<16x224xf32, #tpu.memory_space<vmem>>, vector<1x224xf32>
    %23 = arith.index_cast %c2_i32 : i32 to index
    %c0_6 = arith.constant 0 : index
    %24 = vector.load %arg22[%23, %c0_6] : memref<32x224xf32, #tpu.memory_space<vmem>>, vector<1x224xf32>
    tpu.vector_store %arg22[%23, %c0_6], %22 {strides = array<i32>} : memref<32x224xf32, #tpu.memory_space<vmem>>, vector<1x224xf32>,
    %c3_i32 = arith.constant 3 : i32
    %25 = arith.addi %3, %c3_i32 : i32
    %26 = arith.index_cast %25 : i32 to index
    %27 = memref.load %arg1[%26] : memref<64xi32, #tpu.memory_space<smem>>
    %28 = arith.index_cast %27 : i32 to index
    %c0_7 = arith.constant 0 : index
    %29 = vector.load %arg20[%28, %c0_7] : memref<16x224xf32, #tpu.memory_space<vmem>>, vector<1x224xf32>
    %30 = arith.index_cast %c3_i32 : i32 to index
    %c0_8 = arith.constant 0 : index
    %31 = vector.load %arg22[%30, %c0_8] : memref<32x224xf32, #tpu.memory_space<vmem>>, vector<1x224xf32>
    tpu.vector_store %arg22[%30, %c0_8], %29 {strides = array<i32>} : memref<32x224xf32, #tpu.memory_space<vmem>>, vector<1x224xf32>,
    %c4_i32 = arith.constant 4 : i32
    %32 = arith.addi %3, %c4_i32 : i32
    %33 = arith.index_cast %32 : i32 to index
    %34 = memref.load %arg1[%33] : memref<64xi32, #tpu.memory_space<smem>>
    %35 = arith.index_cast %34 : i32 to index
    %c0_9 = arith.constant 0 : index
    %36 = vector.load %arg20[%35, %c0_9] : memref<16x224xf32, #tpu.memory_space<vmem>>, vector<1x224xf32>
    %37 = arith.index_cast %c4_i32 : i32 to index
    %c0_10 = arith.constant 0 : index
    %38 = vector.load %arg22[%37, %c0_10] : memref<32x224xf32, #tpu.memory_space<vmem>>, vector<1x224xf32>
    tpu.vector_store %arg22[%37, %c0_10], %36 {strides = array<i32>} : memref<32x224xf32, #tpu.memory_space<vmem>>, vector<1x224xf32>,
    %c5_i32 = arith.constant 5 : i32
    %39 = arith.addi %3, %c5_i32 : i32
    %40 = arith.index_cast %39 : i32 to index
    %41 = memref.load %arg1[%40] : memref<64xi32, #tpu.memory_space<smem>>
    %42 = arith.index_cast %41 : i32 to index
    %c0_11 = arith.constant 0 : index
    %43 = vector.load %arg20[%42, %c0_11] : memref<16x224xf32, #tpu.memory_space<vmem>>, vector<1x224xf32>
    %44 = arith.index_cast %c5_i32 : i32 to index
    %c0_12 = arith.constant 0 : index
    %45 = vector.load %arg22[%44, %c0_12] : memref<32x224xf32, #tpu.memory_space<vmem>>, vector<1x224xf32>
    tpu.vector_store %arg22[%44, %c0_12], %43 {strides = array<i32>} : memref<32x224xf32, #tpu.memory_space<vmem>>, vector<1x224xf32>,
    %c6_i32 = arith.constant 6 : i32
    %46 = arith.addi %3, %c6_i32 : i32
    %47 = arith.index_cast %46 : i32 to index
    %48 = memref.load %arg1[%47] : memref<64xi32, #tpu.memory_space<smem>>
    %49 = arith.index_cast %48 : i32 to index
    %c0_13 = arith.constant 0 : index
    %50 = vector.load %arg20[%49, %c0_13] : memref<16x224xf32, #tpu.memory_space<vmem>>, vector<1x224xf32>
    %51 = arith.index_cast %c6_i32 : i32 to index
    %c0_14 = arith.constant 0 : index
    %52 = vector.load %arg22[%51, %c0_14] : memref<32x224xf32, #tpu.memory_space<vmem>>, vector<1x224xf32>
    tpu.vector_store %arg22[%51, %c0_14], %50 {strides = array<i32>} : memref<32x224xf32, #tpu.memory_space<vmem>>, vector<1x224xf32>,
    %c7_i32 = arith.constant 7 : i32
    %53 = arith.addi %3, %c7_i32 : i32
    %54 = arith.index_cast %53 : i32 to index
    %55 = memref.load %arg1[%54] : memref<64xi32, #tpu.memory_space<smem>>
    %56 = arith.index_cast %55 : i32 to index
    %c0_15 = arith.constant 0 : index
    %57 = vector.load %arg20[%56, %c0_15] : memref<16x224xf32, #tpu.memory_space<vmem>>, vector<1x224xf32>
    %58 = arith.index_cast %c7_i32 : i32 to index
    %c0_16 = arith.constant 0 : index
    %59 = vector.load %arg22[%58, %c0_16] : memref<32x224xf32, #tpu.memory_space<vmem>>, vector<1x224xf32>
    tpu.vector_store %arg22[%58, %c0_16], %57 {strides = array<i32>} : memref<32x224xf32, #tpu.memory_space<vmem>>, vector<1x224xf32>,
    %c8_i32 = arith.constant 8 : i32
    %60 = arith.addi %3, %c8_i32 : i32
    %61 = arith.index_cast %60 : i32 to index
    %62 = memref.load %arg1[%61] : memref<64xi32, #tpu.memory_space<smem>>
    %63 = arith.index_cast %62 : i32 to index
    %c0_17 = arith.constant 0 : index
    %64 = vector.load %arg20[%63, %c0_17] : memref<16x224xf32, #tpu.memory_space<vmem>>, vector<1x224xf32>
    %65 = arith.index_cast %c8_i32 : i32 to index
    %c0_18 = arith.constant 0 : index
    %66 = vector.load %arg22[%65, %c0_18] : memref<32x224xf32, #tpu.memory_space<vmem>>, vector<1x224xf32>
    tpu.vector_store %arg22[%65, %c0_18], %64 {strides = array<i32>} : memref<32x224xf32, #tpu.memory_space<vmem>>, vector<1x224xf32>,
    %c9_i32 = arith.constant 9 : i32
    %67 = arith.addi %3, %c9_i32 : i32
    %68 = arith.index_cast %67 : i32 to index
    %69 = memref.load %arg1[%68] : memref<64xi32, #tpu.memory_space<smem>>
    %70 = arith.index_cast %69 : i32 to index
    %c0_19 = arith.constant 0 : index
    %71 = vector.load %arg20[%70, %c0_19] : memref<16x224xf32, #tpu.memory_space<vmem>>, vector<1x224xf32>
    %72 = arith.index_cast %c9_i32 : i32 to index
    %c0_20 = arith.constant 0 : index
    %73 = vector.load %arg22[%72, %c0_20] : memref<32x224xf32, #tpu.memory_space<vmem>>, vector<1x224xf32>
    tpu.vector_store %arg22[%72, %c0_20], %71 {strides = array<i32>} : memref<32x224xf32, #tpu.memory_space<vmem>>, vector<1x224xf32>,
    %c10_i32 = arith.constant 10 : i32
    %74 = arith.addi %3, %c10_i32 : i32
    %75 = arith.index_cast %74 : i32 to index
    %76 = memref.load %arg1[%75] : memref<64xi32, #tpu.memory_space<smem>>
    %77 = arith.index_cast %76 : i32 to index
    %c0_21 = arith.constant 0 : index
    %78 = vector.load %arg20[%77, %c0_21] : memref<16x224xf32, #tpu.memory_space<vmem>>, vector<1x224xf32>
    %79 = arith.index_cast %c10_i32 : i32 to index
    %c0_22 = arith.constant 0 : index
    %80 = vector.load %arg22[%79, %c0_22] : memref<32x224xf32, #tpu.memory_space<vmem>>, vector<1x224xf32>
    tpu.vector_store %arg22[%79, %c0_22], %78 {strides = array<i32>} : memref<32x224xf32, #tpu.memory_space<vmem>>, vector<1x224xf32>,
    %c11_i32 = arith.constant 11 : i32
    %81 = arith.addi %3, %c11_i32 : i32
    %82 = arith.index_cast %81 : i32 to index
    %83 = memref.load %arg1[%82] : memref<64xi32, #tpu.memory_space<smem>>
    %84 = arith.index_cast %83 : i32 to index
    %c0_23 = arith.constant 0 : index
    %85 = vector.load %arg20[%84, %c0_23] : memref<16x224xf32, #tpu.memory_space<vmem>>, vector<1x224xf32>
    %86 = arith.index_cast %c11_i32 : i32 to index
    %c0_24 = arith.constant 0 : index
    %87 = vector.load %arg22[%86, %c0_24] : memref<32x224xf32, #tpu.memory_space<vmem>>, vector<1x224xf32>
    tpu.vector_store %arg22[%86, %c0_24], %85 {strides = array<i32>} : memref<32x224xf32, #tpu.memory_space<vmem>>, vector<1x224xf32>,
    %c12_i32 = arith.constant 12 : i32
    %88 = arith.addi %3, %c12_i32 : i32
    %89 = arith.index_cast %88 : i32 to index
    %90 = memref.load %arg1[%89] : memref<64xi32, #tpu.memory_space<smem>>
    %91 = arith.index_cast %90 : i32 to index
    %c0_25 = arith.constant 0 : index
    %92 = vector.load %arg20[%91, %c0_25] : memref<16x224xf32, #tpu.memory_space<vmem>>, vector<1x224xf32>
    %93 = arith.index_cast %c12_i32 : i32 to index
    %c0_26 = arith.constant 0 : index
    %94 = vector.load %arg22[%93, %c0_26] : memref<32x224xf32, #tpu.memory_space<vmem>>, vector<1x224xf32>
    tpu.vector_store %arg22[%93, %c0_26], %92 {strides = array<i32>} : memref<32x224xf32, #tpu.memory_space<vmem>>, vector<1x224xf32>,
    %c13_i32 = arith.constant 13 : i32
    %95 = arith.addi %3, %c13_i32 : i32
    %96 = arith.index_cast %95 : i32 to index
    %97 = memref.load %arg1[%96] : memref<64xi32, #tpu.memory_space<smem>>
    %98 = arith.index_cast %97 : i32 to index
    %c0_27 = arith.constant 0 : index
    %99 = vector.load %arg20[%98, %c0_27] : memref<16x224xf32, #tpu.memory_space<vmem>>, vector<1x224xf32>
    %100 = arith.index_cast %c13_i32 : i32 to index
    %c0_28 = arith.constant 0 : index
    %101 = vector.load %arg22[%100, %c0_28] : memref<32x224xf32, #tpu.memory_space<vmem>>, vector<1x224xf32>
    tpu.vector_store %arg22[%100, %c0_28], %99 {strides = array<i32>} : memref<32x224xf32, #tpu.memory_space<vmem>>, vector<1x224xf32>,
    %c14_i32 = arith.constant 14 : i32
    %102 = arith.addi %3, %c14_i32 : i32
    %103 = arith.index_cast %102 : i32 to index
    %104 = memref.load %arg1[%103] : memref<64xi32, #tpu.memory_space<smem>>
    %105 = arith.index_cast %104 : i32 to index
    %c0_29 = arith.constant 0 : index
    %106 = vector.load %arg20[%105, %c0_29] : memref<16x224xf32, #tpu.memory_space<vmem>>, vector<1x224xf32>
    %107 = arith.index_cast %c14_i32 : i32 to index
    %c0_30 = arith.constant 0 : index
    %108 = vector.load %arg22[%107, %c0_30] : memref<32x224xf32, #tpu.memory_space<vmem>>, vector<1x224xf32>
    tpu.vector_store %arg22[%107, %c0_30], %106 {strides = array<i32>} : memref<32x224xf32, #tpu.memory_space<vmem>>, vector<1x224xf32>,
    %c15_i32 = arith.constant 15 : i32
    %109 = arith.addi %3, %c15_i32 : i32
    %110 = arith.index_cast %109 : i32 to index
    %111 = memref.load %arg1[%110] : memref<64xi32, #tpu.memory_space<smem>>
    %112 = arith.index_cast %111 : i32 to index
    %c0_31 = arith.constant 0 : index
    %113 = vector.load %arg20[%112, %c0_31] : memref<16x224xf32, #tpu.memory_space<vmem>>, vector<1x224xf32>
    %114 = arith.index_cast %c15_i32 : i32 to index
    %c0_32 = arith.constant 0 : index
    %115 = vector.load %arg22[%114, %c0_32] : memref<32x224xf32, #tpu.memory_space<vmem>>, vector<1x224xf32>
    tpu.vector_store %arg22[%114, %c0_32], %113 {strides = array<i32>} : memref<32x224xf32, #tpu.memory_space<vmem>>, vector<1x224xf32>,
    %c16_i32 = arith.constant 16 : i32
    %116 = arith.addi %3, %c16_i32 : i32
    %117 = arith.index_cast %116 : i32 to index
    %118 = memref.load %arg1[%117] : memref<64xi32, #tpu.memory_space<smem>>
    %119 = arith.index_cast %118 : i32 to index
    %c0_33 = arith.constant 0 : index
    %120 = vector.load %arg20[%119, %c0_33] : memref<16x224xf32, #tpu.memory_space<vmem>>, vector<1x224xf32>
    %121 = arith.index_cast %c16_i32 : i32 to index
    %c0_34 = arith.constant 0 : index
    %122 = vector.load %arg22[%121, %c0_34] : memref<32x224xf32, #tpu.memory_space<vmem>>, vector<1x224xf32>
    tpu.vector_store %arg22[%121, %c0_34], %120 {strides = array<i32>} : memref<32x224xf32, #tpu.memory_space<vmem>>, vector<1x224xf32>,
    %c17_i32 = arith.constant 17 : i32
    %123 = arith.addi %3, %c17_i32 : i32
    %124 = arith.index_cast %123 : i32 to index
    %125 = memref.load %arg1[%124] : memref<64xi32, #tpu.memory_space<smem>>
    %126 = arith.index_cast %125 : i32 to index
    %c0_35 = arith.constant 0 : index
    %127 = vector.load %arg20[%126, %c0_35] : memref<16x224xf32, #tpu.memory_space<vmem>>, vector<1x224xf32>
    %128 = arith.index_cast %c17_i32 : i32 to index
    %c0_36 = arith.constant 0 : index
    %129 = vector.load %arg22[%128, %c0_36] : memref<32x224xf32, #tpu.memory_space<vmem>>, vector<1x224xf32>
    tpu.vector_store %arg22[%128, %c0_36], %127 {strides = array<i32>} : memref<32x224xf32, #tpu.memory_space<vmem>>, vector<1x224xf32>,
    %c18_i32 = arith.constant 18 : i32
    %130 = arith.addi %3, %c18_i32 : i32
    %131 = arith.index_cast %130 : i32 to index
    %132 = memref.load %arg1[%131] : memref<64xi32, #tpu.memory_space<smem>>
    %133 = arith.index_cast %132 : i32 to index
    %c0_37 = arith.constant 0 : index
    %134 = vector.load %arg20[%133, %c0_37] : memref<16x224xf32, #tpu.memory_space<vmem>>, vector<1x224xf32>
    %135 = arith.index_cast %c18_i32 : i32 to index
    %c0_38 = arith.constant 0 : index
    %136 = vector.load %arg22[%135, %c0_38] : memref<32x224xf32, #tpu.memory_space<vmem>>, vector<1x224xf32>
    tpu.vector_store %arg22[%135, %c0_38], %134 {strides = array<i32>} : memref<32x224xf32, #tpu.memory_space<vmem>>, vector<1x224xf32>,
    %c19_i32 = arith.constant 19 : i32
    %137 = arith.addi %3, %c19_i32 : i32
    %138 = arith.index_cast %137 : i32 to index
    %139 = memref.load %arg1[%138] : memref<64xi32, #tpu.memory_space<smem>>
    %140 = arith.index_cast %139 : i32 to index
    %c0_39 = arith.constant 0 : index
    %141 = vector.load %arg20[%140, %c0_39] : memref<16x224xf32, #tpu.memory_space<vmem>>, vector<1x224xf32>
    %142 = arith.index_cast %c19_i32 : i32 to index
    %c0_40 = arith.constant 0 : index
    %143 = vector.load %arg22[%142, %c0_40] : memref<32x224xf32, #tpu.memory_space<vmem>>, vector<1x224xf32>
    tpu.vector_store %arg22[%142, %c0_40], %141 {strides = array<i32>} : memref<32x224xf32, #tpu.memory_space<vmem>>, vector<1x224xf32>,
    %c20_i32 = arith.constant 20 : i32
    %144 = arith.addi %3, %c20_i32 : i32
    %145 = arith.index_cast %144 : i32 to index
    %146 = memref.load %arg1[%145] : memref<64xi32, #tpu.memory_space<smem>>
    %147 = arith.index_cast %146 : i32 to index
    %c0_41 = arith.constant 0 : index
    %148 = vector.load %arg20[%147, %c0_41] : memref<16x224xf32, #tpu.memory_space<vmem>>, vector<1x224xf32>
    %149 = arith.index_cast %c20_i32 : i32 to index
    %c0_42 = arith.constant 0 : index
    %150 = vector.load %arg22[%149, %c0_42] : memref<32x224xf32, #tpu.memory_space<vmem>>, vector<1x224xf32>
    tpu.vector_store %arg22[%149, %c0_42], %148 {strides = array<i32>} : memref<32x224xf32, #tpu.memory_space<vmem>>, vector<1x224xf32>,
    %c21_i32 = arith.constant 21 : i32
    %151 = arith.addi %3, %c21_i32 : i32
    %152 = arith.index_cast %151 : i32 to index
    %153 = memref.load %arg1[%152] : memref<64xi32, #tpu.memory_space<smem>>
    %154 = arith.index_cast %153 : i32 to index
    %c0_43 = arith.constant 0 : index
    %155 = vector.load %arg20[%154, %c0_43] : memref<16x224xf32, #tpu.memory_space<vmem>>, vector<1x224xf32>
    %156 = arith.index_cast %c21_i32 : i32 to index
    %c0_44 = arith.constant 0 : index
    %157 = vector.load %arg22[%156, %c0_44] : memref<32x224xf32, #tpu.memory_space<vmem>>, vector<1x224xf32>
    tpu.vector_store %arg22[%156, %c0_44], %155 {strides = array<i32>} : memref<32x224xf32, #tpu.memory_space<vmem>>, vector<1x224xf32>,
    %c22_i32 = arith.constant 22 : i32
    %158 = arith.addi %3, %c22_i32 : i32
    %159 = arith.index_cast %158 : i32 to index
    %160 = memref.load %arg1[%159] : memref<64xi32, #tpu.memory_space<smem>>
    %161 = arith.index_cast %160 : i32 to index
    %c0_45 = arith.constant 0 : index
    %162 = vector.load %arg20[%161, %c0_45] : memref<16x224xf32, #tpu.memory_space<vmem>>, vector<1x224xf32>
    %163 = arith.index_cast %c22_i32 : i32 to index
    %c0_46 = arith.constant 0 : index
    %164 = vector.load %arg22[%163, %c0_46] : memref<32x224xf32, #tpu.memory_space<vmem>>, vector<1x224xf32>
    tpu.vector_store %arg22[%163, %c0_46], %162 {strides = array<i32>} : memref<32x224xf32, #tpu.memory_space<vmem>>, vector<1x224xf32>,
    %c23_i32 = arith.constant 23 : i32
    %165 = arith.addi %3, %c23_i32 : i32
    %166 = arith.index_cast %165 : i32 to index
    %167 = memref.load %arg1[%166] : memref<64xi32, #tpu.memory_space<smem>>
    %168 = arith.index_cast %167 : i32 to index
    %c0_47 = arith.constant 0 : index
    %169 = vector.load %arg20[%168, %c0_47] : memref<16x224xf32, #tpu.memory_space<vmem>>, vector<1x224xf32>
    %170 = arith.index_cast %c23_i32 : i32 to index
    %c0_48 = arith.constant 0 : index
    %171 = vector.load %arg22[%170, %c0_48] : memref<32x224xf32, #tpu.memory_space<vmem>>, vector<1x224xf32>
    tpu.vector_store %arg22[%170, %c0_48], %169 {strides = array<i32>} : memref<32x224xf32, #tpu.memory_space<vmem>>, vector<1x224xf32>,
    %c24_i32 = arith.constant 24 : i32
    %172 = arith.addi %3, %c24_i32 : i32
    %173 = arith.index_cast %172 : i32 to index
    %174 = memref.load %arg1[%173] : memref<64xi32, #tpu.memory_space<smem>>
    %175 = arith.index_cast %174 : i32 to index
    %c0_49 = arith.constant 0 : index
    %176 = vector.load %arg20[%175, %c0_49] : memref<16x224xf32, #tpu.memory_space<vmem>>, vector<1x224xf32>
    %177 = arith.index_cast %c24_i32 : i32 to index
    %c0_50 = arith.constant 0 : index
    %178 = vector.load %arg22[%177, %c0_50] : memref<32x224xf32, #tpu.memory_space<vmem>>, vector<1x224xf32>
    tpu.vector_store %arg22[%177, %c0_50], %176 {strides = array<i32>} : memref<32x224xf32, #tpu.memory_space<vmem>>, vector<1x224xf32>,
    %c25_i32 = arith.constant 25 : i32
    %179 = arith.addi %3, %c25_i32 : i32
    %180 = arith.index_cast %179 : i32 to index
    %181 = memref.load %arg1[%180] : memref<64xi32, #tpu.memory_space<smem>>
    %182 = arith.index_cast %181 : i32 to index
    %c0_51 = arith.constant 0 : index
    %183 = vector.load %arg20[%182, %c0_51] : memref<16x224xf32, #tpu.memory_space<vmem>>, vector<1x224xf32>
    %184 = arith.index_cast %c25_i32 : i32 to index
    %c0_52 = arith.constant 0 : index
    %185 = vector.load %arg22[%184, %c0_52] : memref<32x224xf32, #tpu.memory_space<vmem>>, vector<1x224xf32>
    tpu.vector_store %arg22[%184, %c0_52], %183 {strides = array<i32>} : memref<32x224xf32, #tpu.memory_space<vmem>>, vector<1x224xf32>,
    %c26_i32 = arith.constant 26 : i32
    %186 = arith.addi %3, %c26_i32 : i32
    %187 = arith.index_cast %186 : i32 to index
    %188 = memref.load %arg1[%187] : memref<64xi32, #tpu.memory_space<smem>>
    %189 = arith.index_cast %188 : i32 to index
    %c0_53 = arith.constant 0 : index
    %190 = vector.load %arg20[%189, %c0_53] : memref<16x224xf32, #tpu.memory_space<vmem>>, vector<1x224xf32>
    %191 = arith.index_cast %c26_i32 : i32 to index
    %c0_54 = arith.constant 0 : index
    %192 = vector.load %arg22[%191, %c0_54] : memref<32x224xf32, #tpu.memory_space<vmem>>, vector<1x224xf32>
    tpu.vector_store %arg22[%191, %c0_54], %190 {strides = array<i32>} : memref<32x224xf32, #tpu.memory_space<vmem>>, vector<1x224xf32>,
    %c27_i32 = arith.constant 27 : i32
    %193 = arith.addi %3, %c27_i32 : i32
    %194 = arith.index_cast %193 : i32 to index
    %195 = memref.load %arg1[%194] : memref<64xi32, #tpu.memory_space<smem>>
    %196 = arith.index_cast %195 : i32 to index
    %c0_55 = arith.constant 0 : index
    %197 = vector.load %arg20[%196, %c0_55] : memref<16x224xf32, #tpu.memory_space<vmem>>, vector<1x224xf32>
    %198 = arith.index_cast %c27_i32 : i32 to index
    %c0_56 = arith.constant 0 : index
    %199 = vector.load %arg22[%198, %c0_56] : memref<32x224xf32, #tpu.memory_space<vmem>>, vector<1x224xf32>
    tpu.vector_store %arg22[%198, %c0_56], %197 {strides = array<i32>} : memref<32x224xf32, #tpu.memory_space<vmem>>, vector<1x224xf32>,
    %c28_i32 = arith.constant 28 : i32
    %200 = arith.addi %3, %c28_i32 : i32
    %201 = arith.index_cast %200 : i32 to index
    %202 = memref.load %arg1[%201] : memref<64xi32, #tpu.memory_space<smem>>
    %203 = arith.index_cast %202 : i32 to index
    %c0_57 = arith.constant 0 : index
    %204 = vector.load %arg20[%203, %c0_57] : memref<16x224xf32, #tpu.memory_space<vmem>>, vector<1x224xf32>
    %205 = arith.index_cast %c28_i32 : i32 to index
    %c0_58 = arith.constant 0 : index
    %206 = vector.load %arg22[%205, %c0_58] : memref<32x224xf32, #tpu.memory_space<vmem>>, vector<1x224xf32>
    tpu.vector_store %arg22[%205, %c0_58], %204 {strides = array<i32>} : memref<32x224xf32, #tpu.memory_space<vmem>>, vector<1x224xf32>,
    %c29_i32 = arith.constant 29 : i32
    %207 = arith.addi %3, %c29_i32 : i32
    %208 = arith.index_cast %207 : i32 to index
    %209 = memref.load %arg1[%208] : memref<64xi32, #tpu.memory_space<smem>>
    %210 = arith.index_cast %209 : i32 to index
    %c0_59 = arith.constant 0 : index
    %211 = vector.load %arg20[%210, %c0_59] : memref<16x224xf32, #tpu.memory_space<vmem>>, vector<1x224xf32>
    %212 = arith.index_cast %c29_i32 : i32 to index
    %c0_60 = arith.constant 0 : index
    %213 = vector.load %arg22[%212, %c0_60] : memref<32x224xf32, #tpu.memory_space<vmem>>, vector<1x224xf32>
    tpu.vector_store %arg22[%212, %c0_60], %211 {strides = array<i32>} : memref<32x224xf32, #tpu.memory_space<vmem>>, vector<1x224xf32>,
    %c30_i32 = arith.constant 30 : i32
    %214 = arith.addi %3, %c30_i32 : i32
    %215 = arith.index_cast %214 : i32 to index
    %216 = memref.load %arg1[%215] : memref<64xi32, #tpu.memory_space<smem>>
    %217 = arith.index_cast %216 : i32 to index
    %c0_61 = arith.constant 0 : index
    %218 = vector.load %arg20[%217, %c0_61] : memref<16x224xf32, #tpu.memory_space<vmem>>, vector<1x224xf32>
    %219 = arith.index_cast %c30_i32 : i32 to index
    %c0_62 = arith.constant 0 : index
    %220 = vector.load %arg22[%219, %c0_62] : memref<32x224xf32, #tpu.memory_space<vmem>>, vector<1x224xf32>
    tpu.vector_store %arg22[%219, %c0_62], %218 {strides = array<i32>} : memref<32x224xf32, #tpu.memory_space<vmem>>, vector<1x224xf32>,
    %c31_i32 = arith.constant 31 : i32
    %221 = arith.addi %3, %c31_i32 : i32
    %222 = arith.index_cast %221 : i32 to index
    %223 = memref.load %arg1[%222] : memref<64xi32, #tpu.memory_space<smem>>
    %224 = arith.index_cast %223 : i32 to index
    %c0_63 = arith.constant 0 : index
    %225 = vector.load %arg20[%224, %c0_63] : memref<16x224xf32, #tpu.memory_space<vmem>>, vector<1x224xf32>
    %226 = arith.index_cast %c31_i32 : i32 to index
    %c0_64 = arith.constant 0 : index
    %227 = vector.load %arg22[%226, %c0_64] : memref<32x224xf32, #tpu.memory_space<vmem>>, vector<1x224xf32>
    tpu.vector_store %arg22[%226, %c0_64], %225 {strides = array<i32>} : memref<32x224xf32, #tpu.memory_space<vmem>>, vector<1x224xf32>,
    %c32_i32_65 = arith.constant 32 : i32
    %c0_66 = arith.constant 0 : index
    %c0_67 = arith.constant 0 : index
    %228 = vector.load %arg5[%c0_66, %c0_67] : memref<32x4xf32, #tpu.memory_space<vmem>>, vector<32x4xf32>
    %229 = vector.extract_strided_slice %228 {offsets = [0, 0], sizes = [32, 1], strides = [1, 1]} : vector<32x4xf32> to vector<32x1xf32>
    %230 = vector.extract_strided_slice %228 {offsets = [0, 1], sizes = [32, 1], strides = [1, 1]} : vector<32x4xf32> to vector<32x1xf32>
    %231 = vector.extract_strided_slice %228 {offsets = [0, 2], sizes = [32, 1], strides = [1, 1]} : vector<32x4xf32> to vector<32x1xf32>
    %232 = vector.extract_strided_slice %228 {offsets = [0, 3], sizes = [32, 1], strides = [1, 1]} : vector<32x4xf32> to vector<32x1xf32>
    %233 = tpu.iota {dimensions = array<i32: 1>} : vector<32x16xi32>
    %c1_i32_68 = arith.constant 1 : i32
    %234 = vector.broadcast %c1_i32_68 : i32 to vector<32x16xi32>
    %235 = arith.addi %233, %234 : vector<32x16xi32>
    %236 = arith.sitofp %235 : vector<32x16xi32> to vector<32x16xf32>
    %cst = arith.constant 0.000000e+00 : f32
    %237 = vector.broadcast %cst : f32 to vector<32x1xf32>
    %238 = arith.cmpf ogt, %229, %237 : vector<32x1xf32>
    %cst_69 = arith.constant 1.000000e+00 : f32
    %239 = vector.broadcast %cst_69 : f32 to vector<32x1xf32>
    %240 = arith.select %238, %229, %239 : vector<32x1xi1>, vector<32x1xf32>
    %cst_70 = arith.constant 0.000000e+00 : f32
    %241 = vector.broadcast %cst_70 : f32 to vector<32x1xf32>
    %242 = arith.cmpf ogt, %229, %241 : vector<32x1xf32>
    %cst_71 = arith.constant 0.785398185 : f32
    %243 = vector.broadcast %cst_71 : f32 to vector<32x16xf32>
    %244 = arith.mulf %236, %243 : vector<32x16xf32>
    %245 = vector.broadcast %229 : vector<32x1xf32> to vector<32x16xf32>
    %246 = arith.mulf %244, %245 : vector<32x16xf32>
    %247 = math.sin %246 : vector<32x16xf32>
    %248 = vector.broadcast %240 : vector<32x1xf32> to vector<32x16xf32>
    %249 = arith.divf %247, %248 : vector<32x16xf32>
    %cst_72 = arith.constant 0.785398185 : f32
    %250 = vector.broadcast %cst_72 : f32 to vector<32x16xf32>
    %251 = arith.mulf %236, %250 : vector<32x16xf32>
    %252 = vector.shape_cast %242 : vector<32x1xi1> to vector<32x1xi1>
    %253 = vector.broadcast %252 : vector<32x1xi1> to vector<32x16xi1>
    %254 = arith.select %253, %249, %251 : vector<32x16xi1>, vector<32x16xf32>
    %cst_73 = arith.constant 4.000000e+00 : f32
    %255 = vector.broadcast %cst_73 : f32 to vector<32x1xf32>
    %256 = arith.cmpf olt, %229, %255 : vector<32x1xf32>
    %cst_74 = arith.constant 3.14159274 : f32
    %257 = vector.broadcast %cst_74 : f32 to vector<32x1xf32>
    %258 = arith.mulf %257, %229 : vector<32x1xf32>
    %cst_75 = arith.constant 4.000000e+00 : f32
    %259 = vector.broadcast %cst_75 : f32 to vector<32x1xf32>
    %260 = arith.divf %258, %259 : vector<32x1xf32>
    %261 = math.cos %260 : vector<32x1xf32>
    %cst_76 = arith.constant 1.000000e+00 : f32
    %262 = vector.broadcast %cst_76 : f32 to vector<32x1xf32>
    %263 = arith.addf %261, %262 : vector<32x1xf32>
    %cst_77 = arith.constant 5.000000e-01 : f32
    %264 = vector.broadcast %cst_77 : f32 to vector<32x1xf32>
    %265 = arith.mulf %264, %263 : vector<32x1xf32>
    %cst_78 = arith.constant 0.000000e+00 : f32
    %266 = vector.broadcast %cst_78 : f32 to vector<32x1xf32>
    %267 = arith.select %256, %265, %266 : vector<32x1xi1>, vector<32x1xf32>
    %c0_79 = arith.constant 0 : index
    %c0_80 = arith.constant 0 : index
    %268 = vector.load %arg6[%c0_79, %c0_80] : memref<16x96xbf16, #tpu.memory_space<vmem>>, vector<16x96xbf16>
    %269 = arith.truncf %254 : vector<32x16xf32> to vector<32x16xbf16>
    %cst_81 = arith.constant dense<0.000000e+00> : vector<32x96xf32>
    %270 = tpu.matmul %269, %268, %cst_81 {dimension_numbers = #tpu.dot_dimension_numbers<[1], [0], [0], [1], [0, 0, 1, 1], [], []>} : vector<32x16xbf16>, vector<16x96xbf16>, vector<32x96xf32> -> vector<32x96xf32>
    %c0_82 = arith.constant 0 : index
    %c0_83 = arith.constant 0 : index
    %271 = vector.load %arg7[%c0_82, %c0_83] : memref<1x96xf32, #tpu.memory_space<vmem>>, vector<1x96xf32>
    %272 = vector.broadcast %271 : vector<1x96xf32> to vector<32x96xf32>
    %273 = arith.addf %270, %272 : vector<32x96xf32>
    %274 = vector.broadcast %267 : vector<32x1xf32> to vector<32x96xf32>
    %275 = arith.mulf %273, %274 : vector<32x96xf32>
    %c0_84 = arith.constant 0 : index
    %c0_85 = arith.constant 0 : index
    %276 = vector.load %arg22[%c0_84, %c0_85] : memref<32x224xf32, #tpu.memory_space<vmem>>, vector<32x224xf32>
    %277 = vector.extract_strided_slice %276 {offsets = [0, 0], sizes = [32, 32], strides = [1, 1]} : vector<32x224xf32> to vector<32x32xf32>
    %278 = vector.extract_strided_slice %276 {offsets = [0, 32], sizes = [32, 96], strides = [1, 1]} : vector<32x224xf32> to vector<32x96xf32>
    %279 = vector.extract_strided_slice %276 {offsets = [0, 128], sizes = [32, 96], strides = [1, 1]} : vector<32x224xf32> to vector<32x96xf32>
    %280 = arith.mulf %275, %278 : vector<32x96xf32>
    %281 = vector.extract_strided_slice %280 {offsets = [0, 0], sizes = [32, 32], strides = [1, 1]} : vector<32x96xf32> to vector<32x32xf32>
    %282 = vector.extract_strided_slice %280 {offsets = [0, 32], sizes = [32, 32], strides = [1, 1]} : vector<32x96xf32> to vector<32x32xf32>
    %283 = vector.extract_strided_slice %280 {offsets = [0, 64], sizes = [32, 32], strides = [1, 1]} : vector<32x96xf32> to vector<32x32xf32>
    %284 = arith.mulf %230, %230 : vector<32x1xf32>
    %285 = arith.mulf %231, %231 : vector<32x1xf32>
    %286 = arith.addf %284, %285 : vector<32x1xf32>
    %287 = arith.mulf %232, %232 : vector<32x1xf32>
    %288 = arith.addf %286, %287 : vector<32x1xf32>
    %289 = math.sqrt %288 : vector<32x1xf32>
    %cst_86 = arith.constant 9.99999971E-10 : f32
    %290 = vector.broadcast %cst_86 : f32 to vector<32x1xf32>
    %291 = arith.maximumf %289, %290 : vector<32x1xf32>
    %292 = arith.divf %230, %291 : vector<32x1xf32>
    %293 = arith.divf %231, %291 : vector<32x1xf32>
    %294 = arith.divf %232, %291 : vector<32x1xf32>
    %295 = arith.mulf %277, %283 : vector<32x32xf32>
    %296 = vector.extract_strided_slice %279 {offsets = [0, 0], sizes = [32, 32], strides = [1, 1]} : vector<32x96xf32> to vector<32x32xf32>
    %297 = arith.mulf %296, %281 : vector<32x32xf32>
    %298 = vector.broadcast %292 : vector<32x1xf32> to vector<32x32xf32>
    %299 = arith.mulf %282, %298 : vector<32x32xf32>
    %300 = arith.addf %297, %299 : vector<32x32xf32>
    %301 = vector.extract_strided_slice %279 {offsets = [0, 32], sizes = [32, 32], strides = [1, 1]} : vector<32x96xf32> to vector<32x32xf32>
    %302 = arith.mulf %301, %281 : vector<32x32xf32>
    %303 = vector.broadcast %293 : vector<32x1xf32> to vector<32x32xf32>
    %304 = arith.mulf %282, %303 : vector<32x32xf32>
    %305 = arith.addf %302, %304 : vector<32x32xf32>
    %306 = vector.extract_strided_slice %279 {offsets = [0, 64], sizes = [32, 32], strides = [1, 1]} : vector<32x96xf32> to vector<32x32xf32>
    %307 = arith.mulf %306, %281 : vector<32x32xf32>
    %308 = vector.broadcast %294 : vector<32x1xf32> to vector<32x32xf32>
    %309 = arith.mulf %282, %308 : vector<32x32xf32>
    %310 = arith.addf %307, %309 : vector<32x32xf32>
    %311 = tpu.concatenate %300, %305, %310 in 1 : vector<32x32xf32>, vector<32x32xf32>, vector<32x32xf32> -> vector<32x96xf32>
    %312 = tpu.concatenate %295, %311 in 1 : vector<32x32xf32>, vector<32x96xf32> -> vector<32x128xf32>
    %c0_87 = arith.constant 0 : index
    %c0_88 = arith.constant 0 : index
    %313 = vector.load %arg23[%c0_87, %c0_88] : memref<32x128xf32, #tpu.memory_space<vmem>>, vector<32x128xf32>
    tpu.vector_store %arg23[%c0_87, %c0_88], %312 {strides = array<i32>} : memref<32x128xf32, #tpu.memory_space<vmem>>, vector<32x128xf32>,
    %c0_i32_89 = arith.constant 0 : i32
    %314 = arith.addi %3, %c0_i32_89 : i32
    %315 = arith.index_cast %314 : i32 to index
    %316 = memref.load %arg2[%315] : memref<64xi32, #tpu.memory_space<smem>>
    %317 = arith.index_cast %316 : i32 to index
    %c0_90 = arith.constant 0 : index
    %318 = vector.load %arg21[%317, %c0_90] : memref<16x128xf32, #tpu.memory_space<vmem>>, vector<1x128xf32>
    %319 = arith.index_cast %c0_i32_89 : i32 to index
    %c0_91 = arith.constant 0 : index
    %320 = vector.load %arg23[%319, %c0_91] : memref<32x128xf32, #tpu.memory_space<vmem>>, vector<1x128xf32>
    %321 = arith.addf %318, %320 : vector<1x128xf32>
    %322 = arith.index_cast %316 : i32 to index
    %c0_92 = arith.constant 0 : index
    %323 = vector.load %arg21[%322, %c0_92] : memref<16x128xf32, #tpu.memory_space<vmem>>, vector<1x128xf32>
    tpu.vector_store %arg21[%322, %c0_92], %321 {strides = array<i32>} : memref<16x128xf32, #tpu.memory_space<vmem>>, vector<1x128xf32>,
    %c1_i32_93 = arith.constant 1 : i32
    %324 = arith.addi %3, %c1_i32_93 : i32
    %325 = arith.index_cast %324 : i32 to index
    %326 = memref.load %arg2[%325] : memref<64xi32, #tpu.memory_space<smem>>
    %327 = arith.index_cast %326 : i32 to index
    %c0_94 = arith.constant 0 : index
    %328 = vector.load %arg21[%327, %c0_94] : memref<16x128xf32, #tpu.memory_space<vmem>>, vector<1x128xf32>
    %329 = arith.index_cast %c1_i32_93 : i32 to index
    %c0_95 = arith.constant 0 : index
    %330 = vector.load %arg23[%329, %c0_95] : memref<32x128xf32, #tpu.memory_space<vmem>>, vector<1x128xf32>
    %331 = arith.addf %328, %330 : vector<1x128xf32>
    %332 = arith.index_cast %326 : i32 to index
    %c0_96 = arith.constant 0 : index
    %333 = vector.load %arg21[%332, %c0_96] : memref<16x128xf32, #tpu.memory_space<vmem>>, vector<1x128xf32>
    tpu.vector_store %arg21[%332, %c0_96], %331 {strides = array<i32>} : memref<16x128xf32, #tpu.memory_space<vmem>>, vector<1x128xf32>,
    %c2_i32_97 = arith.constant 2 : i32
    %334 = arith.addi %3, %c2_i32_97 : i32
    %335 = arith.index_cast %334 : i32 to index
    %336 = memref.load %arg2[%335] : memref<64xi32, #tpu.memory_space<smem>>
    %337 = arith.index_cast %336 : i32 to index
    %c0_98 = arith.constant 0 : index
    %338 = vector.load %arg21[%337, %c0_98] : memref<16x128xf32, #tpu.memory_space<vmem>>, vector<1x128xf32>
    %339 = arith.index_cast %c2_i32_97 : i32 to index
    %c0_99 = arith.constant 0 : index
    %340 = vector.load %arg23[%339, %c0_99] : memref<32x128xf32, #tpu.memory_space<vmem>>, vector<1x128xf32>
    %341 = arith.addf %338, %340 : vector<1x128xf32>
    %342 = arith.index_cast %336 : i32 to index
    %c0_100 = arith.constant 0 : index
    %343 = vector.load %arg21[%342, %c0_100] : memref<16x128xf32, #tpu.memory_space<vmem>>, vector<1x128xf32>
    tpu.vector_store %arg21[%342, %c0_100], %341 {strides = array<i32>} : memref<16x128xf32, #tpu.memory_space<vmem>>, vector<1x128xf32>,
    %c3_i32_101 = arith.constant 3 : i32
    %344 = arith.addi %3, %c3_i32_101 : i32
    %345 = arith.index_cast %344 : i32 to index
    %346 = memref.load %arg2[%345] : memref<64xi32, #tpu.memory_space<smem>>
    %347 = arith.index_cast %346 : i32 to index
    %c0_102 = arith.constant 0 : index
    %348 = vector.load %arg21[%347, %c0_102] : memref<16x128xf32, #tpu.memory_space<vmem>>, vector<1x128xf32>
    %349 = arith.index_cast %c3_i32_101 : i32 to index
    %c0_103 = arith.constant 0 : index
    %350 = vector.load %arg23[%349, %c0_103] : memref<32x128xf32, #tpu.memory_space<vmem>>, vector<1x128xf32>
    %351 = arith.addf %348, %350 : vector<1x128xf32>
    %352 = arith.index_cast %346 : i32 to index
    %c0_104 = arith.constant 0 : index
    %353 = vector.load %arg21[%352, %c0_104] : memref<16x128xf32, #tpu.memory_space<vmem>>, vector<1x128xf32>
    tpu.vector_store %arg21[%352, %c0_104], %351 {strides = array<i32>} : memref<16x128xf32, #tpu.memory_space<vmem>>, vector<1x128xf32>,
    %c4_i32_105 = arith.constant 4 : i32
    %354 = arith.addi %3, %c4_i32_105 : i32
    %355 = arith.index_cast %354 : i32 to index
    %356 = memref.load %arg2[%355] : memref<64xi32, #tpu.memory_space<smem>>
    %357 = arith.index_cast %356 : i32 to index
    %c0_106 = arith.constant 0 : index
    %358 = vector.load %arg21[%357, %c0_106] : memref<16x128xf32, #tpu.memory_space<vmem>>, vector<1x128xf32>
    %359 = arith.index_cast %c4_i32_105 : i32 to index
    %c0_107 = arith.constant 0 : index
    %360 = vector.load %arg23[%359, %c0_107] : memref<32x128xf32, #tpu.memory_space<vmem>>, vector<1x128xf32>
    %361 = arith.addf %358, %360 : vector<1x128xf32>
    %362 = arith.index_cast %356 : i32 to index
    %c0_108 = arith.constant 0 : index
    %363 = vector.load %arg21[%362, %c0_108] : memref<16x128xf32, #tpu.memory_space<vmem>>, vector<1x128xf32>
    tpu.vector_store %arg21[%362, %c0_108], %361 {strides = array<i32>} : memref<16x128xf32, #tpu.memory_space<vmem>>, vector<1x128xf32>,
    %c5_i32_109 = arith.constant 5 : i32
    %364 = arith.addi %3, %c5_i32_109 : i32
    %365 = arith.index_cast %364 : i32 to index
    %366 = memref.load %arg2[%365] : memref<64xi32, #tpu.memory_space<smem>>
    %367 = arith.index_cast %366 : i32 to index
    %c0_110 = arith.constant 0 : index
    %368 = vector.load %arg21[%367, %c0_110] : memref<16x128xf32, #tpu.memory_space<vmem>>, vector<1x128xf32>
    %369 = arith.index_cast %c5_i32_109 : i32 to index
    %c0_111 = arith.constant 0 : index
    %370 = vector.load %arg23[%369, %c0_111] : memref<32x128xf32, #tpu.memory_space<vmem>>, vector<1x128xf32>
    %371 = arith.addf %368, %370 : vector<1x128xf32>
    %372 = arith.index_cast %366 : i32 to index
    %c0_112 = arith.constant 0 : index
    %373 = vector.load %arg21[%372, %c0_112] : memref<16x128xf32, #tpu.memory_space<vmem>>, vector<1x128xf32>
    tpu.vector_store %arg21[%372, %c0_112], %371 {strides = array<i32>} : memref<16x128xf32, #tpu.memory_space<vmem>>, vector<1x128xf32>,
    %c6_i32_113 = arith.constant 6 : i32
    %374 = arith.addi %3, %c6_i32_113 : i32
    %375 = arith.index_cast %374 : i32 to index
    %376 = memref.load %arg2[%375] : memref<64xi32, #tpu.memory_space<smem>>
    %377 = arith.index_cast %376 : i32 to index
    %c0_114 = arith.constant 0 : index
    %378 = vector.load %arg21[%377, %c0_114] : memref<16x128xf32, #tpu.memory_space<vmem>>, vector<1x128xf32>
    %379 = arith.index_cast %c6_i32_113 : i32 to index
    %c0_115 = arith.constant 0 : index
    %380 = vector.load %arg23[%379, %c0_115] : memref<32x128xf32, #tpu.memory_space<vmem>>, vector<1x128xf32>
    %381 = arith.addf %378, %380 : vector<1x128xf32>
    %382 = arith.index_cast %376 : i32 to index
    %c0_116 = arith.constant 0 : index
    %383 = vector.load %arg21[%382, %c0_116] : memref<16x128xf32, #tpu.memory_space<vmem>>, vector<1x128xf32>
    tpu.vector_store %arg21[%382, %c0_116], %381 {strides = array<i32>} : memref<16x128xf32, #tpu.memory_space<vmem>>, vector<1x128xf32>,
    %c7_i32_117 = arith.constant 7 : i32
    %384 = arith.addi %3, %c7_i32_117 : i32
    %385 = arith.index_cast %384 : i32 to index
    %386 = memref.load %arg2[%385] : memref<64xi32, #tpu.memory_space<smem>>
    %387 = arith.index_cast %386 : i32 to index
    %c0_118 = arith.constant 0 : index
    %388 = vector.load %arg21[%387, %c0_118] : memref<16x128xf32, #tpu.memory_space<vmem>>, vector<1x128xf32>
    %389 = arith.index_cast %c7_i32_117 : i32 to index
    %c0_119 = arith.constant 0 : index
    %390 = vector.load %arg23[%389, %c0_119] : memref<32x128xf32, #tpu.memory_space<vmem>>, vector<1x128xf32>
    %391 = arith.addf %388, %390 : vector<1x128xf32>
    %392 = arith.index_cast %386 : i32 to index
    %c0_120 = arith.constant 0 : index
    %393 = vector.load %arg21[%392, %c0_120] : memref<16x128xf32, #tpu.memory_space<vmem>>, vector<1x128xf32>
    tpu.vector_store %arg21[%392, %c0_120], %391 {strides = array<i32>} : memref<16x128xf32, #tpu.memory_space<vmem>>, vector<1x128xf32>,
    %c8_i32_121 = arith.constant 8 : i32
    %394 = arith.addi %3, %c8_i32_121 : i32
    %395 = arith.index_cast %394 : i32 to index
    %396 = memref.load %arg2[%395] : memref<64xi32, #tpu.memory_space<smem>>
    %397 = arith.index_cast %396 : i32 to index
    %c0_122 = arith.constant 0 : index
    %398 = vector.load %arg21[%397, %c0_122] : memref<16x128xf32, #tpu.memory_space<vmem>>, vector<1x128xf32>
    %399 = arith.index_cast %c8_i32_121 : i32 to index
    %c0_123 = arith.constant 0 : index
    %400 = vector.load %arg23[%399, %c0_123] : memref<32x128xf32, #tpu.memory_space<vmem>>, vector<1x128xf32>
    %401 = arith.addf %398, %400 : vector<1x128xf32>
    %402 = arith.index_cast %396 : i32 to index
    %c0_124 = arith.constant 0 : index
    %403 = vector.load %arg21[%402, %c0_124] : memref<16x128xf32, #tpu.memory_space<vmem>>, vector<1x128xf32>
    tpu.vector_store %arg21[%402, %c0_124], %401 {strides = array<i32>} : memref<16x128xf32, #tpu.memory_space<vmem>>, vector<1x128xf32>,
    %c9_i32_125 = arith.constant 9 : i32
    %404 = arith.addi %3, %c9_i32_125 : i32
    %405 = arith.index_cast %404 : i32 to index
    %406 = memref.load %arg2[%405] : memref<64xi32, #tpu.memory_space<smem>>
    %407 = arith.index_cast %406 : i32 to index
    %c0_126 = arith.constant 0 : index
    %408 = vector.load %arg21[%407, %c0_126] : memref<16x128xf32, #tpu.memory_space<vmem>>, vector<1x128xf32>
    %409 = arith.index_cast %c9_i32_125 : i32 to index
    %c0_127 = arith.constant 0 : index
    %410 = vector.load %arg23[%409, %c0_127] : memref<32x128xf32, #tpu.memory_space<vmem>>, vector<1x128xf32>
    %411 = arith.addf %408, %410 : vector<1x128xf32>
    %412 = arith.index_cast %406 : i32 to index
    %c0_128 = arith.constant 0 : index
    %413 = vector.load %arg21[%412, %c0_128] : memref<16x128xf32, #tpu.memory_space<vmem>>, vector<1x128xf32>
    tpu.vector_store %arg21[%412, %c0_128], %411 {strides = array<i32>} : memref<16x128xf32, #tpu.memory_space<vmem>>, vector<1x128xf32>,
    %c10_i32_129 = arith.constant 10 : i32
    %414 = arith.addi %3, %c10_i32_129 : i32
    %415 = arith.index_cast %414 : i32 to index
    %416 = memref.load %arg2[%415] : memref<64xi32, #tpu.memory_space<smem>>
    %417 = arith.index_cast %416 : i32 to index
    %c0_130 = arith.constant 0 : index
    %418 = vector.load %arg21[%417, %c0_130] : memref<16x128xf32, #tpu.memory_space<vmem>>, vector<1x128xf32>
    %419 = arith.index_cast %c10_i32_129 : i32 to index
    %c0_131 = arith.constant 0 : index
    %420 = vector.load %arg23[%419, %c0_131] : memref<32x128xf32, #tpu.memory_space<vmem>>, vector<1x128xf32>
    %421 = arith.addf %418, %420 : vector<1x128xf32>
    %422 = arith.index_cast %416 : i32 to index
    %c0_132 = arith.constant 0 : index
    %423 = vector.load %arg21[%422, %c0_132] : memref<16x128xf32, #tpu.memory_space<vmem>>, vector<1x128xf32>
    tpu.vector_store %arg21[%422, %c0_132], %421 {strides = array<i32>} : memref<16x128xf32, #tpu.memory_space<vmem>>, vector<1x128xf32>,
    %c11_i32_133 = arith.constant 11 : i32
    %424 = arith.addi %3, %c11_i32_133 : i32
    %425 = arith.index_cast %424 : i32 to index
    %426 = memref.load %arg2[%425] : memref<64xi32, #tpu.memory_space<smem>>
    %427 = arith.index_cast %426 : i32 to index
    %c0_134 = arith.constant 0 : index
    %428 = vector.load %arg21[%427, %c0_134] : memref<16x128xf32, #tpu.memory_space<vmem>>, vector<1x128xf32>
    %429 = arith.index_cast %c11_i32_133 : i32 to index
    %c0_135 = arith.constant 0 : index
    %430 = vector.load %arg23[%429, %c0_135] : memref<32x128xf32, #tpu.memory_space<vmem>>, vector<1x128xf32>
    %431 = arith.addf %428, %430 : vector<1x128xf32>
    %432 = arith.index_cast %426 : i32 to index
    %c0_136 = arith.constant 0 : index
    %433 = vector.load %arg21[%432, %c0_136] : memref<16x128xf32, #tpu.memory_space<vmem>>, vector<1x128xf32>
    tpu.vector_store %arg21[%432, %c0_136], %431 {strides = array<i32>} : memref<16x128xf32, #tpu.memory_space<vmem>>, vector<1x128xf32>,
    %c12_i32_137 = arith.constant 12 : i32
    %434 = arith.addi %3, %c12_i32_137 : i32
    %435 = arith.index_cast %434 : i32 to index
    %436 = memref.load %arg2[%435] : memref<64xi32, #tpu.memory_space<smem>>
    %437 = arith.index_cast %436 : i32 to index
    %c0_138 = arith.constant 0 : index
    %438 = vector.load %arg21[%437, %c0_138] : memref<16x128xf32, #tpu.memory_space<vmem>>, vector<1x128xf32>
    %439 = arith.index_cast %c12_i32_137 : i32 to index
    %c0_139 = arith.constant 0 : index
    %440 = vector.load %arg23[%439, %c0_139] : memref<32x128xf32, #tpu.memory_space<vmem>>, vector<1x128xf32>
    %441 = arith.addf %438, %440 : vector<1x128xf32>
    %442 = arith.index_cast %436 : i32 to index
    %c0_140 = arith.constant 0 : index
    %443 = vector.load %arg21[%442, %c0_140] : memref<16x128xf32, #tpu.memory_space<vmem>>, vector<1x128xf32>
    tpu.vector_store %arg21[%442, %c0_140], %441 {strides = array<i32>} : memref<16x128xf32, #tpu.memory_space<vmem>>, vector<1x128xf32>,
    %c13_i32_141 = arith.constant 13 : i32
    %444 = arith.addi %3, %c13_i32_141 : i32
    %445 = arith.index_cast %444 : i32 to index
    %446 = memref.load %arg2[%445] : memref<64xi32, #tpu.memory_space<smem>>
    %447 = arith.index_cast %446 : i32 to index
    %c0_142 = arith.constant 0 : index
    %448 = vector.load %arg21[%447, %c0_142] : memref<16x128xf32, #tpu.memory_space<vmem>>, vector<1x128xf32>
    %449 = arith.index_cast %c13_i32_141 : i32 to index
    %c0_143 = arith.constant 0 : index
    %450 = vector.load %arg23[%449, %c0_143] : memref<32x128xf32, #tpu.memory_space<vmem>>, vector<1x128xf32>
    %451 = arith.addf %448, %450 : vector<1x128xf32>
    %452 = arith.index_cast %446 : i32 to index
    %c0_144 = arith.constant 0 : index
    %453 = vector.load %arg21[%452, %c0_144] : memref<16x128xf32, #tpu.memory_space<vmem>>, vector<1x128xf32>
    tpu.vector_store %arg21[%452, %c0_144], %451 {strides = array<i32>} : memref<16x128xf32, #tpu.memory_space<vmem>>, vector<1x128xf32>,
    %c14_i32_145 = arith.constant 14 : i32
    %454 = arith.addi %3, %c14_i32_145 : i32
    %455 = arith.index_cast %454 : i32 to index
    %456 = memref.load %arg2[%455] : memref<64xi32, #tpu.memory_space<smem>>
    %457 = arith.index_cast %456 : i32 to index
    %c0_146 = arith.constant 0 : index
    %458 = vector.load %arg21[%457, %c0_146] : memref<16x128xf32, #tpu.memory_space<vmem>>, vector<1x128xf32>
    %459 = arith.index_cast %c14_i32_145 : i32 to index
    %c0_147 = arith.constant 0 : index
    %460 = vector.load %arg23[%459, %c0_147] : memref<32x128xf32, #tpu.memory_space<vmem>>, vector<1x128xf32>
    %461 = arith.addf %458, %460 : vector<1x128xf32>
    %462 = arith.index_cast %456 : i32 to index
    %c0_148 = arith.constant 0 : index
    %463 = vector.load %arg21[%462, %c0_148] : memref<16x128xf32, #tpu.memory_space<vmem>>, vector<1x128xf32>
    tpu.vector_store %arg21[%462, %c0_148], %461 {strides = array<i32>} : memref<16x128xf32, #tpu.memory_space<vmem>>, vector<1x128xf32>,
    %c15_i32_149 = arith.constant 15 : i32
    %464 = arith.addi %3, %c15_i32_149 : i32
    %465 = arith.index_cast %464 : i32 to index
    %466 = memref.load %arg2[%465] : memref<64xi32, #tpu.memory_space<smem>>
    %467 = arith.index_cast %466 : i32 to index
    %c0_150 = arith.constant 0 : index
    %468 = vector.load %arg21[%467, %c0_150] : memref<16x128xf32, #tpu.memory_space<vmem>>, vector<1x128xf32>
    %469 = arith.index_cast %c15_i32_149 : i32 to index
    %c0_151 = arith.constant 0 : index
    %470 = vector.load %arg23[%469, %c0_151] : memref<32x128xf32, #tpu.memory_space<vmem>>, vector<1x128xf32>
    %471 = arith.addf %468, %470 : vector<1x128xf32>
    %472 = arith.index_cast %466 : i32 to index
    %c0_152 = arith.constant 0 : index
    %473 = vector.load %arg21[%472, %c0_152] : memref<16x128xf32, #tpu.memory_space<vmem>>, vector<1x128xf32>
    tpu.vector_store %arg21[%472, %c0_152], %471 {strides = array<i32>} : memref<16x128xf32, #tpu.memory_space<vmem>>, vector<1x128xf32>,
    %c16_i32_153 = arith.constant 16 : i32
    %474 = arith.addi %3, %c16_i32_153 : i32
    %475 = arith.index_cast %474 : i32 to index
    %476 = memref.load %arg2[%475] : memref<64xi32, #tpu.memory_space<smem>>
    %477 = arith.index_cast %476 : i32 to index
    %c0_154 = arith.constant 0 : index
    %478 = vector.load %arg21[%477, %c0_154] : memref<16x128xf32, #tpu.memory_space<vmem>>, vector<1x128xf32>
    %479 = arith.index_cast %c16_i32_153 : i32 to index
    %c0_155 = arith.constant 0 : index
    %480 = vector.load %arg23[%479, %c0_155] : memref<32x128xf32, #tpu.memory_space<vmem>>, vector<1x128xf32>
    %481 = arith.addf %478, %480 : vector<1x128xf32>
    %482 = arith.index_cast %476 : i32 to index
    %c0_156 = arith.constant 0 : index
    %483 = vector.load %arg21[%482, %c0_156] : memref<16x128xf32, #tpu.memory_space<vmem>>, vector<1x128xf32>
    tpu.vector_store %arg21[%482, %c0_156], %481 {strides = array<i32>} : memref<16x128xf32, #tpu.memory_space<vmem>>, vector<1x128xf32>,
    %c17_i32_157 = arith.constant 17 : i32
    %484 = arith.addi %3, %c17_i32_157 : i32
    %485 = arith.index_cast %484 : i32 to index
    %486 = memref.load %arg2[%485] : memref<64xi32, #tpu.memory_space<smem>>
    %487 = arith.index_cast %486 : i32 to index
    %c0_158 = arith.constant 0 : index
    %488 = vector.load %arg21[%487, %c0_158] : memref<16x128xf32, #tpu.memory_space<vmem>>, vector<1x128xf32>
    %489 = arith.index_cast %c17_i32_157 : i32 to index
    %c0_159 = arith.constant 0 : index
    %490 = vector.load %arg23[%489, %c0_159] : memref<32x128xf32, #tpu.memory_space<vmem>>, vector<1x128xf32>
    %491 = arith.addf %488, %490 : vector<1x128xf32>
    %492 = arith.index_cast %486 : i32 to index
    %c0_160 = arith.constant 0 : index
    %493 = vector.load %arg21[%492, %c0_160] : memref<16x128xf32, #tpu.memory_space<vmem>>, vector<1x128xf32>
    tpu.vector_store %arg21[%492, %c0_160], %491 {strides = array<i32>} : memref<16x128xf32, #tpu.memory_space<vmem>>, vector<1x128xf32>,
    %c18_i32_161 = arith.constant 18 : i32
    %494 = arith.addi %3, %c18_i32_161 : i32
    %495 = arith.index_cast %494 : i32 to index
    %496 = memref.load %arg2[%495] : memref<64xi32, #tpu.memory_space<smem>>
    %497 = arith.index_cast %496 : i32 to index
    %c0_162 = arith.constant 0 : index
    %498 = vector.load %arg21[%497, %c0_162] : memref<16x128xf32, #tpu.memory_space<vmem>>, vector<1x128xf32>
    %499 = arith.index_cast %c18_i32_161 : i32 to index
    %c0_163 = arith.constant 0 : index
    %500 = vector.load %arg23[%499, %c0_163] : memref<32x128xf32, #tpu.memory_space<vmem>>, vector<1x128xf32>
    %501 = arith.addf %498, %500 : vector<1x128xf32>
    %502 = arith.index_cast %496 : i32 to index
    %c0_164 = arith.constant 0 : index
    %503 = vector.load %arg21[%502, %c0_164] : memref<16x128xf32, #tpu.memory_space<vmem>>, vector<1x128xf32>
    tpu.vector_store %arg21[%502, %c0_164], %501 {strides = array<i32>} : memref<16x128xf32, #tpu.memory_space<vmem>>, vector<1x128xf32>,
    %c19_i32_165 = arith.constant 19 : i32
    %504 = arith.addi %3, %c19_i32_165 : i32
    %505 = arith.index_cast %504 : i32 to index
    %506 = memref.load %arg2[%505] : memref<64xi32, #tpu.memory_space<smem>>
    %507 = arith.index_cast %506 : i32 to index
    %c0_166 = arith.constant 0 : index
    %508 = vector.load %arg21[%507, %c0_166] : memref<16x128xf32, #tpu.memory_space<vmem>>, vector<1x128xf32>
    %509 = arith.index_cast %c19_i32_165 : i32 to index
    %c0_167 = arith.constant 0 : index
    %510 = vector.load %arg23[%509, %c0_167] : memref<32x128xf32, #tpu.memory_space<vmem>>, vector<1x128xf32>
    %511 = arith.addf %508, %510 : vector<1x128xf32>
    %512 = arith.index_cast %506 : i32 to index
    %c0_168 = arith.constant 0 : index
    %513 = vector.load %arg21[%512, %c0_168] : memref<16x128xf32, #tpu.memory_space<vmem>>, vector<1x128xf32>
    tpu.vector_store %arg21[%512, %c0_168], %511 {strides = array<i32>} : memref<16x128xf32, #tpu.memory_space<vmem>>, vector<1x128xf32>,
    %c20_i32_169 = arith.constant 20 : i32
    %514 = arith.addi %3, %c20_i32_169 : i32
    %515 = arith.index_cast %514 : i32 to index
    %516 = memref.load %arg2[%515] : memref<64xi32, #tpu.memory_space<smem>>
    %517 = arith.index_cast %516 : i32 to index
    %c0_170 = arith.constant 0 : index
    %518 = vector.load %arg21[%517, %c0_170] : memref<16x128xf32, #tpu.memory_space<vmem>>, vector<1x128xf32>
    %519 = arith.index_cast %c20_i32_169 : i32 to index
    %c0_171 = arith.constant 0 : index
    %520 = vector.load %arg23[%519, %c0_171] : memref<32x128xf32, #tpu.memory_space<vmem>>, vector<1x128xf32>
    %521 = arith.addf %518, %520 : vector<1x128xf32>
    %522 = arith.index_cast %516 : i32 to index
    %c0_172 = arith.constant 0 : index
    %523 = vector.load %arg21[%522, %c0_172] : memref<16x128xf32, #tpu.memory_space<vmem>>, vector<1x128xf32>
    tpu.vector_store %arg21[%522, %c0_172], %521 {strides = array<i32>} : memref<16x128xf32, #tpu.memory_space<vmem>>, vector<1x128xf32>,
    %c21_i32_173 = arith.constant 21 : i32
    %524 = arith.addi %3, %c21_i32_173 : i32
    %525 = arith.index_cast %524 : i32 to index
    %526 = memref.load %arg2[%525] : memref<64xi32, #tpu.memory_space<smem>>
    %527 = arith.index_cast %526 : i32 to index
    %c0_174 = arith.constant 0 : index
    %528 = vector.load %arg21[%527, %c0_174] : memref<16x128xf32, #tpu.memory_space<vmem>>, vector<1x128xf32>
    %529 = arith.index_cast %c21_i32_173 : i32 to index
    %c0_175 = arith.constant 0 : index
    %530 = vector.load %arg23[%529, %c0_175] : memref<32x128xf32, #tpu.memory_space<vmem>>, vector<1x128xf32>
    %531 = arith.addf %528, %530 : vector<1x128xf32>
    %532 = arith.index_cast %526 : i32 to index
    %c0_176 = arith.constant 0 : index
    %533 = vector.load %arg21[%532, %c0_176] : memref<16x128xf32, #tpu.memory_space<vmem>>, vector<1x128xf32>
    tpu.vector_store %arg21[%532, %c0_176], %531 {strides = array<i32>} : memref<16x128xf32, #tpu.memory_space<vmem>>, vector<1x128xf32>,
    %c22_i32_177 = arith.constant 22 : i32
    %534 = arith.addi %3, %c22_i32_177 : i32
    %535 = arith.index_cast %534 : i32 to index
    %536 = memref.load %arg2[%535] : memref<64xi32, #tpu.memory_space<smem>>
    %537 = arith.index_cast %536 : i32 to index
    %c0_178 = arith.constant 0 : index
    %538 = vector.load %arg21[%537, %c0_178] : memref<16x128xf32, #tpu.memory_space<vmem>>, vector<1x128xf32>
    %539 = arith.index_cast %c22_i32_177 : i32 to index
    %c0_179 = arith.constant 0 : index
    %540 = vector.load %arg23[%539, %c0_179] : memref<32x128xf32, #tpu.memory_space<vmem>>, vector<1x128xf32>
    %541 = arith.addf %538, %540 : vector<1x128xf32>
    %542 = arith.index_cast %536 : i32 to index
    %c0_180 = arith.constant 0 : index
    %543 = vector.load %arg21[%542, %c0_180] : memref<16x128xf32, #tpu.memory_space<vmem>>, vector<1x128xf32>
    tpu.vector_store %arg21[%542, %c0_180], %541 {strides = array<i32>} : memref<16x128xf32, #tpu.memory_space<vmem>>, vector<1x128xf32>,
    %c23_i32_181 = arith.constant 23 : i32
    %544 = arith.addi %3, %c23_i32_181 : i32
    %545 = arith.index_cast %544 : i32 to index
    %546 = memref.load %arg2[%545] : memref<64xi32, #tpu.memory_space<smem>>
    %547 = arith.index_cast %546 : i32 to index
    %c0_182 = arith.constant 0 : index
    %548 = vector.load %arg21[%547, %c0_182] : memref<16x128xf32, #tpu.memory_space<vmem>>, vector<1x128xf32>
    %549 = arith.index_cast %c23_i32_181 : i32 to index
    %c0_183 = arith.constant 0 : index
    %550 = vector.load %arg23[%549, %c0_183] : memref<32x128xf32, #tpu.memory_space<vmem>>, vector<1x128xf32>
    %551 = arith.addf %548, %550 : vector<1x128xf32>
    %552 = arith.index_cast %546 : i32 to index
    %c0_184 = arith.constant 0 : index
    %553 = vector.load %arg21[%552, %c0_184] : memref<16x128xf32, #tpu.memory_space<vmem>>, vector<1x128xf32>
    tpu.vector_store %arg21[%552, %c0_184], %551 {strides = array<i32>} : memref<16x128xf32, #tpu.memory_space<vmem>>, vector<1x128xf32>,
    %c24_i32_185 = arith.constant 24 : i32
    %554 = arith.addi %3, %c24_i32_185 : i32
    %555 = arith.index_cast %554 : i32 to index
    %556 = memref.load %arg2[%555] : memref<64xi32, #tpu.memory_space<smem>>
    %557 = arith.index_cast %556 : i32 to index
    %c0_186 = arith.constant 0 : index
    %558 = vector.load %arg21[%557, %c0_186] : memref<16x128xf32, #tpu.memory_space<vmem>>, vector<1x128xf32>
    %559 = arith.index_cast %c24_i32_185 : i32 to index
    %c0_187 = arith.constant 0 : index
    %560 = vector.load %arg23[%559, %c0_187] : memref<32x128xf32, #tpu.memory_space<vmem>>, vector<1x128xf32>
    %561 = arith.addf %558, %560 : vector<1x128xf32>
    %562 = arith.index_cast %556 : i32 to index
    %c0_188 = arith.constant 0 : index
    %563 = vector.load %arg21[%562, %c0_188] : memref<16x128xf32, #tpu.memory_space<vmem>>, vector<1x128xf32>
    tpu.vector_store %arg21[%562, %c0_188], %561 {strides = array<i32>} : memref<16x128xf32, #tpu.memory_space<vmem>>, vector<1x128xf32>,
    %c25_i32_189 = arith.constant 25 : i32
    %564 = arith.addi %3, %c25_i32_189 : i32
    %565 = arith.index_cast %564 : i32 to index
    %566 = memref.load %arg2[%565] : memref<64xi32, #tpu.memory_space<smem>>
    %567 = arith.index_cast %566 : i32 to index
    %c0_190 = arith.constant 0 : index
    %568 = vector.load %arg21[%567, %c0_190] : memref<16x128xf32, #tpu.memory_space<vmem>>, vector<1x128xf32>
    %569 = arith.index_cast %c25_i32_189 : i32 to index
    %c0_191 = arith.constant 0 : index
    %570 = vector.load %arg23[%569, %c0_191] : memref<32x128xf32, #tpu.memory_space<vmem>>, vector<1x128xf32>
    %571 = arith.addf %568, %570 : vector<1x128xf32>
    %572 = arith.index_cast %566 : i32 to index
    %c0_192 = arith.constant 0 : index
    %573 = vector.load %arg21[%572, %c0_192] : memref<16x128xf32, #tpu.memory_space<vmem>>, vector<1x128xf32>
    tpu.vector_store %arg21[%572, %c0_192], %571 {strides = array<i32>} : memref<16x128xf32, #tpu.memory_space<vmem>>, vector<1x128xf32>,
    %c26_i32_193 = arith.constant 26 : i32
    %574 = arith.addi %3, %c26_i32_193 : i32
    %575 = arith.index_cast %574 : i32 to index
    %576 = memref.load %arg2[%575] : memref<64xi32, #tpu.memory_space<smem>>
    %577 = arith.index_cast %576 : i32 to index
    %c0_194 = arith.constant 0 : index
    %578 = vector.load %arg21[%577, %c0_194] : memref<16x128xf32, #tpu.memory_space<vmem>>, vector<1x128xf32>
    %579 = arith.index_cast %c26_i32_193 : i32 to index
    %c0_195 = arith.constant 0 : index
    %580 = vector.load %arg23[%579, %c0_195] : memref<32x128xf32, #tpu.memory_space<vmem>>, vector<1x128xf32>
    %581 = arith.addf %578, %580 : vector<1x128xf32>
    %582 = arith.index_cast %576 : i32 to index
    %c0_196 = arith.constant 0 : index
    %583 = vector.load %arg21[%582, %c0_196] : memref<16x128xf32, #tpu.memory_space<vmem>>, vector<1x128xf32>
    tpu.vector_store %arg21[%582, %c0_196], %581 {strides = array<i32>} : memref<16x128xf32, #tpu.memory_space<vmem>>, vector<1x128xf32>,
    %c27_i32_197 = arith.constant 27 : i32
    %584 = arith.addi %3, %c27_i32_197 : i32
    %585 = arith.index_cast %584 : i32 to index
    %586 = memref.load %arg2[%585] : memref<64xi32, #tpu.memory_space<smem>>
    %587 = arith.index_cast %586 : i32 to index
    %c0_198 = arith.constant 0 : index
    %588 = vector.load %arg21[%587, %c0_198] : memref<16x128xf32, #tpu.memory_space<vmem>>, vector<1x128xf32>
    %589 = arith.index_cast %c27_i32_197 : i32 to index
    %c0_199 = arith.constant 0 : index
    %590 = vector.load %arg23[%589, %c0_199] : memref<32x128xf32, #tpu.memory_space<vmem>>, vector<1x128xf32>
    %591 = arith.addf %588, %590 : vector<1x128xf32>
    %592 = arith.index_cast %586 : i32 to index
    %c0_200 = arith.constant 0 : index
    %593 = vector.load %arg21[%592, %c0_200] : memref<16x128xf32, #tpu.memory_space<vmem>>, vector<1x128xf32>
    tpu.vector_store %arg21[%592, %c0_200], %591 {strides = array<i32>} : memref<16x128xf32, #tpu.memory_space<vmem>>, vector<1x128xf32>,
    %c28_i32_201 = arith.constant 28 : i32
    %594 = arith.addi %3, %c28_i32_201 : i32
    %595 = arith.index_cast %594 : i32 to index
    %596 = memref.load %arg2[%595] : memref<64xi32, #tpu.memory_space<smem>>
    %597 = arith.index_cast %596 : i32 to index
    %c0_202 = arith.constant 0 : index
    %598 = vector.load %arg21[%597, %c0_202] : memref<16x128xf32, #tpu.memory_space<vmem>>, vector<1x128xf32>
    %599 = arith.index_cast %c28_i32_201 : i32 to index
    %c0_203 = arith.constant 0 : index
    %600 = vector.load %arg23[%599, %c0_203] : memref<32x128xf32, #tpu.memory_space<vmem>>, vector<1x128xf32>
    %601 = arith.addf %598, %600 : vector<1x128xf32>
    %602 = arith.index_cast %596 : i32 to index
    %c0_204 = arith.constant 0 : index
    %603 = vector.load %arg21[%602, %c0_204] : memref<16x128xf32, #tpu.memory_space<vmem>>, vector<1x128xf32>
    tpu.vector_store %arg21[%602, %c0_204], %601 {strides = array<i32>} : memref<16x128xf32, #tpu.memory_space<vmem>>, vector<1x128xf32>,
    %c29_i32_205 = arith.constant 29 : i32
    %604 = arith.addi %3, %c29_i32_205 : i32
    %605 = arith.index_cast %604 : i32 to index
    %606 = memref.load %arg2[%605] : memref<64xi32, #tpu.memory_space<smem>>
    %607 = arith.index_cast %606 : i32 to index
    %c0_206 = arith.constant 0 : index
    %608 = vector.load %arg21[%607, %c0_206] : memref<16x128xf32, #tpu.memory_space<vmem>>, vector<1x128xf32>
    %609 = arith.index_cast %c29_i32_205 : i32 to index
    %c0_207 = arith.constant 0 : index
    %610 = vector.load %arg23[%609, %c0_207] : memref<32x128xf32, #tpu.memory_space<vmem>>, vector<1x128xf32>
    %611 = arith.addf %608, %610 : vector<1x128xf32>
    %612 = arith.index_cast %606 : i32 to index
    %c0_208 = arith.constant 0 : index
    %613 = vector.load %arg21[%612, %c0_208] : memref<16x128xf32, #tpu.memory_space<vmem>>, vector<1x128xf32>
    tpu.vector_store %arg21[%612, %c0_208], %611 {strides = array<i32>} : memref<16x128xf32, #tpu.memory_space<vmem>>, vector<1x128xf32>,
    %c30_i32_209 = arith.constant 30 : i32
    %614 = arith.addi %3, %c30_i32_209 : i32
    %615 = arith.index_cast %614 : i32 to index
    %616 = memref.load %arg2[%615] : memref<64xi32, #tpu.memory_space<smem>>
    %617 = arith.index_cast %616 : i32 to index
    %c0_210 = arith.constant 0 : index
    %618 = vector.load %arg21[%617, %c0_210] : memref<16x128xf32, #tpu.memory_space<vmem>>, vector<1x128xf32>
    %619 = arith.index_cast %c30_i32_209 : i32 to index
    %c0_211 = arith.constant 0 : index
    %620 = vector.load %arg23[%619, %c0_211] : memref<32x128xf32, #tpu.memory_space<vmem>>, vector<1x128xf32>
    %621 = arith.addf %618, %620 : vector<1x128xf32>
    %622 = arith.index_cast %616 : i32 to index
    %c0_212 = arith.constant 0 : index
    %623 = vector.load %arg21[%622, %c0_212] : memref<16x128xf32, #tpu.memory_space<vmem>>, vector<1x128xf32>
    tpu.vector_store %arg21[%622, %c0_212], %621 {strides = array<i32>} : memref<16x128xf32, #tpu.memory_space<vmem>>, vector<1x128xf32>,
    %c31_i32_213 = arith.constant 31 : i32
    %624 = arith.addi %3, %c31_i32_213 : i32
    %625 = arith.index_cast %624 : i32 to index
    %626 = memref.load %arg2[%625] : memref<64xi32, #tpu.memory_space<smem>>
    %627 = arith.index_cast %626 : i32 to index
    %c0_214 = arith.constant 0 : index
    %628 = vector.load %arg21[%627, %c0_214] : memref<16x128xf32, #tpu.memory_space<vmem>>, vector<1x128xf32>
    %629 = arith.index_cast %c31_i32_213 : i32 to index
    %c0_215 = arith.constant 0 : index
    %630 = vector.load %arg23[%629, %c0_215] : memref<32x128xf32, #tpu.memory_space<vmem>>, vector<1x128xf32>
    %631 = arith.addf %628, %630 : vector<1x128xf32>
    %632 = arith.index_cast %626 : i32 to index
    %c0_216 = arith.constant 0 : index
    %633 = vector.load %arg21[%632, %c0_216] : memref<16x128xf32, #tpu.memory_space<vmem>>, vector<1x128xf32>
    tpu.vector_store %arg21[%632, %c0_216], %631 {strides = array<i32>} : memref<16x128xf32, #tpu.memory_space<vmem>>, vector<1x128xf32>,
    %c32_i32_217 = arith.constant 32 : i32
    %c1_i32_218 = arith.constant 1 : i32
    %634 = arith.cmpi eq, %arg0, %c1_i32_218 : i32
    %635 = arith.extui %634 : i1 to i32
    %c0_i32_219 = arith.constant 0 : i32
    %636 = arith.cmpi ne, %635, %c0_i32_219 : i32
    scf.if %636 {
      %c0_220 = arith.constant 0 : index
      %c0_221 = arith.constant 0 : index
      %637 = vector.load %arg21[%c0_220, %c0_221] : memref<16x128xf32, #tpu.memory_space<vmem>>, vector<16x128xf32>
      %c0_222 = arith.constant 0 : index
      %c0_223 = arith.constant 0 : index
      %638 = vector.load %arg3[%c0_222, %c0_223] : memref<16x32xf32, #tpu.memory_space<vmem>>, vector<16x32xf32>
      %639 = vector.extract_strided_slice %637 {offsets = [0, 0], sizes = [16, 32], strides = [1, 1]} : vector<16x128xf32> to vector<16x32xf32>
      %640 = arith.addf %638, %639 : vector<16x32xf32>
      %c0_224 = arith.constant 0 : index
      %c0_225 = arith.constant 0 : index
      %641 = vector.load %arg4[%c0_224, %c0_225] : memref<16x96xf32, #tpu.memory_space<vmem>>, vector<16x96xf32>
      %642 = vector.extract_strided_slice %637 {offsets = [0, 32], sizes = [16, 96], strides = [1, 1]} : vector<16x128xf32> to vector<16x96xf32>
      %643 = arith.addf %641, %642 : vector<16x96xf32>
      %644 = vector.extract_strided_slice %643 {offsets = [0, 0], sizes = [16, 32], strides = [1, 1]} : vector<16x96xf32> to vector<16x32xf32>
      %645 = vector.extract_strided_slice %643 {offsets = [0, 32], sizes = [16, 32], strides = [1, 1]} : vector<16x96xf32> to vector<16x32xf32>
      %646 = vector.extract_strided_slice %643 {offsets = [0, 64], sizes = [16, 32], strides = [1, 1]} : vector<16x96xf32> to vector<16x32xf32>
      %c0_226 = arith.constant 0 : index
      %c0_227 = arith.constant 0 : index
      %647 = vector.load %arg12[%c0_226, %c0_227] : memref<32x32xbf16, #tpu.memory_space<vmem>>, vector<32x32xbf16>
      %c0_228 = arith.constant 0 : index
      %c0_229 = arith.constant 0 : index
      %648 = vector.load %arg13[%c0_228, %c0_229] : memref<32x32xbf16, #tpu.memory_space<vmem>>, vector<32x32xbf16>
      %649 = arith.truncf %644 : vector<16x32xf32> to vector<16x32xbf16>
      %cst_230 = arith.constant dense<0.000000e+00> : vector<16x32xf32>
      %650 = tpu.matmul %649, %647, %cst_230 {dimension_numbers = #tpu.dot_dimension_numbers<[1], [0], [0], [1], [0, 0, 1, 1], [], []>} : vector<16x32xbf16>, vector<32x32xbf16>, vector<16x32xf32> -> vector<16x32xf32>
      %651 = arith.truncf %645 : vector<16x32xf32> to vector<16x32xbf16>
      %cst_231 = arith.constant dense<0.000000e+00> : vector<16x32xf32>
      %652 = tpu.matmul %651, %647, %cst_231 {dimension_numbers = #tpu.dot_dimension_numbers<[1], [0], [0], [1], [0, 0, 1, 1], [], []>} : vector<16x32xbf16>, vector<32x32xbf16>, vector<16x32xf32> -> vector<16x32xf32>
      %653 = arith.truncf %646 : vector<16x32xf32> to vector<16x32xbf16>
      %cst_232 = arith.constant dense<0.000000e+00> : vector<16x32xf32>
      %654 = tpu.matmul %653, %647, %cst_232 {dimension_numbers = #tpu.dot_dimension_numbers<[1], [0], [0], [1], [0, 0, 1, 1], [], []>} : vector<16x32xbf16>, vector<32x32xbf16>, vector<16x32xf32> -> vector<16x32xf32>
      %655 = arith.truncf %644 : vector<16x32xf32> to vector<16x32xbf16>
      %cst_233 = arith.constant dense<0.000000e+00> : vector<16x32xf32>
      %656 = tpu.matmul %655, %648, %cst_233 {dimension_numbers = #tpu.dot_dimension_numbers<[1], [0], [0], [1], [0, 0, 1, 1], [], []>} : vector<16x32xbf16>, vector<32x32xbf16>, vector<16x32xf32> -> vector<16x32xf32>
      %657 = arith.truncf %645 : vector<16x32xf32> to vector<16x32xbf16>
      %cst_234 = arith.constant dense<0.000000e+00> : vector<16x32xf32>
      %658 = tpu.matmul %657, %648, %cst_234 {dimension_numbers = #tpu.dot_dimension_numbers<[1], [0], [0], [1], [0, 0, 1, 1], [], []>} : vector<16x32xbf16>, vector<32x32xbf16>, vector<16x32xf32> -> vector<16x32xf32>
      %659 = arith.truncf %646 : vector<16x32xf32> to vector<16x32xbf16>
      %cst_235 = arith.constant dense<0.000000e+00> : vector<16x32xf32>
      %660 = tpu.matmul %659, %648, %cst_235 {dimension_numbers = #tpu.dot_dimension_numbers<[1], [0], [0], [1], [0, 0, 1, 1], [], []>} : vector<16x32xbf16>, vector<32x32xbf16>, vector<16x32xf32> -> vector<16x32xf32>
      %661 = arith.mulf %656, %656 : vector<16x32xf32>
      %662 = arith.mulf %658, %658 : vector<16x32xf32>
      %663 = arith.addf %661, %662 : vector<16x32xf32>
      %664 = arith.mulf %660, %660 : vector<16x32xf32>
      %665 = arith.addf %663, %664 : vector<16x32xf32>
      %666 = math.sqrt %665 : vector<16x32xf32>
      %c0_236 = arith.constant 0 : index
      %c0_237 = arith.constant 0 : index
      %667 = vector.load %arg14[%c0_236, %c0_237] : memref<32x32xbf16, #tpu.memory_space<vmem>>, vector<32x32xbf16>
      %668 = arith.truncf %640 : vector<16x32xf32> to vector<16x32xbf16>
      %cst_238 = arith.constant dense<0.000000e+00> : vector<16x32xf32>
      %669 = tpu.matmul %668, %667, %cst_238 {dimension_numbers = #tpu.dot_dimension_numbers<[1], [0], [0], [1], [0, 0, 1, 1], [], []>} : vector<16x32xbf16>, vector<32x32xbf16>, vector<16x32xf32> -> vector<16x32xf32>
      %c0_239 = arith.constant 0 : index
      %c0_240 = arith.constant 0 : index
      %670 = vector.load %arg15[%c0_239, %c0_240] : memref<32x32xbf16, #tpu.memory_space<vmem>>, vector<32x32xbf16>
      %671 = arith.truncf %666 : vector<16x32xf32> to vector<16x32xbf16>
      %cst_241 = arith.constant dense<0.000000e+00> : vector<16x32xf32>
      %672 = tpu.matmul %671, %670, %cst_241 {dimension_numbers = #tpu.dot_dimension_numbers<[1], [0], [0], [1], [0, 0, 1, 1], [], []>} : vector<16x32xbf16>, vector<32x32xbf16>, vector<16x32xf32> -> vector<16x32xf32>
      %673 = arith.addf %669, %672 : vector<16x32xf32>
      %c0_242 = arith.constant 0 : index
      %c0_243 = arith.constant 0 : index
      %674 = vector.load %arg16[%c0_242, %c0_243] : memref<1x32xf32, #tpu.memory_space<vmem>>, vector<1x32xf32>
      %675 = vector.broadcast %674 : vector<1x32xf32> to vector<16x32xf32>
      %676 = arith.addf %673, %675 : vector<16x32xf32>
      %677 = arith.negf %676 : vector<16x32xf32>
      %678 = math.exp %677 : vector<16x32xf32>
      %cst_244 = arith.constant 1.000000e+00 : f32
      %679 = vector.broadcast %cst_244 : f32 to vector<16x32xf32>
      %680 = arith.addf %679, %678 : vector<16x32xf32>
      %681 = arith.divf %679, %680 : vector<16x32xf32>
      %682 = arith.mulf %676, %681 : vector<16x32xf32>
      %c0_245 = arith.constant 0 : index
      %c0_246 = arith.constant 0 : index
      %683 = vector.load %arg17[%c0_245, %c0_246] : memref<32x96xbf16, #tpu.memory_space<vmem>>, vector<32x96xbf16>
      %684 = arith.truncf %682 : vector<16x32xf32> to vector<16x32xbf16>
      %cst_247 = arith.constant dense<0.000000e+00> : vector<16x96xf32>
      %685 = tpu.matmul %684, %683, %cst_247 {dimension_numbers = #tpu.dot_dimension_numbers<[1], [0], [0], [1], [0, 0, 1, 1], [], []>} : vector<16x32xbf16>, vector<32x96xbf16>, vector<16x96xf32> -> vector<16x96xf32>
      %c0_248 = arith.constant 0 : index
      %c0_249 = arith.constant 0 : index
      %686 = vector.load %arg18[%c0_248, %c0_249] : memref<1x96xf32, #tpu.memory_space<vmem>>, vector<1x96xf32>
      %687 = vector.broadcast %686 : vector<1x96xf32> to vector<16x96xf32>
      %688 = arith.addf %685, %687 : vector<16x96xf32>
      %689 = vector.extract_strided_slice %688 {offsets = [0, 0], sizes = [16, 32], strides = [1, 1]} : vector<16x96xf32> to vector<16x32xf32>
      %690 = vector.extract_strided_slice %688 {offsets = [0, 32], sizes = [16, 32], strides = [1, 1]} : vector<16x96xf32> to vector<16x32xf32>
      %691 = vector.extract_strided_slice %688 {offsets = [0, 64], sizes = [16, 32], strides = [1, 1]} : vector<16x96xf32> to vector<16x32xf32>
      %692 = arith.mulf %650, %656 : vector<16x32xf32>
      %693 = arith.mulf %652, %658 : vector<16x32xf32>
      %694 = arith.addf %692, %693 : vector<16x32xf32>
      %695 = arith.mulf %654, %660 : vector<16x32xf32>
      %696 = arith.addf %694, %695 : vector<16x32xf32>
      %697 = arith.addf %640, %689 : vector<16x32xf32>
      %698 = arith.mulf %690, %696 : vector<16x32xf32>
      %699 = arith.addf %697, %698 : vector<16x32xf32>
      %700 = arith.mulf %691, %650 : vector<16x32xf32>
      %701 = arith.addf %644, %700 : vector<16x32xf32>
      %702 = arith.mulf %691, %652 : vector<16x32xf32>
      %703 = arith.addf %645, %702 : vector<16x32xf32>
      %704 = arith.mulf %691, %654 : vector<16x32xf32>
      %705 = arith.addf %646, %704 : vector<16x32xf32>
      %706 = tpu.concatenate %701, %703, %705 in 1 : vector<16x32xf32>, vector<16x32xf32>, vector<16x32xf32> -> vector<16x96xf32>
      %707 = tpu.concatenate %699, %706 in 1 : vector<16x32xf32>, vector<16x96xf32> -> vector<16x128xf32>
      %c0_250 = arith.constant 0 : index
      %c0_251 = arith.constant 0 : index
      %708 = vector.load %arg19[%c0_250, %c0_251] : memref<16x128xf32, #tpu.memory_space<vmem>>, vector<16x128xf32>
      tpu.vector_store %arg19[%c0_250, %c0_251], %707 {strides = array<i32>} : memref<16x128xf32, #tpu.memory_space<vmem>>, vector<16x128xf32>,
    } else {
    }
    return
  }
  func.func @transform_0(%arg0: i32, %arg1: memref<64xi32, #tpu.memory_space<smem>>, %arg2: memref<64xi32, #tpu.memory_space<smem>>) -> (i32, i32) {
    %c0_i32 = arith.constant 0 : i32
    %c0_i32_0 = arith.constant 0 : i32
    %c0_i32_1 = arith.constant 0 : i32
    return %c0_i32, %c0_i32_0 : i32, i32
  }
  func.func @transform_1(%arg0: i32, %arg1: memref<64xi32, #tpu.memory_space<smem>>, %arg2: memref<64xi32, #tpu.memory_space<smem>>) -> (i32, i32) {
    %c0_i32 = arith.constant 0 : i32
    %c0_i32_0 = arith.constant 0 : i32
    %c0_i32_1 = arith.constant 0 : i32
    return %c0_i32, %c0_i32_0 : i32, i32
  }
  func.func @transform_2(%arg0: i32, %arg1: memref<64xi32, #tpu.memory_space<smem>>, %arg2: memref<64xi32, #tpu.memory_space<smem>>) -> (i32, i32) {
    %c0_i32 = arith.constant 0 : i32
    %c0_i32_0 = arith.constant 0 : i32
    return %arg0, %c0_i32 : i32, i32
  }
  func.func @transform_3(%arg0: i32, %arg1: memref<64xi32, #tpu.memory_space<smem>>, %arg2: memref<64xi32, #tpu.memory_space<smem>>) -> (i32, i32) {
    %c0_i32 = arith.constant 0 : i32
    %c0_i32_0 = arith.constant 0 : i32
    %c0_i32_1 = arith.constant 0 : i32
    return %c0_i32, %c0_i32_0 : i32, i32
  }
  func.func @transform_4(%arg0: i32, %arg1: memref<64xi32, #tpu.memory_space<smem>>, %arg2: memref<64xi32, #tpu.memory_space<smem>>) -> (i32, i32) {
    %c0_i32 = arith.constant 0 : i32
    %c0_i32_0 = arith.constant 0 : i32
    %c0_i32_1 = arith.constant 0 : i32
    return %c0_i32, %c0_i32_0 : i32, i32
  }
  func.func @transform_5(%arg0: i32, %arg1: memref<64xi32, #tpu.memory_space<smem>>, %arg2: memref<64xi32, #tpu.memory_space<smem>>) -> (i32, i32) {
    %c0_i32 = arith.constant 0 : i32
    %c0_i32_0 = arith.constant 0 : i32
    %c0_i32_1 = arith.constant 0 : i32
    return %c0_i32, %c0_i32_0 : i32, i32
  }
  func.func @transform_6(%arg0: i32, %arg1: memref<64xi32, #tpu.memory_space<smem>>, %arg2: memref<64xi32, #tpu.memory_space<smem>>) -> (i32, i32) {
    %c0_i32 = arith.constant 0 : i32
    %c0_i32_0 = arith.constant 0 : i32
    %c0_i32_1 = arith.constant 0 : i32
    return %c0_i32, %c0_i32_0 : i32, i32
  }
  func.func @transform_7(%arg0: i32, %arg1: memref<64xi32, #tpu.memory_space<smem>>, %arg2: memref<64xi32, #tpu.memory_space<smem>>) -> (i32, i32) {
    %c0_i32 = arith.constant 0 : i32
    %c0_i32_0 = arith.constant 0 : i32
    %c0_i32_1 = arith.constant 0 : i32
    return %c0_i32, %c0_i32_0 : i32, i32
  }
  func.func @transform_8(%arg0: i32, %arg1: memref<64xi32, #tpu.memory_space<smem>>, %arg2: memref<64xi32, #tpu.memory_space<smem>>) -> (i32, i32) {
    %c0_i32 = arith.constant 0 : i32
    %c0_i32_0 = arith.constant 0 : i32
    %c0_i32_1 = arith.constant 0 : i32
    return %c0_i32, %c0_i32_0 : i32, i32
  }
  func.func @transform_9(%arg0: i32, %arg1: memref<64xi32, #tpu.memory_space<smem>>, %arg2: memref<64xi32, #tpu.memory_space<smem>>) -> (i32, i32) {
    %c0_i32 = arith.constant 0 : i32
    %c0_i32_0 = arith.constant 0 : i32
    %c0_i32_1 = arith.constant 0 : i32
    return %c0_i32, %c0_i32_0 : i32, i32
  }
  func.func @transform_10(%arg0: i32, %arg1: memref<64xi32, #tpu.memory_space<smem>>, %arg2: memref<64xi32, #tpu.memory_space<smem>>) -> (i32, i32) {
    %c0_i32 = arith.constant 0 : i32
    %c0_i32_0 = arith.constant 0 : i32
    %c0_i32_1 = arith.constant 0 : i32
    return %c0_i32, %c0_i32_0 : i32, i32
  }
  func.func @transform_11(%arg0: i32, %arg1: memref<64xi32, #tpu.memory_space<smem>>, %arg2: memref<64xi32, #tpu.memory_space<smem>>) -> (i32, i32) {
    %c0_i32 = arith.constant 0 : i32
    %c0_i32_0 = arith.constant 0 : i32
    %c0_i32_1 = arith.constant 0 : i32
    return %c0_i32, %c0_i32_0 : i32, i32
  }
  func.func @transform_12(%arg0: i32, %arg1: memref<64xi32, #tpu.memory_space<smem>>, %arg2: memref<64xi32, #tpu.memory_space<smem>>) -> (i32, i32) {
    %c0_i32 = arith.constant 0 : i32
    %c0_i32_0 = arith.constant 0 : i32
    %c0_i32_1 = arith.constant 0 : i32
    return %c0_i32, %c0_i32_0 : i32, i32
  }
  func.func @transform_13(%arg0: i32, %arg1: memref<64xi32, #tpu.memory_space<smem>>, %arg2: memref<64xi32, #tpu.memory_space<smem>>) -> (i32, i32) {
    %c0_i32 = arith.constant 0 : i32
    %c0_i32_0 = arith.constant 0 : i32
    %c0_i32_1 = arith.constant 0 : i32
    return %c0_i32, %c0_i32_0 : i32, i32
  }
  func.func @transform_14(%arg0: i32, %arg1: memref<64xi32, #tpu.memory_space<smem>>, %arg2: memref<64xi32, #tpu.memory_space<smem>>) -> (i32, i32) {
    %c0_i32 = arith.constant 0 : i32
    %c0_i32_0 = arith.constant 0 : i32
    %c0_i32_1 = arith.constant 0 : i32
    return %c0_i32, %c0_i32_0 : i32, i32
  }
  func.func @transform_15(%arg0: i32, %arg1: memref<64xi32, #tpu.memory_space<smem>>, %arg2: memref<64xi32, #tpu.memory_space<smem>>) -> (i32, i32) {
    %c0_i32 = arith.constant 0 : i32
    %c0_i32_0 = arith.constant 0 : i32
    %c0_i32_1 = arith.constant 0 : i32
    return %c0_i32, %c0_i32_0 : i32, i32
  }
  func.func @transform_16(%arg0: i32, %arg1: memref<64xi32, #tpu.memory_space<smem>>, %arg2: memref<64xi32, #tpu.memory_space<smem>>) -> (i32, i32) {
    %c0_i32 = arith.constant 0 : i32
    %c0_i32_0 = arith.constant 0 : i32
    %c0_i32_1 = arith.constant 0 : i32
    return %c0_i32, %c0_i32_0 : i32, i32
  }
}

</mosaic_0001>

<llo_original>
// kernel: tpu_custom_call.1
$region0: #{tpu_custom_call.1}
  #allocation0 [shape = 'u32[]', space=smem, size = 0x4, offset = 0x4, fixed_abs, tag = 'smem constant byte address 0x4 - core index']
  #allocation1 [shape = 'u32[72,128]{1,0:T(1,128)}', space=vmem, size = 0x9000, scoped, tag = 'internal scratch']
  #allocation2 [shape = 'f32[16,224]{1,0:T(8,128)}', space=vmem, size = 0x4000, scoped, tag = 'scratch operand']
  #allocation3 [shape = 'f32[16,128]{1,0:T(8,128)}', space=vmem, size = 0x2000, scoped, tag = 'scratch operand']
  #allocation4 [shape = 'f32[32,224]{1,0:T(8,128)}', space=vmem, size = 0x8000, scoped, tag = 'scratch operand']
  #allocation5 [shape = 'f32[32,128]{1,0:T(8,128)}', space=vmem, size = 0x4000, scoped, tag = 'scratch operand']
  #allocation6 [shape = 's32[1]{0}', space=sflag, size = 0x4, scoped, tag = 'scoped memory for tpu_custom_call.1']
  #allocation7 [shape = 'u8[512]{0}', space=smem, size = 0x200, scoped, tag = 'prefetched SMEM operand 0']
  #allocation8 [shape = 'u8[512]{0}', space=smem, size = 0x200, scoped, tag = 'prefetched SMEM operand 1']
  %s0 = inlined_call_operand.hbm [shape: s32[64], index: 0, kind: input, shape index: {}]
  %s1 = inlined_call_operand.hbm [shape: s32[64], index: 1, kind: input, shape index: {}]
  %s2 = inlined_call_operand.vmem [shape: f32[16,32], index: 2, kind: input, shape index: {}]
  %s3 = inlined_call_operand.vmem [shape: f32[16,96], index: 3, kind: input, shape index: {}]
  %s4 = inlined_call_operand.vmem [shape: f32[64,4], index: 4, kind: input, shape index: {}]
  %s5 = inlined_call_operand.hbm [shape: bf16[16,96], index: 5, kind: input, shape index: {}]
  %s6 = inlined_call_operand.hbm [shape: f32[1,96], index: 6, kind: input, shape index: {}]
  %s7 = inlined_call_operand.vmem [shape: bf16[32,32], index: 7, kind: input, shape index: {}]
  %s8 = inlined_call_operand.hbm [shape: f32[1,32], index: 8, kind: input, shape index: {}]
  %s9 = inlined_call_operand.vmem [shape: bf16[32,96], index: 9, kind: input, shape index: {}]
  %s10 = inlined_call_operand.hbm [shape: f32[1,96], index: 10, kind: input, shape index: {}]
  %s11 = inlined_call_operand.hbm [shape: bf16[32,32], index: 11, kind: input, shape index: {}]
  %s12 = inlined_call_operand.hbm [shape: bf16[32,32], index: 12, kind: input, shape index: {}]
  %s13 = inlined_call_operand.vmem [shape: bf16[32,32], index: 13, kind: input, shape index: {}]
  %s14 = inlined_call_operand.hbm [shape: bf16[32,32], index: 14, kind: input, shape index: {}]
  %s15 = inlined_call_operand.vmem [shape: f32[1,32], index: 15, kind: input, shape index: {}]
  %s16 = inlined_call_operand.hbm [shape: bf16[32,96], index: 16, kind: input, shape index: {}]
  %s17 = inlined_call_operand.vmem [shape: f32[1,96], index: 17, kind: input, shape index: {}]
  %s18 = inlined_call_operand.hbm [shape: f32[16,128], index: 18, kind: output, shape index: {}]
  %s19 = sld [smem:[#allocation0]]
  $region137: #{tpu_custom_call.1} parent=0
    _
  %s21 = ssub.s32 1, %s19
  %s22 = scalar_select 0, %s21, %s19
  %s24 = sshll.u32 %s0, 4
  %s25 = int_to_ptr.hbm [resolvable:$true] %s24
  %27 = dma.hbm_to_smem %s25, 16, [#allocation7], [#allocation6]
  %s29 = sshll.u32 %s1, 4
  %s30 = int_to_ptr.hbm [resolvable:$true] %s29
  %32 = dma.hbm_to_smem %s30, 16, [#allocation8], [#allocation6]
  %34 = dma.done [#allocation6], 32
  %35 = sfence
  $region1: #{tpu_custom_call.1} parent=0
    #allocation9 [shape = 'u8[4096]{0}', space=vmem, size = 0x1000, scoped, tag = 'input window, operand 5, single buffered']
    #allocation10 [shape = 's32[2]{0}', space=sflag, size = 0x8, scoped, tag = 'scoped memory for tpu_custom_call.1']
    #allocation11 [shape = 's32[2]{0}', space=sflag, size = 0x8, scoped, tag = 'scoped memory for tpu_custom_call.1']
    #allocation12 [shape = 'u8[512]{0}', space=vmem, size = 0x400, scoped, tag = 'input window, operand 6, single buffered']
    #allocation13 [shape = 's32[1]{0}', space=sflag, size = 0x4, scoped, tag = 'scoped memory for tpu_custom_call.1']
    #allocation14 [shape = 'u8[512]{0}', space=vmem, size = 0x400, scoped, tag = 'input window, operand 8, single buffered']
    #allocation15 [shape = 'u8[512]{0}', space=vmem, size = 0x400, scoped, tag = 'input window, operand 10, single buffered']
    #allocation16 [shape = 's32[1]{0}', space=sflag, size = 0x4, scoped, tag = 'scoped memory for tpu_custom_call.1']
    #allocation17 [shape = 'u8[8192]{0}', space=vmem, size = 0x2000, scoped, tag = 'input window, operand 11, single buffered']
    #allocation18 [shape = 'u8[8192]{0}', space=vmem, size = 0x2000, scoped, tag = 'input window, operand 12, single buffered']
    #allocation19 [shape = 's32[1]{0}', space=sflag, size = 0x4, scoped, tag = 'scoped memory for tpu_custom_call.1']
    #allocation20 [shape = 'u8[8192]{0}', space=vmem, size = 0x2000, scoped, tag = 'input window, operand 14, single buffered']
    #allocation21 [shape = 'u8[8192]{0}', space=vmem, size = 0x2000, scoped, tag = 'input window, operand 16, single buffered']
    #allocation22 [shape = 's32[1]{0}', space=sflag, size = 0x4, scoped, tag = 'scoped memory for tpu_custom_call.1']
    #allocation23 [shape = 'u8[8192]{0}', space=vmem, size = 0x2000, scoped, tag = 'output window, operand 0, single buffered']
    %36 = vsyncpa [#allocation10], 0
    %37 = vsyncpa [#allocation13], 0
    %38 = vsyncpa [#allocation16], 0
    %39 = vsyncpa [#allocation19], 0
    %40 = vsyncpa [#allocation22], 0
    %41 = vsyncpa [#allocation11], 0
    loop: start=0, step=1, limit=4
    $region2: #{tpu_custom_call.1} parent=1 // loop_pre_header
      _
    $region3: #{tpu_custom_call.1} parent=1 // loop_header
      %s43 = sphi 0, %s47
      %p44 = scmp.ge.s32.totalorder %s43, 4
      %s51 = sphi 0, %s51
      %s53 = sphi 0, %s51
      %s54 = sphi 0, %s53
      %s68 = sphi 0, %s54
      %s72 = sphi 0, %s72
      %s74 = sphi 0, %s72
      %s75 = sphi 0, %s74
      %s89 = sphi 0, %s75
      %s95 = sphi 0, %s97
      %s98 = sphi 0, %s95
      %s99 = sphi 0, %s98
      %s115 = sphi 0, %s99
      %s119 = sphi 0, %s119
      %s121 = sphi 0, %s119
      %s122 = sphi 0, %s121
      %s136 = sphi 0, %s122
      %s140 = sphi 0, %s140
      %s142 = sphi 0, %s140
      %s143 = sphi 0, %s142
      %s157 = sphi 0, %s143
      %s161 = sphi 0, %s161
      %s163 = sphi 0, %s161
      %s164 = sphi 0, %s163
      %s178 = sphi 0, %s164
      %s182 = sphi 0, %s182
      %s184 = sphi 0, %s182
      %s185 = sphi 0, %s184
      %s199 = sphi 0, %s185
      %s203 = sphi 0, %s203
      %s205 = sphi 0, %s203
      %s206 = sphi 0, %s205
      %s220 = sphi 0, %s206
      %s224 = sphi 0, %s224
      %s226 = sphi 0, %s224
      %s227 = sphi 0, %s226
      %s241 = sphi 0, %s227
      %s245 = sphi 0, %s245
      %s247 = sphi 0, %s245
      %s248 = sphi 0, %s247
      %s262 = sphi 0, %s248
      %s266 = sphi 0, %s266
      %s268 = sphi 0, %s266
      %s269 = sphi 0, %s268
      %s283 = sphi 0, %s269
      %s287 = sphi 0, %s287
      %s289 = sphi 0, %s287
      %s290 = sphi 0, %s289
      %s304 = sphi 0, %s290
      %s308 = sphi 0, %s308
      %s310 = sphi 0, %s308
      %s311 = sphi 0, %s310
      %s325 = sphi 0, %s311
      %s329 = sphi 0, %s329
      %s331 = sphi 0, %s329
      %s332 = sphi 0, %s331
      %s346 = sphi 0, %s332
      %s350 = sphi 0, %s350
      %s352 = sphi 0, %s350
      %s353 = sphi 0, %s352
      %s367 = sphi 0, %s353
      %s371 = sphi 0, %s371
      %s373 = sphi 0, %s371
      %s374 = sphi 0, %s373
      %s388 = sphi 0, %s374
      %s392 = sphi 0, %s392
      %s394 = sphi 0, %s392
      %s395 = sphi 0, %s394
      %s409 = sphi 0, %s395
    $region4: #{tpu_custom_call.1} parent=1 // loop_header_branch
      %46 = sbr.rel (%p44) target = $region8
    $region5: #{tpu_custom_call.1} parent=1 // loop_body
      %s48 = ssub.s32 %s43, 1
      %s49 = ssub.s32 %s43, 2
      %s50 = sadd.s32 %s43, 1
      %s52 = sadd.s32 %s51, 1
      %p55 = scmp.eq.s32.totalorder %s43, 1
      %p56 = scmp.ne.s32.totalorder %s51, %s53
      %p57 = scmp.eq.s32.totalorder %s43, 0
      %p58 = por %p56, %p57
      %p59 = scmp.ne.s32.totalorder %s51, %s53
      %p60 = scmp.eq.s32.totalorder %s48, 1
      %p61 = por %p59, %p60
      %p62 = scmp.ne.s32.totalorder %s53, %s54
      %p63 = scmp.eq.s32.totalorder %s48, 0
      %p64 = por %p62, %p63
      %p65 = scmp.ne.s32.totalorder %s53, %s54
      %p66 = scmp.eq.s32.totalorder %s49, 1
      %p67 = por %p65, %p66
      %p69 = scmp.ne.s32.totalorder %s54, %s68
      %p70 = scmp.eq.s32.totalorder %s49, 0
      %p71 = por %p69, %p70
      %s73 = sadd.s32 %s72, 1
      %p76 = scmp.eq.s32.totalorder %s43, 1
      %p77 = scmp.ne.s32.totalorder %s72, %s74
      %p78 = scmp.eq.s32.totalorder %s43, 0
      %p79 = por %p77, %p78
      %p80 = scmp.ne.s32.totalorder %s72, %s74
      %p81 = scmp.eq.s32.totalorder %s48, 1
      %p82 = por %p80, %p81
      %p83 = scmp.ne.s32.totalorder %s74, %s75
      %p84 = scmp.eq.s32.totalorder %s48, 0
      %p85 = por %p83, %p84
      %p86 = scmp.ne.s32.totalorder %s74, %s75
      %p87 = scmp.eq.s32.totalorder %s49, 1
      %p88 = por %p86, %p87
      %p90 = scmp.ne.s32.totalorder %s75, %s89
      %p91 = scmp.eq.s32.totalorder %s49, 0
      %p92 = por %p90, %p91
      %s93 = ssub.s32 %s43, %s50
      %p94 = scmp.eq.s32.totalorder %s93, 0
      %s96 = sadd.s32 %s95, 1
      %s97 = scalar_select %p94, %s95, %s96
      %p100 = pneg %p94
      %p101 = scmp.eq.s32.totalorder %s43, 1
      %p102 = por %p100, %p101
      %p103 = scmp.ne.s32.totalorder %s95, %s98
      %p104 = scmp.eq.s32.totalorder %s43, 0
      %p105 = por %p103, %p104
      %p106 = scmp.ne.s32.totalorder %s95, %s98
      %p107 = scmp.eq.s32.totalorder %s48, 1
      %p108 = por %p106, %p107
      %p109 = scmp.ne.s32.totalorder %s98, %s99
      %p110 = scmp.eq.s32.totalorder %s48, 0
      %p111 = por %p109, %p110
      %p112 = scmp.ne.s32.totalorder %s98, %s99
      %p113 = scmp.eq.s32.totalorder %s49, 1
      %p114 = por %p112, %p113
      %p116 = scmp.ne.s32.totalorder %s99, %s115
      %p117 = scmp.eq.s32.totalorder %s49, 0
      %p118 = por %p116, %p117
      %s120 = sadd.s32 %s119, 1
      %p123 = scmp.eq.s32.totalorder %s43, 1
      %p124 = scmp.ne.s32.totalorder %s119, %s121
      %p125 = scmp.eq.s32.totalorder %s43, 0
      %p126 = por %p124, %p125
      %p127 = scmp.ne.s32.totalorder %s119, %s121
      %p128 = scmp.eq.s32.totalorder %s48, 1
      %p129 = por %p127, %p128
      %p130 = scmp.ne.s32.totalorder %s121, %s122
      %p131 = scmp.eq.s32.totalorder %s48, 0
      %p132 = por %p130, %p131
      %p133 = scmp.ne.s32.totalorder %s121, %s122
      %p134 = scmp.eq.s32.totalorder %s49, 1
      %p135 = por %p133, %p134
      %p137 = scmp.ne.s32.totalorder %s122, %s136
      %p138 = scmp.eq.s32.totalorder %s49, 0
      %p139 = por %p137, %p138
      %s141 = sadd.s32 %s140, 1
      %p144 = scmp.eq.s32.totalorder %s43, 1
      %p145 = scmp.ne.s32.totalorder %s140, %s142
      %p146 = scmp.eq.s32.totalorder %s43, 0
      %p147 = por %p145, %p146
      %p148 = scmp.ne.s32.totalorder %s140, %s142
      %p149 = scmp.eq.s32.totalorder %s48, 1
      %p150 = por %p148, %p149
      %p151 = scmp.ne.s32.totalorder %s142, %s143
      %p152 = scmp.eq.s32.totalorder %s48, 0
      %p153 = por %p151, %p152
      %p154 = scmp.ne.s32.totalorder %s142, %s143
      %p155 = scmp.eq.s32.totalorder %s49, 1
      %p156 = por %p154, %p155
      %p158 = scmp.ne.s32.totalorder %s143, %s157
      %p159 = scmp.eq.s32.totalorder %s49, 0
      %p160 = por %p158, %p159
      %s162 = sadd.s32 %s161, 1
      %p165 = scmp.eq.s32.totalorder %s43, 1
      %p166 = scmp.ne.s32.totalorder %s161, %s163
      %p167 = scmp.eq.s32.totalorder %s43, 0
      %p168 = por %p166, %p167
      %p169 = scmp.ne.s32.totalorder %s161, %s163
      %p170 = scmp.eq.s32.totalorder %s48, 1
      %p171 = por %p169, %p170
      %p172 = scmp.ne.s32.totalorder %s163, %s164
      %p173 = scmp.eq.s32.totalorder %s48, 0
      %p174 = por %p172, %p173
      %p175 = scmp.ne.s32.totalorder %s163, %s164
      %p176 = scmp.eq.s32.totalorder %s49, 1
      %p177 = por %p175, %p176
      %p179 = scmp.ne.s32.totalorder %s164, %s178
      %p180 = scmp.eq.s32.totalorder %s49, 0
      %p181 = por %p179, %p180
      %s183 = sadd.s32 %s182, 1
      %p186 = scmp.eq.s32.totalorder %s43, 1
      %p187 = scmp.ne.s32.totalorder %s182, %s184
      %p188 = scmp.eq.s32.totalorder %s43, 0
      %p189 = por %p187, %p188
      %p190 = scmp.ne.s32.totalorder %s182, %s184
      %p191 = scmp.eq.s32.totalorder %s48, 1
      %p192 = por %p190, %p191
      %p193 = scmp.ne.s32.totalorder %s184, %s185
      %p194 = scmp.eq.s32.totalorder %s48, 0
      %p195 = por %p193, %p194
      %p196 = scmp.ne.s32.totalorder %s184, %s185
      %p197 = scmp.eq.s32.totalorder %s49, 1
      %p198 = por %p196, %p197
      %p200 = scmp.ne.s32.totalorder %s185, %s199
      %p201 = scmp.eq.s32.totalorder %s49, 0
      %p202 = por %p200, %p201
      %s204 = sadd.s32 %s203, 1
      %p207 = scmp.eq.s32.totalorder %s43, 1
      %p208 = scmp.ne.s32.totalorder %s203, %s205
      %p209 = scmp.eq.s32.totalorder %s43, 0
      %p210 = por %p208, %p209
      %p211 = scmp.ne.s32.totalorder %s203, %s205
      %p212 = scmp.eq.s32.totalorder %s48, 1
      %p213 = por %p211, %p212
      %p214 = scmp.ne.s32.totalorder %s205, %s206
      %p215 = scmp.eq.s32.totalorder %s48, 0
      %p216 = por %p214, %p215
      %p217 = scmp.ne.s32.totalorder %s205, %s206
      %p218 = scmp.eq.s32.totalorder %s49, 1
      %p219 = por %p217, %p218
      %p221 = scmp.ne.s32.totalorder %s206, %s220
      %p222 = scmp.eq.s32.totalorder %s49, 0
      %p223 = por %p221, %p222
      %s225 = sadd.s32 %s224, 1
      %p228 = scmp.eq.s32.totalorder %s43, 1
      %p229 = scmp.ne.s32.totalorder %s224, %s226
      %p230 = scmp.eq.s32.totalorder %s43, 0
      %p231 = por %p229, %p230
      %p232 = scmp.ne.s32.totalorder %s224, %s226
      %p233 = scmp.eq.s32.totalorder %s48, 1
      %p234 = por %p232, %p233
      %p235 = scmp.ne.s32.totalorder %s226, %s227
      %p236 = scmp.eq.s32.totalorder %s48, 0
      %p237 = por %p235, %p236
      %p238 = scmp.ne.s32.totalorder %s226, %s227
      %p239 = scmp.eq.s32.totalorder %s49, 1
      %p240 = por %p238, %p239
      %p242 = scmp.ne.s32.totalorder %s227, %s241
      %p243 = scmp.eq.s32.totalorder %s49, 0
      %p244 = por %p242, %p243
      %s246 = sadd.s32 %s245, 1
      %p249 = scmp.eq.s32.totalorder %s43, 1
      %p250 = scmp.ne.s32.totalorder %s245, %s247
      %p251 = scmp.eq.s32.totalorder %s43, 0
      %p252 = por %p250, %p251
      %p253 = scmp.ne.s32.totalorder %s245, %s247
      %p254 = scmp.eq.s32.totalorder %s48, 1
      %p255 = por %p253, %p254
      %p256 = scmp.ne.s32.totalorder %s247, %s248
      %p257 = scmp.eq.s32.totalorder %s48, 0
      %p258 = por %p256, %p257
      %p259 = scmp.ne.s32.totalorder %s247, %s248
      %p260 = scmp.eq.s32.totalorder %s49, 1
      %p261 = por %p259, %p260
      %p263 = scmp.ne.s32.totalorder %s248, %s262
      %p264 = scmp.eq.s32.totalorder %s49, 0
      %p265 = por %p263, %p264
      %s267 = sadd.s32 %s266, 1
      %p270 = scmp.eq.s32.totalorder %s43, 1
      %p271 = scmp.ne.s32.totalorder %s266, %s268
      %p272 = scmp.eq.s32.totalorder %s43, 0
      %p273 = por %p271, %p272
      %p274 = scmp.ne.s32.totalorder %s266, %s268
      %p275 = scmp.eq.s32.totalorder %s48, 1
      %p276 = por %p274, %p275
      %p277 = scmp.ne.s32.totalorder %s268, %s269
      %p278 = scmp.eq.s32.totalorder %s48, 0
      %p279 = por %p277, %p278
      %p280 = scmp.ne.s32.totalorder %s268, %s269
      %p281 = scmp.eq.s32.totalorder %s49, 1
      %p282 = por %p280, %p281
      %p284 = scmp.ne.s32.totalorder %s269, %s283
      %p285 = scmp.eq.s32.totalorder %s49, 0
      %p286 = por %p284, %p285
      %s288 = sadd.s32 %s287, 1
      %p291 = scmp.eq.s32.totalorder %s43, 1
      %p292 = scmp.ne.s32.totalorder %s287, %s289
      %p293 = scmp.eq.s32.totalorder %s43, 0
      %p294 = por %p292, %p293
      %p295 = scmp.ne.s32.totalorder %s287, %s289
      %p296 = scmp.eq.s32.totalorder %s48, 1
      %p297 = por %p295, %p296
      %p298 = scmp.ne.s32.totalorder %s289, %s290
      %p299 = scmp.eq.s32.totalorder %s48, 0
      %p300 = por %p298, %p299
      %p301 = scmp.ne.s32.totalorder %s289, %s290
      %p302 = scmp.eq.s32.totalorder %s49, 1
      %p303 = por %p301, %p302
      %p305 = scmp.ne.s32.totalorder %s290, %s304
      %p306 = scmp.eq.s32.totalorder %s49, 0
      %p307 = por %p305, %p306
      %s309 = sadd.s32 %s308, 1
      %p312 = scmp.eq.s32.totalorder %s43, 1
      %p313 = scmp.ne.s32.totalorder %s308, %s310
      %p314 = scmp.eq.s32.totalorder %s43, 0
      %p315 = por %p313, %p314
      %p316 = scmp.ne.s32.totalorder %s308, %s310
      %p317 = scmp.eq.s32.totalorder %s48, 1
      %p318 = por %p316, %p317
      %p319 = scmp.ne.s32.totalorder %s310, %s311
      %p320 = scmp.eq.s32.totalorder %s48, 0
      %p321 = por %p319, %p320
      %p322 = scmp.ne.s32.totalorder %s310, %s311
      %p323 = scmp.eq.s32.totalorder %s49, 1
      %p324 = por %p322, %p323
      %p326 = scmp.ne.s32.totalorder %s311, %s325
      %p327 = scmp.eq.s32.totalorder %s49, 0
      %p328 = por %p326, %p327
      %s330 = sadd.s32 %s329, 1
      %p333 = scmp.eq.s32.totalorder %s43, 1
      %p334 = scmp.ne.s32.totalorder %s329, %s331
      %p335 = scmp.eq.s32.totalorder %s43, 0
      %p336 = por %p334, %p335
      %p337 = scmp.ne.s32.totalorder %s329, %s331
      %p338 = scmp.eq.s32.totalorder %s48, 1
      %p339 = por %p337, %p338
      %p340 = scmp.ne.s32.totalorder %s331, %s332
      %p341 = scmp.eq.s32.totalorder %s48, 0
      %p342 = por %p340, %p341
      %p343 = scmp.ne.s32.totalorder %s331, %s332
      %p344 = scmp.eq.s32.totalorder %s49, 1
      %p345 = por %p343, %p344
      %p347 = scmp.ne.s32.totalorder %s332, %s346
      %p348 = scmp.eq.s32.totalorder %s49, 0
      %p349 = por %p347, %p348
      %s351 = sadd.s32 %s350, 1
      %p354 = scmp.eq.s32.totalorder %s43, 1
      %p355 = scmp.ne.s32.totalorder %s350, %s352
      %p356 = scmp.eq.s32.totalorder %s43, 0
      %p357 = por %p355, %p356
      %p358 = scmp.ne.s32.totalorder %s350, %s352
      %p359 = scmp.eq.s32.totalorder %s48, 1
      %p360 = por %p358, %p359
      %p361 = scmp.ne.s32.totalorder %s352, %s353
      %p362 = scmp.eq.s32.totalorder %s48, 0
      %p363 = por %p361, %p362
      %p364 = scmp.ne.s32.totalorder %s352, %s353
      %p365 = scmp.eq.s32.totalorder %s49, 1
      %p366 = por %p364, %p365
      %p368 = scmp.ne.s32.totalorder %s353, %s367
      %p369 = scmp.eq.s32.totalorder %s49, 0
      %p370 = por %p368, %p369
      %s372 = sadd.s32 %s371, 1
      %p375 = scmp.eq.s32.totalorder %s43, 1
      %p376 = scmp.ne.s32.totalorder %s371, %s373
      %p377 = scmp.eq.s32.totalorder %s43, 0
      %p378 = por %p376, %p377
      %p379 = scmp.ne.s32.totalorder %s371, %s373
      %p380 = scmp.eq.s32.totalorder %s48, 1
      %p381 = por %p379, %p380
      %p382 = scmp.ne.s32.totalorder %s373, %s374
      %p383 = scmp.eq.s32.totalorder %s48, 0
      %p384 = por %p382, %p383
      %p385 = scmp.ne.s32.totalorder %s373, %s374
      %p386 = scmp.eq.s32.totalorder %s49, 1
      %p387 = por %p385, %p386
      %p389 = scmp.ne.s32.totalorder %s374, %s388
      %p390 = scmp.eq.s32.totalorder %s49, 0
      %p391 = por %p389, %p390
      %s393 = sadd.s32 %s392, 1
      %p396 = scmp.eq.s32.totalorder %s43, 1
      %p397 = scmp.ne.s32.totalorder %s392, %s394
      %p398 = scmp.eq.s32.totalorder %s43, 0
      %p399 = por %p397, %p398
      %p400 = scmp.ne.s32.totalorder %s392, %s394
      %p401 = scmp.eq.s32.totalorder %s48, 1
      %p402 = por %p400, %p401
      %p403 = scmp.ne.s32.totalorder %s394, %s395
      %p404 = scmp.eq.s32.totalorder %s48, 0
      %p405 = por %p403, %p404
      %p406 = scmp.ne.s32.totalorder %s394, %s395
      %p407 = scmp.eq.s32.totalorder %s49, 1
      %p408 = por %p406, %p407
      %p410 = scmp.ne.s32.totalorder %s395, %s409
      %p411 = scmp.eq.s32.totalorder %s49, 0
      %p412 = por %p410, %p411
      %p413 = scmp.le.s32.totalorder 1, %s43
      %p414 = scmp.lt.s32.totalorder %s43, 3
      %p415 = pnand %p413, %p414
      %p416 = pneg %p415
      // Predicated region
      $region9: #{tpu_custom_call.1} parent=5 // pred_check
        _
      $region10: #{tpu_custom_call.1} parent=5 // pred_check_branch
        %418 = sbr.rel (%p415) target = $region12
      $region11: #{tpu_custom_call.1} parent=5 // pred_region
        %s419 = ssub.s32 %s43, 1
        // Predicated region
        $region13: #{tpu_custom_call.1} parent=11 // pred_check
          %p420 = pneg %p64
        $region14: #{tpu_custom_call.1} parent=11 // pred_check_branch
          %422 = sbr.rel (%p420) target = $region16
        $region15: #{tpu_custom_call.1} parent=11 // pred_region
          _
        $region16: #{tpu_custom_call.1} parent=11 // pred_fallthru
          _
        // Predicated region
        $region17: #{tpu_custom_call.1} parent=11 // pred_check
          %p423 = pneg %p85
        $region18: #{tpu_custom_call.1} parent=11 // pred_check_branch
          %425 = sbr.rel (%p423) target = $region20
        $region19: #{tpu_custom_call.1} parent=11 // pred_region
          _
        $region20: #{tpu_custom_call.1} parent=11 // pred_fallthru
          _
        // Predicated region
        $region21: #{tpu_custom_call.1} parent=11 // pred_check
          %p426 = pneg %p132
        $region22: #{tpu_custom_call.1} parent=11 // pred_check_branch
          %428 = sbr.rel (%p426) target = $region24
        $region23: #{tpu_custom_call.1} parent=11 // pred_region
          %430 = vsyncadd [#allocation10], 0
          %s431 = sshll.u32 %s5, 4
          %s432 = int_to_ptr.hbm [resolvable:$true] %s431
          %s433 = sshll.u32 [#allocation9], 4
          %s434 = int_to_ptr.vmem [resolvable:$true] %s433
          %439 = dma.hbm_to_vmem [thread:$0]  %s432, 128, %s434, [#allocation10], 64, 64, 4
        $region24: #{tpu_custom_call.1} parent=11 // pred_fallthru
          _
        // Predicated region
        $region25: #{tpu_custom_call.1} parent=11 // pred_check
          %p440 = pneg %p153
        $region26: #{tpu_custom_call.1} parent=11 // pred_check_branch
          %442 = sbr.rel (%p440) target = $region28
        $region27: #{tpu_custom_call.1} parent=11 // pred_region
          %444 = vsyncadd [#allocation13], 0
          %s446 = sshll.u32 %s6, 4
          %s447 = int_to_ptr.hbm [resolvable:$true] %s446
          %s448 = sshll.u32 [#allocation12], 4
          %s449 = int_to_ptr.vmem [resolvable:$true] %s448
          %451 = dma.hbm_to_vmem [thread:$0]  %s447, 16, %s449, [#allocation13]
        $region28: #{tpu_custom_call.1} parent=11 // pred_fallthru
          _
        // Predicated region
        $region29: #{tpu_custom_call.1} parent=11 // pred_check
          %p452 = pneg %p174
        $region30: #{tpu_custom_call.1} parent=11 // pred_check_branch
          %454 = sbr.rel (%p452) target = $region32
        $region31: #{tpu_custom_call.1} parent=11 // pred_region
          _
        $region32: #{tpu_custom_call.1} parent=11 // pred_fallthru
          _
        // Predicated region
        $region33: #{tpu_custom_call.1} parent=11 // pred_check
          %p455 = pneg %p195
        $region34: #{tpu_custom_call.1} parent=11 // pred_check_branch
          %457 = sbr.rel (%p455) target = $region36
        $region35: #{tpu_custom_call.1} parent=11 // pred_region
          %459 = vsyncadd [#allocation13], 0
          %s461 = sshll.u32 %s8, 4
          %s462 = int_to_ptr.hbm [resolvable:$true] %s461
          %s463 = sshll.u32 [#allocation14], 4
          %s464 = int_to_ptr.vmem [resolvable:$true] %s463
          %466 = dma.hbm_to_vmem [thread:$0]  %s462, 16, %s464, [#allocation13]
        $region36: #{tpu_custom_call.1} parent=11 // pred_fallthru
          _
        // Predicated region
        $region37: #{tpu_custom_call.1} parent=11 // pred_check
          %p467 = pneg %p216
        $region38: #{tpu_custom_call.1} parent=11 // pred_check_branch
          %469 = sbr.rel (%p467) target = $region40
        $region39: #{tpu_custom_call.1} parent=11 // pred_region
          _
        $region40: #{tpu_custom_call.1} parent=11 // pred_fallthru
          _
        // Predicated region
        $region41: #{tpu_custom_call.1} parent=11 // pred_check
          %p470 = pneg %p237
        $region42: #{tpu_custom_call.1} parent=11 // pred_check_branch
          %472 = sbr.rel (%p470) target = $region44
        $region43: #{tpu_custom_call.1} parent=11 // pred_region
          %474 = vsyncadd [#allocation16], 0
          %s476 = sshll.u32 %s10, 4
          %s477 = int_to_ptr.hbm [resolvable:$true] %s476
          %s478 = sshll.u32 [#allocation15], 4
          %s479 = int_to_ptr.vmem [resolvable:$true] %s478
          %481 = dma.hbm_to_vmem [thread:$0]  %s477, 16, %s479, [#allocation16]
        $region44: #{tpu_custom_call.1} parent=11 // pred_fallthru
          _
        // Predicated region
        $region45: #{tpu_custom_call.1} parent=11 // pred_check
          %p482 = pneg %p258
        $region46: #{tpu_custom_call.1} parent=11 // pred_check_branch
          %484 = sbr.rel (%p482) target = $region48
        $region47: #{tpu_custom_call.1} parent=11 // pred_region
          %486 = vsyncadd [#allocation16], 0
          %s487 = sshll.u32 %s11, 4
          %s488 = int_to_ptr.hbm [resolvable:$true] %s487
          %s489 = sshll.u32 [#allocation17], 4
          %s490 = int_to_ptr.vmem [resolvable:$true] %s489
          %495 = dma.hbm_to_vmem [thread:$0]  %s488, 256, %s490, [#allocation16], 64, 64, 4
        $region48: #{tpu_custom_call.1} parent=11 // pred_fallthru
          _
        // Predicated region
        $region49: #{tpu_custom_call.1} parent=11 // pred_check
          %p496 = pneg %p279
        $region50: #{tpu_custom_call.1} parent=11 // pred_check_branch
          %498 = sbr.rel (%p496) target = $region52
        $region51: #{tpu_custom_call.1} parent=11 // pred_region
          %500 = vsyncadd [#allocation19], 0
          %s501 = sshll.u32 %s12, 4
          %s502 = int_to_ptr.hbm [resolvable:$true] %s501
          %s503 = sshll.u32 [#allocation18], 4
          %s504 = int_to_ptr.vmem [resolvable:$true] %s503
          %509 = dma.hbm_to_vmem [thread:$0]  %s502, 256, %s504, [#allocation19], 64, 64, 4
        $region52: #{tpu_custom_call.1} parent=11 // pred_fallthru
          _
        // Predicated region
        $region53: #{tpu_custom_call.1} parent=11 // pred_check
          %p510 = pneg %p300
        $region54: #{tpu_custom_call.1} parent=11 // pred_check_branch
          %512 = sbr.rel (%p510) target = $region56
        $region55: #{tpu_custom_call.1} parent=11 // pred_region
          _
        $region56: #{tpu_custom_call.1} parent=11 // pred_fallthru
          _
        // Predicated region
        $region57: #{tpu_custom_call.1} parent=11 // pred_check
          %p513 = pneg %p321
        $region58: #{tpu_custom_call.1} parent=11 // pred_check_branch
          %515 = sbr.rel (%p513) target = $region60
        $region59: #{tpu_custom_call.1} parent=11 // pred_region
          %517 = vsyncadd [#allocation19], 0
          %s518 = sshll.u32 %s14, 4
          %s519 = int_to_ptr.hbm [resolvable:$true] %s518
          %s520 = sshll.u32 [#allocation20], 4
          %s521 = int_to_ptr.vmem [resolvable:$true] %s520
          %526 = dma.hbm_to_vmem [thread:$0]  %s519, 256, %s521, [#allocation19], 64, 64, 4
        $region60: #{tpu_custom_call.1} parent=11 // pred_fallthru
          _
        // Predicated region
        $region61: #{tpu_custom_call.1} parent=11 // pred_check
          %p527 = pneg %p342
        $region62: #{tpu_custom_call.1} parent=11 // pred_check_branch
          %529 = sbr.rel (%p527) target = $region64
        $region63: #{tpu_custom_call.1} parent=11 // pred_region
          _
        $region64: #{tpu_custom_call.1} parent=11 // pred_fallthru
          _
        // Predicated region
        $region65: #{tpu_custom_call.1} parent=11 // pred_check
          %p530 = pneg %p363
        $region66: #{tpu_custom_call.1} parent=11 // pred_check_branch
          %532 = sbr.rel (%p530) target = $region68
        $region67: #{tpu_custom_call.1} parent=11 // pred_region
          %534 = vsyncadd [#allocation22], 0
          %s535 = sshll.u32 %s16, 4
          %s536 = int_to_ptr.hbm [resolvable:$true] %s535
          %s537 = sshll.u32 [#allocation21], 4
          %s538 = int_to_ptr.vmem [resolvable:$true] %s537
          %543 = dma.hbm_to_vmem [thread:$0]  %s536, 256, %s538, [#allocation22], 64, 64, 4
        $region68: #{tpu_custom_call.1} parent=11 // pred_fallthru
          _
        // Predicated region
        $region69: #{tpu_custom_call.1} parent=11 // pred_check
          %p544 = pneg %p384
        $region70: #{tpu_custom_call.1} parent=11 // pred_check_branch
          %546 = sbr.rel (%p544) target = $region72
        $region71: #{tpu_custom_call.1} parent=11 // pred_region
          _
        $region72: #{tpu_custom_call.1} parent=11 // pred_fallthru
          _
      $region12: #{tpu_custom_call.1} parent=5 // pred_fallthru
        _
      %p547 = scmp.lt.s32.totalorder %s43, 2
      // Predicated region
      $region73: #{tpu_custom_call.1} parent=5 // pred_check
        %p548 = pneg %p547
      $region74: #{tpu_custom_call.1} parent=5 // pred_check_branch
        %550 = sbr.rel (%p548) target = $region76
      $region75: #{tpu_custom_call.1} parent=5 // pred_region
        // Predicated region
        $region77: #{tpu_custom_call.1} parent=75 // pred_check
          %p551 = pneg %p105
        $region78: #{tpu_custom_call.1} parent=75 // pred_check_branch
          %553 = sbr.rel (%p551) target = $region80
        $region79: #{tpu_custom_call.1} parent=75 // pred_region
          %s554 = smul.u32 4, %s43
          %p555 = scmp.lt.s32.totalorder %s554, 7
          %s556 = scalar_select %p555, %s554, 7
          %s557 = smul.addr %s556, 8
          %s558 = scalar_lea.vmem %s4, %s557
          %s559 = smul.u32 4, %s43
        $region80: #{tpu_custom_call.1} parent=75 // pred_fallthru
          _
      $region76: #{tpu_custom_call.1} parent=5 // pred_fallthru
        _
      %p560 = scmp.le.s32.totalorder 1, %s43
      %p561 = scmp.lt.s32.totalorder %s43, 3
      %p562 = pnand %p560, %p561
      %p563 = pneg %p562
      // Predicated region
      $region81: #{tpu_custom_call.1} parent=5 // pred_check
        _
      $region82: #{tpu_custom_call.1} parent=5 // pred_check_branch
        %565 = sbr.rel (%p562) target = $region84
      $region83: #{tpu_custom_call.1} parent=5 // pred_region
        %s566 = ssub.s32 %s43, 1
        // Predicated region
        $region85: #{tpu_custom_call.1} parent=83 // pred_check
          %p567 = pneg %p132
        $region86: #{tpu_custom_call.1} parent=83 // pred_check_branch
          %569 = sbr.rel (%p567) target = $region88
        $region87: #{tpu_custom_call.1} parent=83 // pred_region
          %571 = dma.done [#allocation10], 128
        $region88: #{tpu_custom_call.1} parent=83 // pred_fallthru
          _
        // Predicated region
        $region89: #{tpu_custom_call.1} parent=83 // pred_check
          %p572 = pneg %p153
        $region90: #{tpu_custom_call.1} parent=83 // pred_check_branch
          %574 = sbr.rel (%p572) target = $region92
        $region91: #{tpu_custom_call.1} parent=83 // pred_region
          %576 = dma.done [#allocation13], 16
        $region92: #{tpu_custom_call.1} parent=83 // pred_fallthru
          _
        // Predicated region
        $region93: #{tpu_custom_call.1} parent=83 // pred_check
          %p577 = pneg %p195
        $region94: #{tpu_custom_call.1} parent=83 // pred_check_branch
          %579 = sbr.rel (%p577) target = $region96
        $region95: #{tpu_custom_call.1} parent=83 // pred_region
          %581 = dma.done [#allocation13], 16
        $region96: #{tpu_custom_call.1} parent=83 // pred_fallthru
          _
        // Predicated region
        $region97: #{tpu_custom_call.1} parent=83 // pred_check
          %p582 = pneg %p237
        $region98: #{tpu_custom_call.1} parent=83 // pred_check_branch
          %584 = sbr.rel (%p582) target = $region100
        $region99: #{tpu_custom_call.1} parent=83 // pred_region
          %586 = dma.done [#allocation16], 16
        $region100: #{tpu_custom_call.1} parent=83 // pred_fallthru
          _
        // Predicated region
        $region101: #{tpu_custom_call.1} parent=83 // pred_check
          %p587 = pneg %p258
        $region102: #{tpu_custom_call.1} parent=83 // pred_check_branch
          %589 = sbr.rel (%p587) target = $region104
        $region103: #{tpu_custom_call.1} parent=83 // pred_region
          %591 = dma.done [#allocation16], 256
        $region104: #{tpu_custom_call.1} parent=83 // pred_fallthru
          _
        // Predicated region
        $region105: #{tpu_custom_call.1} parent=83 // pred_check
          %p592 = pneg %p279
        $region106: #{tpu_custom_call.1} parent=83 // pred_check_branch
          %594 = sbr.rel (%p592) target = $region108
        $region107: #{tpu_custom_call.1} parent=83 // pred_region
          %596 = dma.done [#allocation19], 256
        $region108: #{tpu_custom_call.1} parent=83 // pred_fallthru
          _
        // Predicated region
        $region109: #{tpu_custom_call.1} parent=83 // pred_check
          %p597 = pneg %p321
        $region110: #{tpu_custom_call.1} parent=83 // pred_check_branch
          %599 = sbr.rel (%p597) target = $region112
        $region111: #{tpu_custom_call.1} parent=83 // pred_region
          %601 = dma.done [#allocation19], 256
        $region112: #{tpu_custom_call.1} parent=83 // pred_fallthru
          _
        // Predicated region
        $region113: #{tpu_custom_call.1} parent=83 // pred_check
          %p602 = pneg %p363
        $region114: #{tpu_custom_call.1} parent=83 // pred_check_branch
          %604 = sbr.rel (%p602) target = $region116
        $region115: #{tpu_custom_call.1} parent=83 // pred_region
          %606 = dma.done [#allocation22], 256
        $region116: #{tpu_custom_call.1} parent=83 // pred_fallthru
          _
        %p607 = pneg %p64
        %p608 = pneg %p61
        %p609 = pneg %p85
        %p610 = pneg %p82
        %s611 = smul.u32 4, %s48
        %p612 = scmp.lt.s32.totalorder %s611, 7
        %s613 = scalar_select %p612, %s611, 7
        %s614 = smul.addr %s613, 8
        %s615 = scalar_lea.vmem %s4, %s614
        %p616 = pneg %p111
        %p617 = pneg %p108
        %p618 = pneg %p132
        %p619 = pneg %p129
        %p620 = pneg %p153
        %p621 = pneg %p150
        %p622 = pneg %p174
        %p623 = pneg %p171
        %p624 = pneg %p195
        %p625 = pneg %p192
        %p626 = pneg %p216
        %p627 = pneg %p213
        %p628 = pneg %p237
        %p629 = pneg %p234
        %p630 = pneg %p258
        %p631 = pneg %p255
        %p632 = pneg %p279
        %p633 = pneg %p276
        %p634 = pneg %p300
        %p635 = pneg %p297
        %p636 = pneg %p321
        %p637 = pneg %p318
        %p638 = pneg %p342
        %p639 = pneg %p339
        %p640 = pneg %p363
        %p641 = pneg %p360
        %p642 = pneg %p384
        %p643 = pneg %p381
        %p644 = pneg %p405
        %p645 = pneg %p402
        %s646 = smul.u32 4, %s48
        %p647 = scmp.lt.s32.totalorder %s646, 7
        %s648 = scalar_select %p647, %s646, 7
        %s649 = smul.addr %s648, 8
        %s650 = scalar_lea.vmem %s4, %s649
        %s651 = smul.u32 4, %s48
        %p653 = scmp.eq.s32.totalorder %s48, 0
        // Predicated region
        $region117: #{tpu_custom_call.1} parent=83 // pred_check
          %p654 = pneg %p653
        $region118: #{tpu_custom_call.1} parent=83 // pred_check_branch
          %656 = sbr.rel (%p654) target = $region120
        $region119: #{tpu_custom_call.1} parent=83 // pred_region
          %v657 = vld [vmem:[%s2] sm:$0xff]
          %v658 = vld [vmem:[%s2 + $0x8] sm:$0xff]
          %v659 = vld [vmem:[%s7] sm:$0xf]
          %v660 = vld [vmem:[%s7 + $0x4] sm:$0xf]
          %v661 = vld [vmem:[%s7 + $0x8] sm:$0xf]
          %v662 = vld [vmem:[%s7 + $0xc] sm:$0xf]
          %v663 = vpack.c.bf16 %v658, %v657
          %v664 = vld [vmem:[#allocation14] sm:$0x1]
          %v666 = vperm.slane %v664, 0
          %v672 = vunpack.c.l.b16 %v659
          %v673 = vunpack.c.l.b16 %v660
          %v674 = vunpack.c.l.b16 %v661
          %v675 = vunpack.c.l.b16 %v662
          %v676 = vpack.c.b16 %v673, %v672
          %v677 = vpack.c.b16 %v675, %v674
          %vm680 = vcmask 261120
          %v682 = vsel %vm680, %v663, 0
          %684 = vmatpush.bf16.msra.mxu0 0
          %685 = vmatpush.bf16.msra.mxu0 0
          %686 = vmatpush.bf16.msra.mxu0 0
          %687 = vmatpush.bf16.msra.mxu0 0
          %688 = vmatpush.bf16.msra.mxu0 0
          %689 = vmatpush.bf16.msra.mxu0 0
          %690 = vmatpush.bf16.msra.mxu0 %v677
          %691 = vmatpush.bf16.msra.mxu0 %v676
          %692 = vmatmul.bf16.gmra.mxu0 %v682
          %v693 = vpop.f32.mrf.mxu0
          %v694 = vadd.f32 %v666, %v693
          %v695 = vpop.f32.mrf.mxu0
          %v696 = vadd.f32 %v666, %v695
          %697 = vdwg.mxu0
          %v698 = vxor.u32 %v694, 2147483648
          %v699 = vxor.u32 %v696, 2147483648
          %v700 = vmul.f32 %v698, 1.442695
          %v701 = vpow.pop %v700
          %v702 = vmul.f32 %v699, 1.442695
          %v703 = vpow.pop %v702
          %v704 = vadd.f32 %v701, 1.0
          %v705 = vadd.f32 %v703, 1.0
          %v706 = vrcp.pop %v704
          %v707 = vmul.f32 %v704, %v706
          %v708 = vsub.f32 1.0, %v707
          %v709 = vmul.f32 %v706, %v708
          %v710 = vadd.f32 %v706, %v709
          %vm711 = vweird.f32 %v704
          %vm712 = vweird.f32 %v706
          %vm713 = vmor %vm711, %vm712
          %v714 = vsel %vm713, %v706, %v710
          %v715 = vand.u32 2147483647, %v704
          %vm716 = vcmp.eq.f32.partialorder %v715, 8.507059e+37
          %v717 = vand.u32 %v704, 2147483648
          %v718 = vor.u32 1.1754944e-38, %v717
          %v719 = vsel %vm716, %v718, %v714
          %v720 = vmul.f32 1.0, %v719
          %v721 = vrcp.pop %v705
          %v722 = vmul.f32 %v705, %v721
          %v723 = vsub.f32 1.0, %v722
          %v724 = vmul.f32 %v721, %v723
          %v725 = vadd.f32 %v721, %v724
          %vm726 = vweird.f32 %v705
          %vm727 = vweird.f32 %v721
          %vm728 = vmor %vm726, %vm727
          %v729 = vsel %vm728, %v721, %v725
          %v730 = vand.u32 2147483647, %v705
          %vm731 = vcmp.eq.f32.partialorder %v730, 8.507059e+37
          %v732 = vand.u32 %v705, 2147483648
          %v733 = vor.u32 1.1754944e-38, %v732
          %v734 = vsel %vm731, %v733, %v729
          %v735 = vmul.f32 1.0, %v734
          %v736 = vmul.f32 %v694, %v720
          %v737 = vmul.f32 %v696, %v735
          %v738 = vld [vmem:[%s9] sm:$0xf]
          %v739 = vld [vmem:[%s9 + $0x4] sm:$0xf]
          %v740 = vld [vmem:[%s9 + $0x8] sm:$0xf]
          %v741 = vld [vmem:[%s9 + $0xc] sm:$0xf]
          %v742 = vpack.c.bf16 %v737, %v736
          %v743 = vld [vmem:[#allocation15] sm:$0x1]
          %v745 = vperm.slane %v743, 0
          %v751 = vunpack.c.l.b16 %v738
          %v752 = vunpack.c.l.b16 %v739
          %v753 = vunpack.c.l.b16 %v740
          %v754 = vunpack.c.l.b16 %v741
          %v755 = vpack.c.b16 %v752, %v751
          %v756 = vpack.c.b16 %v754, %v753
          %v760 = vsel %vm680, %v742, 0
          %762 = vmatpush.bf16.msra.mxu0 0
          %763 = vmatpush.bf16.msra.mxu0 0
          %764 = vmatpush.bf16.msra.mxu0 0
          %765 = vmatpush.bf16.msra.mxu0 0
          %766 = vmatpush.bf16.msra.mxu0 0
          %767 = vmatpush.bf16.msra.mxu0 0
          %768 = vmatpush.bf16.msra.mxu0 %v756
          %769 = vmatpush.bf16.msra.mxu0 %v755
          %770 = vmatmul.bf16.gmra.mxu0 %v760
          %v771 = vpop.f32.mrf.mxu0
          %v772 = vadd.f32 %v745, %v771
          %v773 = vpop.f32.mrf.mxu0
          %v774 = vadd.f32 %v745, %v773
          %775 = vdwg.mxu0
          %v776 = vld [vmem:[%s3] sm:$0xff]
          %v777 = vld [vmem:[%s3 + $0x8] sm:$0xff]
          %780 = vrot.lane.b32.xlu0 %v772, 32
          %v781 = vpop.permute.xlu0 %780
          %782 = vrot.lane.b32.xlu0 %v774, 32
          %v783 = vpop.permute.xlu0 %782
          %v786 = vsel %vm680, %v657, %v781
          %v787 = vsel %vm680, %v658, %v783
          %788 = vst [vmem:[#allocation2] sm:$0xff] %v786
          %vm789 = vcmask 785408
          %790 = vst.msk [vmem:[#allocation2 + $0x8] sm:$0xff] %vm789, %v776
          %791 = vst [vmem:[#allocation2 + $0x10] sm:$0xff] %v787
          %792 = vst.msk [vmem:[#allocation2 + $0x18] sm:$0xff] %vm789, %v777
          %793 = vst [vmem:[#allocation3] sm:$0xff] 0.0
          %794 = vst [vmem:[#allocation3 + $0x8] sm:$0xff] 0.0
        $region120: #{tpu_custom_call.1} parent=83 // pred_fallthru
          _
        %s795 = smul.u32 %s48, 32
        %s796 = sld [smem:[#allocation7 + %s795]]
        %s797 = sshra.s32 %s796, 3
        %s798 = sand.u32 %s796, 7
        %s799 = sshra.s32 %s796, 3
        %s800 = sand.u32 %s796, 7
        %s801 = smul.u32 %s797, 2
        %s802 = smul.u32 %s801, 8
        %s803 = sadd.s32 %s802, %s800
        %s804 = scalar_lea.vmem [#allocation2], %s803
        %v805 = vld [vmem:[%s804] ss:$8 sm:$0x3]
        %v806 = vlaneseq
        %vm807 = vcmp.ge.s32.totalorder %v806, 0
        %vm808 = vcmp.lt.s32.totalorder %v806, 224
        %vm809 = vmand %vm807, %vm808
        %810 = vst.msk [vmem:[#allocation4] ss:$8 sm:$0x3] %vm809, %v805
        %811 = vst.msk [vmem:[#allocation4] ss:$8 sm:$0x0] %vm809, %v805
        %s812 = sadd.s32 %s795, 1
        %s813 = sld [smem:[#allocation7 + %s812]]
        %s814 = sshra.s32 %s813, 3
        %s815 = sand.u32 %s813, 7
        %s816 = sshra.s32 %s813, 3
        %s817 = sand.u32 %s813, 7
        %s818 = smul.u32 %s814, 2
        %s819 = smul.u32 %s818, 8
        %s820 = sadd.s32 %s819, %s817
        %s821 = scalar_lea.vmem [#allocation2], %s820
        %v822 = vld [vmem:[%s821] ss:$8 sm:$0x3]
        %s823 = scalar_lea.vmem [#allocation4], 1
        %824 = vst.msk [vmem:[%s823] ss:$8 sm:$0x3] %vm809, %v822
        %825 = vst.msk [vmem:[%s823] ss:$8 sm:$0x0] %vm809, %v822
        %s826 = sadd.s32 %s795, 2
        %s827 = sld [smem:[#allocation7 + %s826]]
        %s828 = sshra.s32 %s827, 3
        %s829 = sand.u32 %s827, 7
        %s830 = sshra.s32 %s827, 3
        %s831 = sand.u32 %s827, 7
        %s832 = smul.u32 %s828, 2
        %s833 = smul.u32 %s832, 8
        %s834 = sadd.s32 %s833, %s831
        %s835 = scalar_lea.vmem [#allocation2], %s834
        %v836 = vld [vmem:[%s835] ss:$8 sm:$0x3]
        %s837 = scalar_lea.vmem [#allocation4], 2
        %838 = vst.msk [vmem:[%s837] ss:$8 sm:$0x3] %vm809, %v836
        %839 = vst.msk [vmem:[%s837] ss:$8 sm:$0x0] %vm809, %v836
        %s840 = sadd.s32 %s795, 3
        %s841 = sld [smem:[#allocation7 + %s840]]
        %s842 = sshra.s32 %s841, 3
        %s843 = sand.u32 %s841, 7
        %s844 = sshra.s32 %s841, 3
        %s845 = sand.u32 %s841, 7
        %s846 = smul.u32 %s842, 2
        %s847 = smul.u32 %s846, 8
        %s848 = sadd.s32 %s847, %s845
        %s849 = scalar_lea.vmem [#allocation2], %s848
        %v850 = vld [vmem:[%s849] ss:$8 sm:$0x3]
        %s851 = scalar_lea.vmem [#allocation4], 3
        %852 = vst.msk [vmem:[%s851] ss:$8 sm:$0x3] %vm809, %v850
        %853 = vst.msk [vmem:[%s851] ss:$8 sm:$0x0] %vm809, %v850
        %s854 = sadd.s32 %s795, 4
        %s855 = sld [smem:[#allocation7 + %s854]]
        %s856 = sshra.s32 %s855, 3
        %s857 = sand.u32 %s855, 7
        %s858 = sshra.s32 %s855, 3
        %s859 = sand.u32 %s855, 7
        %s860 = smul.u32 %s856, 2
        %s861 = smul.u32 %s860, 8
        %s862 = sadd.s32 %s861, %s859
        %s863 = scalar_lea.vmem [#allocation2], %s862
        %v864 = vld [vmem:[%s863] ss:$8 sm:$0x3]
        %s865 = scalar_lea.vmem [#allocation4], 4
        %866 = vst.msk [vmem:[%s865] ss:$8 sm:$0x3] %vm809, %v864
        %867 = vst.msk [vmem:[%s865] ss:$8 sm:$0x0] %vm809, %v864
        %s868 = sadd.s32 %s795, 5
        %s869 = sld [smem:[#allocation7 + %s868]]
        %s870 = sshra.s32 %s869, 3
        %s871 = sand.u32 %s869, 7
        %s872 = sshra.s32 %s869, 3
        %s873 = sand.u32 %s869, 7
        %s874 = smul.u32 %s870, 2
        %s875 = smul.u32 %s874, 8
        %s876 = sadd.s32 %s875, %s873
        %s877 = scalar_lea.vmem [#allocation2], %s876
        %v878 = vld [vmem:[%s877] ss:$8 sm:$0x3]
        %s879 = scalar_lea.vmem [#allocation4], 5
        %880 = vst.msk [vmem:[%s879] ss:$8 sm:$0x3] %vm809, %v878
        %881 = vst.msk [vmem:[%s879] ss:$8 sm:$0x0] %vm809, %v878
        %s882 = sadd.s32 %s795, 6
        %s883 = sld [smem:[#allocation7 + %s882]]
        %s884 = sshra.s32 %s883, 3
        %s885 = sand.u32 %s883, 7
        %s886 = sshra.s32 %s883, 3
        %s887 = sand.u32 %s883, 7
        %s888 = smul.u32 %s884, 2
        %s889 = smul.u32 %s888, 8
        %s890 = sadd.s32 %s889, %s887
        %s891 = scalar_lea.vmem [#allocation2], %s890
        %v892 = vld [vmem:[%s891] ss:$8 sm:$0x3]
        %s893 = scalar_lea.vmem [#allocation4], 6
        %894 = vst.msk [vmem:[%s893] ss:$8 sm:$0x3] %vm809, %v892
        %895 = vst.msk [vmem:[%s893] ss:$8 sm:$0x0] %vm809, %v892
        %s896 = sadd.s32 %s795, 7
        %s897 = sld [smem:[#allocation7 + %s896]]
        %s898 = sshra.s32 %s897, 3
        %s899 = sand.u32 %s897, 7
        %s900 = sshra.s32 %s897, 3
        %s901 = sand.u32 %s897, 7
        %s902 = smul.u32 %s898, 2
        %s903 = smul.u32 %s902, 8
        %s904 = sadd.s32 %s903, %s901
        %s905 = scalar_lea.vmem [#allocation2], %s904
        %v906 = vld [vmem:[%s905] ss:$8 sm:$0x3]
        %s907 = scalar_lea.vmem [#allocation4], 7
        %908 = vst.msk [vmem:[%s907] ss:$8 sm:$0x3] %vm809, %v906
        %909 = vst.msk [vmem:[%s907] ss:$8 sm:$0x0] %vm809, %v906
        %s910 = sadd.s32 %s795, 8
        %s911 = sld [smem:[#allocation7 + %s910]]
        %s912 = sshra.s32 %s911, 3
        %s913 = sand.u32 %s911, 7
        %s914 = sshra.s32 %s911, 3
        %s915 = sand.u32 %s911, 7
        %s916 = smul.u32 %s912, 2
        %s917 = smul.u32 %s916, 8
        %s918 = sadd.s32 %s917, %s915
        %s919 = scalar_lea.vmem [#allocation2], %s918
        %v920 = vld [vmem:[%s919] ss:$8 sm:$0x3]
        %s921 = scalar_lea.vmem [#allocation4], 16
        %922 = vst.msk [vmem:[%s921] ss:$8 sm:$0x3] %vm809, %v920
        %923 = vst.msk [vmem:[%s921] ss:$8 sm:$0x0] %vm809, %v920
        %s924 = sadd.s32 %s795, 9
        %s925 = sld [smem:[#allocation7 + %s924]]
        %s926 = sshra.s32 %s925, 3
        %s927 = sand.u32 %s925, 7
        %s928 = sshra.s32 %s925, 3
        %s929 = sand.u32 %s925, 7
        %s930 = smul.u32 %s926, 2
        %s931 = smul.u32 %s930, 8
        %s932 = sadd.s32 %s931, %s929
        %s933 = scalar_lea.vmem [#allocation2], %s932
        %v934 = vld [vmem:[%s933] ss:$8 sm:$0x3]
        %s935 = scalar_lea.vmem [#allocation4], 17
        %936 = vst.msk [vmem:[%s935] ss:$8 sm:$0x3] %vm809, %v934
        %937 = vst.msk [vmem:[%s935] ss:$8 sm:$0x0] %vm809, %v934
        %s938 = sadd.s32 %s795, 10
        %s939 = sld [smem:[#allocation7 + %s938]]
        %s940 = sshra.s32 %s939, 3
        %s941 = sand.u32 %s939, 7
        %s942 = sshra.s32 %s939, 3
        %s943 = sand.u32 %s939, 7
        %s944 = smul.u32 %s940, 2
        %s945 = smul.u32 %s944, 8
        %s946 = sadd.s32 %s945, %s943
        %s947 = scalar_lea.vmem [#allocation2], %s946
        %v948 = vld [vmem:[%s947] ss:$8 sm:$0x3]
        %s949 = scalar_lea.vmem [#allocation4], 18
        %950 = vst.msk [vmem:[%s949] ss:$8 sm:$0x3] %vm809, %v948
        %951 = vst.msk [vmem:[%s949] ss:$8 sm:$0x0] %vm809, %v948
        %s952 = sadd.s32 %s795, 11
        %s953 = sld [smem:[#allocation7 + %s952]]
        %s954 = sshra.s32 %s953, 3
        %s955 = sand.u32 %s953, 7
        %s956 = sshra.s32 %s953, 3
        %s957 = sand.u32 %s953, 7
        %s958 = smul.u32 %s954, 2
        %s959 = smul.u32 %s958, 8
        %s960 = sadd.s32 %s959, %s957
        %s961 = scalar_lea.vmem [#allocation2], %s960
        %v962 = vld [vmem:[%s961] ss:$8 sm:$0x3]
        %s963 = scalar_lea.vmem [#allocation4], 19
        %964 = vst.msk [vmem:[%s963] ss:$8 sm:$0x3] %vm809, %v962
        %965 = vst.msk [vmem:[%s963] ss:$8 sm:$0x0] %vm809, %v962
        %s966 = sadd.s32 %s795, 12
        %s967 = sld [smem:[#allocation7 + %s966]]
        %s968 = sshra.s32 %s967, 3
        %s969 = sand.u32 %s967, 7
        %s970 = sshra.s32 %s967, 3
        %s971 = sand.u32 %s967, 7
        %s972 = smul.u32 %s968, 2
        %s973 = smul.u32 %s972, 8
        %s974 = sadd.s32 %s973, %s971
        %s975 = scalar_lea.vmem [#allocation2], %s974
        %v976 = vld [vmem:[%s975] ss:$8 sm:$0x3]
        %s977 = scalar_lea.vmem [#allocation4], 20
        %978 = vst.msk [vmem:[%s977] ss:$8 sm:$0x3] %vm809, %v976
        %979 = vst.msk [vmem:[%s977] ss:$8 sm:$0x0] %vm809, %v976
        %s980 = sadd.s32 %s795, 13
        %s981 = sld [smem:[#allocation7 + %s980]]
        %s982 = sshra.s32 %s981, 3
        %s983 = sand.u32 %s981, 7
        %s984 = sshra.s32 %s981, 3
        %s985 = sand.u32 %s981, 7
        %s986 = smul.u32 %s982, 2
        %s987 = smul.u32 %s986, 8
        %s988 = sadd.s32 %s987, %s985
        %s989 = scalar_lea.vmem [#allocation2], %s988
        %v990 = vld [vmem:[%s989] ss:$8 sm:$0x3]
        %s991 = scalar_lea.vmem [#allocation4], 21
        %992 = vst.msk [vmem:[%s991] ss:$8 sm:$0x3] %vm809, %v990
        %993 = vst.msk [vmem:[%s991] ss:$8 sm:$0x0] %vm809, %v990
        %s994 = sadd.s32 %s795, 14
        %s995 = sld [smem:[#allocation7 + %s994]]
        %s996 = sshra.s32 %s995, 3
        %s997 = sand.u32 %s995, 7
        %s998 = sshra.s32 %s995, 3
        %s999 = sand.u32 %s995, 7
        %s1000 = smul.u32 %s996, 2
        %s1001 = smul.u32 %s1000, 8
        %s1002 = sadd.s32 %s1001, %s999
        %s1003 = scalar_lea.vmem [#allocation2], %s1002
        %v1004 = vld [vmem:[%s1003] ss:$8 sm:$0x3]
        %s1005 = scalar_lea.vmem [#allocation4], 22
        %1006 = vst.msk [vmem:[%s1005] ss:$8 sm:$0x3] %vm809, %v1004
        %1007 = vst.msk [vmem:[%s1005] ss:$8 sm:$0x0] %vm809, %v1004
        %s1008 = sadd.s32 %s795, 15
        %s1009 = sld [smem:[#allocation7 + %s1008]]
        %s1010 = sshra.s32 %s1009, 3
        %s1011 = sand.u32 %s1009, 7
        %s1012 = sshra.s32 %s1009, 3
        %s1013 = sand.u32 %s1009, 7
        %s1014 = smul.u32 %s1010, 2
        %s1015 = smul.u32 %s1014, 8
        %s1016 = sadd.s32 %s1015, %s1013
        %s1017 = scalar_lea.vmem [#allocation2], %s1016
        %v1018 = vld [vmem:[%s1017] ss:$8 sm:$0x3]
        %s1019 = scalar_lea.vmem [#allocation4], 23
        %1020 = vst.msk [vmem:[%s1019] ss:$8 sm:$0x3] %vm809, %v1018
        %1021 = vst.msk [vmem:[%s1019] ss:$8 sm:$0x0] %vm809, %v1018
        %s1022 = sadd.s32 %s795, 16
        %s1023 = sld [smem:[#allocation7 + %s1022]]
        %s1024 = sshra.s32 %s1023, 3
        %s1025 = sand.u32 %s1023, 7
        %s1026 = sshra.s32 %s1023, 3
        %s1027 = sand.u32 %s1023, 7
        %s1028 = smul.u32 %s1024, 2
        %s1029 = smul.u32 %s1028, 8
        %s1030 = sadd.s32 %s1029, %s1027
        %s1031 = scalar_lea.vmem [#allocation2], %s1030
        %v1032 = vld [vmem:[%s1031] ss:$8 sm:$0x3]
        %s1033 = scalar_lea.vmem [#allocation4], 32
        %1034 = vst.msk [vmem:[%s1033] ss:$8 sm:$0x3] %vm809, %v1032
        %1035 = vst.msk [vmem:[%s1033] ss:$8 sm:$0x0] %vm809, %v1032
        %s1036 = sadd.s32 %s795, 17
        %s1037 = sld [smem:[#allocation7 + %s1036]]
        %s1038 = sshra.s32 %s1037, 3
        %s1039 = sand.u32 %s1037, 7
        %s1040 = sshra.s32 %s1037, 3
        %s1041 = sand.u32 %s1037, 7
        %s1042 = smul.u32 %s1038, 2
        %s1043 = smul.u32 %s1042, 8
        %s1044 = sadd.s32 %s1043, %s1041
        %s1045 = scalar_lea.vmem [#allocation2], %s1044
        %v1046 = vld [vmem:[%s1045] ss:$8 sm:$0x3]
        %s1047 = scalar_lea.vmem [#allocation4], 33
        %1048 = vst.msk [vmem:[%s1047] ss:$8 sm:$0x3] %vm809, %v1046
        %1049 = vst.msk [vmem:[%s1047] ss:$8 sm:$0x0] %vm809, %v1046
        %s1050 = sadd.s32 %s795, 18
        %s1051 = sld [smem:[#allocation7 + %s1050]]
        %s1052 = sshra.s32 %s1051, 3
        %s1053 = sand.u32 %s1051, 7
        %s1054 = sshra.s32 %s1051, 3
        %s1055 = sand.u32 %s1051, 7
        %s1056 = smul.u32 %s1052, 2
        %s1057 = smul.u32 %s1056, 8
        %s1058 = sadd.s32 %s1057, %s1055
        %s1059 = scalar_lea.vmem [#allocation2], %s1058
        %v1060 = vld [vmem:[%s1059] ss:$8 sm:$0x3]
        %s1061 = scalar_lea.vmem [#allocation4], 34
        %1062 = vst.msk [vmem:[%s1061] ss:$8 sm:$0x3] %vm809, %v1060
        %1063 = vst.msk [vmem:[%s1061] ss:$8 sm:$0x0] %vm809, %v1060
        %s1064 = sadd.s32 %s795, 19
        %s1065 = sld [smem:[#allocation7 + %s1064]]
        %s1066 = sshra.s32 %s1065, 3
        %s1067 = sand.u32 %s1065, 7
        %s1068 = sshra.s32 %s1065, 3
        %s1069 = sand.u32 %s1065, 7
        %s1070 = smul.u32 %s1066, 2
        %s1071 = smul.u32 %s1070, 8
        %s1072 = sadd.s32 %s1071, %s1069
        %s1073 = scalar_lea.vmem [#allocation2], %s1072
        %v1074 = vld [vmem:[%s1073] ss:$8 sm:$0x3]
        %s1075 = scalar_lea.vmem [#allocation4], 35
        %1076 = vst.msk [vmem:[%s1075] ss:$8 sm:$0x3] %vm809, %v1074
        %1077 = vst.msk [vmem:[%s1075] ss:$8 sm:$0x0] %vm809, %v1074
        %s1078 = sadd.s32 %s795, 20
        %s1079 = sld [smem:[#allocation7 + %s1078]]
        %s1080 = sshra.s32 %s1079, 3
        %s1081 = sand.u32 %s1079, 7
        %s1082 = sshra.s32 %s1079, 3
        %s1083 = sand.u32 %s1079, 7
        %s1084 = smul.u32 %s1080, 2
        %s1085 = smul.u32 %s1084, 8
        %s1086 = sadd.s32 %s1085, %s1083
        %s1087 = scalar_lea.vmem [#allocation2], %s1086
        %v1088 = vld [vmem:[%s1087] ss:$8 sm:$0x3]
        %s1089 = scalar_lea.vmem [#allocation4], 36
        %1090 = vst.msk [vmem:[%s1089] ss:$8 sm:$0x3] %vm809, %v1088
        %1091 = vst.msk [vmem:[%s1089] ss:$8 sm:$0x0] %vm809, %v1088
        %s1092 = sadd.s32 %s795, 21
        %s1093 = sld [smem:[#allocation7 + %s1092]]
        %s1094 = sshra.s32 %s1093, 3
        %s1095 = sand.u32 %s1093, 7
        %s1096 = sshra.s32 %s1093, 3
        %s1097 = sand.u32 %s1093, 7
        %s1098 = smul.u32 %s1094, 2
        %s1099 = smul.u32 %s1098, 8
        %s1100 = sadd.s32 %s1099, %s1097
        %s1101 = scalar_lea.vmem [#allocation2], %s1100
        %v1102 = vld [vmem:[%s1101] ss:$8 sm:$0x3]
        %s1103 = scalar_lea.vmem [#allocation4], 37
        %1104 = vst.msk [vmem:[%s1103] ss:$8 sm:$0x3] %vm809, %v1102
        %1105 = vst.msk [vmem:[%s1103] ss:$8 sm:$0x0] %vm809, %v1102
        %s1106 = sadd.s32 %s795, 22
        %s1107 = sld [smem:[#allocation7 + %s1106]]
        %s1108 = sshra.s32 %s1107, 3
        %s1109 = sand.u32 %s1107, 7
        %s1110 = sshra.s32 %s1107, 3
        %s1111 = sand.u32 %s1107, 7
        %s1112 = smul.u32 %s1108, 2
        %s1113 = smul.u32 %s1112, 8
        %s1114 = sadd.s32 %s1113, %s1111
        %s1115 = scalar_lea.vmem [#allocation2], %s1114
        %v1116 = vld [vmem:[%s1115] ss:$8 sm:$0x3]
        %s1117 = scalar_lea.vmem [#allocation4], 38
        %1118 = vst.msk [vmem:[%s1117] ss:$8 sm:$0x3] %vm809, %v1116
        %1119 = vst.msk [vmem:[%s1117] ss:$8 sm:$0x0] %vm809, %v1116
        %s1120 = sadd.s32 %s795, 23
        %s1121 = sld [smem:[#allocation7 + %s1120]]
        %s1122 = sshra.s32 %s1121, 3
        %s1123 = sand.u32 %s1121, 7
        %s1124 = sshra.s32 %s1121, 3
        %s1125 = sand.u32 %s1121, 7
        %s1126 = smul.u32 %s1122, 2
        %s1127 = smul.u32 %s1126, 8
        %s1128 = sadd.s32 %s1127, %s1125
        %s1129 = scalar_lea.vmem [#allocation2], %s1128
        %v1130 = vld [vmem:[%s1129] ss:$8 sm:$0x3]
        %s1131 = scalar_lea.vmem [#allocation4], 39
        %1132 = vst.msk [vmem:[%s1131] ss:$8 sm:$0x3] %vm809, %v1130
        %1133 = vst.msk [vmem:[%s1131] ss:$8 sm:$0x0] %vm809, %v1130
        %s1134 = sadd.s32 %s795, 24
        %s1135 = sld [smem:[#allocation7 + %s1134]]
        %s1136 = sshra.s32 %s1135, 3
        %s1137 = sand.u32 %s1135, 7
        %s1138 = sshra.s32 %s1135, 3
        %s1139 = sand.u32 %s1135, 7
        %s1140 = smul.u32 %s1136, 2
        %s1141 = smul.u32 %s1140, 8
        %s1142 = sadd.s32 %s1141, %s1139
        %s1143 = scalar_lea.vmem [#allocation2], %s1142
        %v1144 = vld [vmem:[%s1143] ss:$8 sm:$0x3]
        %s1145 = scalar_lea.vmem [#allocation4], 48
        %1146 = vst.msk [vmem:[%s1145] ss:$8 sm:$0x3] %vm809, %v1144
        %1147 = vst.msk [vmem:[%s1145] ss:$8 sm:$0x0] %vm809, %v1144
        %s1148 = sadd.s32 %s795, 25
        %s1149 = sld [smem:[#allocation7 + %s1148]]
        %s1150 = sshra.s32 %s1149, 3
        %s1151 = sand.u32 %s1149, 7
        %s1152 = sshra.s32 %s1149, 3
        %s1153 = sand.u32 %s1149, 7
        %s1154 = smul.u32 %s1150, 2
        %s1155 = smul.u32 %s1154, 8
        %s1156 = sadd.s32 %s1155, %s1153
        %s1157 = scalar_lea.vmem [#allocation2], %s1156
        %v1158 = vld [vmem:[%s1157] ss:$8 sm:$0x3]
        %s1159 = scalar_lea.vmem [#allocation4], 49
        %1160 = vst.msk [vmem:[%s1159] ss:$8 sm:$0x3] %vm809, %v1158
        %1161 = vst.msk [vmem:[%s1159] ss:$8 sm:$0x0] %vm809, %v1158
        %s1162 = sadd.s32 %s795, 26
        %s1163 = sld [smem:[#allocation7 + %s1162]]
        %s1164 = sshra.s32 %s1163, 3
        %s1165 = sand.u32 %s1163, 7
        %s1166 = sshra.s32 %s1163, 3
        %s1167 = sand.u32 %s1163, 7
        %s1168 = smul.u32 %s1164, 2
        %s1169 = smul.u32 %s1168, 8
        %s1170 = sadd.s32 %s1169, %s1167
        %s1171 = scalar_lea.vmem [#allocation2], %s1170
        %v1172 = vld [vmem:[%s1171] ss:$8 sm:$0x3]
        %s1173 = scalar_lea.vmem [#allocation4], 50
        %1174 = vst.msk [vmem:[%s1173] ss:$8 sm:$0x3] %vm809, %v1172
        %1175 = vst.msk [vmem:[%s1173] ss:$8 sm:$0x0] %vm809, %v1172
        %s1176 = sadd.s32 %s795, 27
        %s1177 = sld [smem:[#allocation7 + %s1176]]
        %s1178 = sshra.s32 %s1177, 3
        %s1179 = sand.u32 %s1177, 7
        %s1180 = sshra.s32 %s1177, 3
        %s1181 = sand.u32 %s1177, 7
        %s1182 = smul.u32 %s1178, 2
        %s1183 = smul.u32 %s1182, 8
        %s1184 = sadd.s32 %s1183, %s1181
        %s1185 = scalar_lea.vmem [#allocation2], %s1184
        %v1186 = vld [vmem:[%s1185] ss:$8 sm:$0x3]
        %s1187 = scalar_lea.vmem [#allocation4], 51
        %1188 = vst.msk [vmem:[%s1187] ss:$8 sm:$0x3] %vm809, %v1186
        %1189 = vst.msk [vmem:[%s1187] ss:$8 sm:$0x0] %vm809, %v1186
        %s1190 = sadd.s32 %s795, 28
        %s1191 = sld [smem:[#allocation7 + %s1190]]
        %s1192 = sshra.s32 %s1191, 3
        %s1193 = sand.u32 %s1191, 7
        %s1194 = sshra.s32 %s1191, 3
        %s1195 = sand.u32 %s1191, 7
        %s1196 = smul.u32 %s1192, 2
        %s1197 = smul.u32 %s1196, 8
        %s1198 = sadd.s32 %s1197, %s1195
        %s1199 = scalar_lea.vmem [#allocation2], %s1198
        %v1200 = vld [vmem:[%s1199] ss:$8 sm:$0x3]
        %s1201 = scalar_lea.vmem [#allocation4], 52
        %1202 = vst.msk [vmem:[%s1201] ss:$8 sm:$0x3] %vm809, %v1200
        %1203 = vst.msk [vmem:[%s1201] ss:$8 sm:$0x0] %vm809, %v1200
        %s1204 = sadd.s32 %s795, 29
        %s1205 = sld [smem:[#allocation7 + %s1204]]
        %s1206 = sshra.s32 %s1205, 3
        %s1207 = sand.u32 %s1205, 7
        %s1208 = sshra.s32 %s1205, 3
        %s1209 = sand.u32 %s1205, 7
        %s1210 = smul.u32 %s1206, 2
        %s1211 = smul.u32 %s1210, 8
        %s1212 = sadd.s32 %s1211, %s1209
        %s1213 = scalar_lea.vmem [#allocation2], %s1212
        %v1214 = vld [vmem:[%s1213] ss:$8 sm:$0x3]
        %s1215 = scalar_lea.vmem [#allocation4], 53
        %1216 = vst.msk [vmem:[%s1215] ss:$8 sm:$0x3] %vm809, %v1214
        %1217 = vst.msk [vmem:[%s1215] ss:$8 sm:$0x0] %vm809, %v1214
        %s1218 = sadd.s32 %s795, 30
        %s1219 = sld [smem:[#allocation7 + %s1218]]
        %s1220 = sshra.s32 %s1219, 3
        %s1221 = sand.u32 %s1219, 7
        %s1222 = sshra.s32 %s1219, 3
        %s1223 = sand.u32 %s1219, 7
        %s1224 = smul.u32 %s1220, 2
        %s1225 = smul.u32 %s1224, 8
        %s1226 = sadd.s32 %s1225, %s1223
        %s1227 = scalar_lea.vmem [#allocation2], %s1226
        %v1228 = vld [vmem:[%s1227] ss:$8 sm:$0x3]
        %s1229 = scalar_lea.vmem [#allocation4], 54
        %1230 = vst.msk [vmem:[%s1229] ss:$8 sm:$0x3] %vm809, %v1228
        %1231 = vst.msk [vmem:[%s1229] ss:$8 sm:$0x0] %vm809, %v1228
        %s1232 = sadd.s32 %s795, 31
        %s1233 = sld [smem:[#allocation7 + %s1232]]
        %s1234 = sshra.s32 %s1233, 3
        %s1235 = sand.u32 %s1233, 7
        %s1236 = sshra.s32 %s1233, 3
        %s1237 = sand.u32 %s1233, 7
        %s1238 = smul.u32 %s1234, 2
        %s1239 = smul.u32 %s1238, 8
        %s1240 = sadd.s32 %s1239, %s1237
        %s1241 = scalar_lea.vmem [#allocation2], %s1240
        %v1242 = vld [vmem:[%s1241] ss:$8 sm:$0x3]
        %s1243 = scalar_lea.vmem [#allocation4], 55
        %1244 = vst.msk [vmem:[%s1243] ss:$8 sm:$0x3] %vm809, %v1242
        %1245 = vst.msk [vmem:[%s1243] ss:$8 sm:$0x0] %vm809, %v1242
        %v1246 = vld [vmem:[%s650] sm:$0xff]
        %v1247 = vld [vmem:[%s650 + $0x8] sm:$0xff]
        %v1248 = vld [vmem:[%s650 + $0x10] sm:$0xff]
        %v1249 = vld [vmem:[%s650 + $0x18] sm:$0xff]
        %v1250 = vlaneseq
        %v1251 = vand.u32 %v1250, 127
        %v1252 = vadd.s32 %v1251, 1
        %v1253 = vcvt.s32.f32 %v1252
        %vm1254 = vcmp.gt.f32.partialorder %v1246, 0.0
        %vm1255 = vcmp.gt.f32.partialorder %v1247, 0.0
        %vm1256 = vcmp.gt.f32.partialorder %v1248, 0.0
        %vm1257 = vcmp.gt.f32.partialorder %v1249, 0.0
        %v1258 = vsel %vm1254, %v1246, 1.0
        %v1259 = vsel %vm1255, %v1247, 1.0
        %v1260 = vsel %vm1256, %v1248, 1.0
        %v1261 = vsel %vm1257, %v1249, 1.0
        %v1262 = vmul.f32 %v1253, 0.7853982
        %1264 = vset.pattern.permute.xlu0 0
        %1265 = vperm.xlu0 %1264, %v1246
        %v1266 = vpop.permute.xlu0 %1265
        %1269 = vset.pattern.permute.xlu0 0
        %1270 = vperm.xlu0 %1269, %v1247
        %v1271 = vpop.permute.xlu0 %1270
        %1274 = vset.pattern.permute.xlu0 0
        %1275 = vperm.xlu0 %1274, %v1248
        %v1276 = vpop.permute.xlu0 %1275
        %1279 = vset.pattern.permute.xlu0 0
        %1280 = vperm.xlu0 %1279, %v1249
        %v1281 = vpop.permute.xlu0 %1280
        %v1283 = vmul.f32 %v1262, %v1266
        %v1284 = vmul.f32 %v1262, %v1271
        %v1285 = vmul.f32 %v1262, %v1276
        %v1286 = vmul.f32 %v1262, %v1281
        %v1287 = vand.u32 2147483647, %v1283
        %vm1288 = vcmp.le.f32.partialorder %v1287, 0.7853982
        %vm1289 = vcmp.lt.s32.totalorder %v1283, 0
        %v1290 = vand.u32 %v1283, 2139095040
        %v1291 = vshrl.u32 %v1290, 23
        %v1292 = vsub.s32 %v1291, 127
        %v1293 = vand.u32 2147483647, %v1283
        %v1294 = vand.u32 %v1293, 8388607
        %v1295 = vor.u32 %v1294, 8388608
        %v1296 = vsub.s32 0, %v1295
        %v1297 = vadd.s32 %v1292, 1
        %vm1298 = vcmp.gt.s32.totalorder %v1297, 0
        %v1299 = vsel %vm1298, %v1297, 0
        %v1300 = vshrl.u32 %v1299, 5
        %v1301 = vand.u32 %v1299, 31
        %v1302 = vsub.s32 32, %v1301
        %v1303 = vshrl.u32 683565275, %v1302
        %v1304 = vshll.u32 683565275, %v1301
        %v1305 = vshrl.u32 2475754826, %v1302
        %v1306 = vor.u32 %v1304, %v1305
        %v1307 = vshll.u32 2475754826, %v1301
        %v1308 = vshrl.u32 2131351028, %v1302
        %v1309 = vor.u32 %v1307, %v1308
        %v1310 = vshll.u32 2131351028, %v1301
        %v1311 = vshrl.u32 2102212464, %v1302
        %v1312 = vor.u32 %v1310, %v1311
        %v1313 = vshll.u32 2102212464, %v1301
        %v1314 = vshrl.u32 920167782, %v1302
        %v1315 = vor.u32 %v1313, %v1314
        %v1316 = vshll.u32 920167782, %v1301
        %v1317 = vshrl.u32 1326507024, %v1302
        %v1318 = vor.u32 %v1316, %v1317
        %vm1319 = vcmp.lt.s32.totalorder %v1300, 1
        %vm1320 = vcmp.lt.s32.totalorder %v1300, 2
        %vm1321 = vcmp.lt.s32.totalorder %v1300, 3
        %vm1322 = vcmp.lt.s32.totalorder %v1300, 4
        %v1323 = vsel %vm1319, %v1303, %v1306
        %v1324 = vsel %vm1322, %v1312, 2102212464
        %v1325 = vsel %vm1321, %v1309, %v1324
        %v1326 = vsel %vm1320, %v1323, %v1325
        %v1327 = vsel %vm1319, %v1306, %v1309
        %v1328 = vsel %vm1322, %v1315, 920167782
        %v1329 = vsel %vm1321, %v1312, %v1328
        %v1330 = vsel %vm1320, %v1327, %v1329
        %v1331 = vsel %vm1319, %v1309, %v1312
        %v1332 = vsel %vm1322, %v1318, 1326507024
        %v1333 = vsel %vm1321, %v1315, %v1332
        %v1334 = vsel %vm1320, %v1331, %v1333
        %v1335 = vshll.u32 %v1295, 8
        %v1336 = vand.u32 %v1335, 65535
        %v1337 = vshrl.u32 %v1335, 16
        %v1338 = vand.u32 %v1334, 65535
        %v1339 = vshrl.u32 %v1334, 16
        %v1340 = vmul.u32 %v1336, %v1338
        %v1341 = vmul.u32 %v1336, %v1339
        %v1342 = vmul.u32 %v1337, %v1338
        %v1343 = vmul.u32 %v1337, %v1339
        %v1344 = vshll.u32 %v1341, 16
        %v1345 = vshrl.u32 %v1341, 16
        %v1346 = vshll.u32 %v1342, 16
        %v1347 = vshrl.u32 %v1342, 16
        %vm1348 = vc.u32 %v1340, %v1344
        %v1349 = vsel %vm1348, 1, 0
        %v1350 = vadd.s32 %v1340, %v1344
        %v1351 = vadd.s32 %v1343, %v1349
        %vm1352 = vc.u32 %v1350, %v1346
        %v1353 = vsel %vm1352, 1, 0
        %v1354 = vadd.s32 %v1350, %v1346
        %v1355 = vadd.s32 %v1351, %v1353
        %v1356 = vadd.s32 %v1355, %v1345
        %v1357 = vadd.s32 %v1356, %v1347
        %v1358 = vand.u32 %v1335, 65535
        %v1359 = vshrl.u32 %v1335, 16
        %v1360 = vand.u32 %v1330, 65535
        %v1361 = vshrl.u32 %v1330, 16
        %v1362 = vmul.u32 %v1358, %v1360
        %v1363 = vmul.u32 %v1358, %v1361
        %v1364 = vmul.u32 %v1359, %v1360
        %v1365 = vmul.u32 %v1359, %v1361
        %v1366 = vshll.u32 %v1363, 16
        %v1367 = vshrl.u32 %v1363, 16
        %v1368 = vshll.u32 %v1364, 16
        %v1369 = vshrl.u32 %v1364, 16
        %vm1370 = vc.u32 %v1362, %v1366
        %v1371 = vsel %vm1370, 1, 0
        %v1372 = vadd.s32 %v1362, %v1366
        %v1373 = vadd.s32 %v1365, %v1371
        %vm1374 = vc.u32 %v1372, %v1368
        %v1375 = vsel %vm1374, 1, 0
        %v1376 = vadd.s32 %v1372, %v1368
        %v1377 = vadd.s32 %v1373, %v1375
        %v1378 = vadd.s32 %v1377, %v1367
        %v1379 = vadd.s32 %v1378, %v1369
        %v1380 = vmul.u32 %v1335, %v1326
        %v1381 = vadd.s32 %v1357, %v1376
        %vm1382 = vc.u32 %v1357, %v1376
        %v1383 = vadd.s32 %v1379, 1
        %v1384 = vsel %vm1382, %v1383, %v1379
        %v1385 = vadd.s32 %v1380, %v1384
        %v1386 = vadd.s32 %v1385, 536870912
        %v1387 = vshrl.u32 %v1386, 30
        %v1388 = vshll.u32 %v1387, 30
        %v1389 = vsub.s32 %v1385, %v1388
        %vm1390 = vcmp.lt.s32.totalorder %v1389, 0
        %v1391 = vsub.s32 0, %v1389
        %v1392 = vsel %vm1390, %v1391, %v1389
        %v1393 = vclz %v1392
        %v1394 = vsub.s32 %v1393, 2
        %vm1395 = vcmp.gt.s32.totalorder 0, %v1394
        %v1396 = vsel %vm1395, 0, %v1394
        %v1397 = vsub.s32 32, %v1396
        %v1398 = vshll.u32 %v1389, %v1396
        %v1399 = vshrl.u32 %v1381, %v1397
        %v1400 = vor.u32 %v1398, %v1399
        %v1401 = vsub.s32 4294967266, %v1396
        %v1402 = vadd.s32 %v1401, 127
        %v1403 = vshll.u32 %v1402, 23
        %v1404 = vor.u32 4788187, %v1403
        %v1405 = vand.u32 2147483647, %v1404
        %v1407 = vcvt.s32.f32 %v1400
        %v1408 = vmul.f32 %v1407, %v1405
        %v1409 = vxor.u32 %v1408, 2147483648
        %v1410 = vsel %vm1289, %v1409, %v1408
        %v1411 = vsub.s32 4, %v1387
        %v1412 = vsel %vm1289, %v1411, %v1387
        %v1413 = vsel %vm1288, %v1283, %v1410
        %v1414 = vsel %vm1288, 0, %v1412
        %v1415 = vmul.f32 %v1413, %v1413
        %v1416 = vmul.f32 %v1415, -0.001358992
        %v1417 = vadd.f32 %v1416, 0.041655596
        %v1418 = vmul.f32 %v1415, %v1417
        %v1419 = vadd.f32 %v1418, -0.4999988
        %v1420 = vmul.f32 %v1415, %v1419
        %v1421 = vadd.f32 1.0, %v1420
        %v1422 = vmul.f32 %v1413, %v1413
        %v1423 = vmul.f32 %v1422, -0.00019511016
        %v1424 = vadd.f32 %v1423, 0.008332121
        %v1425 = vmul.f32 %v1422, %v1424
        %v1426 = vadd.f32 %v1425, -0.16666654
        %v1427 = vmul.f32 %v1422, %v1426
        %v1428 = vadd.f32 %v1427, 1.0
        %v1429 = vmul.f32 %v1428, %v1413
        %vm1430 = vweird.f32 %v1283
        %v1431 = vadd.s32 %v1414, 3
        %v1432 = vand.u32 %v1431, 3
        %vm1433 = vcmp.lt.s32.totalorder %v1432, 2
        %vm1434 = vcmp.eq.s32.totalorder %v1432, 0
        %v1435 = vxor.u32 %v1429, 2147483648
        %v1436 = vsel %vm1434, %v1421, %v1435
        %vm1437 = vcmp.eq.s32.totalorder %v1432, 2
        %v1438 = vxor.u32 %v1421, 2147483648
        %v1439 = vsel %vm1437, %v1438, %v1429
        %v1440 = vsel %vm1433, %v1436, %v1439
        %v1441 = vsel %vm1430, nan, %v1440
        %v1442 = vand.u32 2147483647, %v1284
        %vm1443 = vcmp.le.f32.partialorder %v1442, 0.7853982
        %vm1444 = vcmp.lt.s32.totalorder %v1284, 0
        %v1445 = vand.u32 %v1284, 2139095040
        %v1446 = vshrl.u32 %v1445, 23
        %v1447 = vsub.s32 %v1446, 127
        %v1448 = vand.u32 2147483647, %v1284
        %v1449 = vand.u32 %v1448, 8388607
        %v1450 = vor.u32 %v1449, 8388608
        %v1451 = vsub.s32 0, %v1450
        %v1452 = vadd.s32 %v1447, 1
        %vm1453 = vcmp.gt.s32.totalorder %v1452, 0
        %v1454 = vsel %vm1453, %v1452, 0
        %v1455 = vshrl.u32 %v1454, 5
        %v1456 = vand.u32 %v1454, 31
        %v1457 = vsub.s32 32, %v1456
        %v1458 = vshrl.u32 683565275, %v1457
        %v1459 = vshll.u32 683565275, %v1456
        %v1460 = vshrl.u32 2475754826, %v1457
        %v1461 = vor.u32 %v1459, %v1460
        %v1462 = vshll.u32 2475754826, %v1456
        %v1463 = vshrl.u32 2131351028, %v1457
        %v1464 = vor.u32 %v1462, %v1463
        %v1465 = vshll.u32 2131351028, %v1456
        %v1466 = vshrl.u32 2102212464, %v1457
        %v1467 = vor.u32 %v1465, %v1466
        %v1468 = vshll.u32 2102212464, %v1456
        %v1469 = vshrl.u32 920167782, %v1457
        %v1470 = vor.u32 %v1468, %v1469
        %v1471 = vshll.u32 920167782, %v1456
        %v1472 = vshrl.u32 1326507024, %v1457
        %v1473 = vor.u32 %v1471, %v1472
        %vm1474 = vcmp.lt.s32.totalorder %v1455, 1
        %vm1475 = vcmp.lt.s32.totalorder %v1455, 2
        %vm1476 = vcmp.lt.s32.totalorder %v1455, 3
        %vm1477 = vcmp.lt.s32.totalorder %v1455, 4
        %v1478 = vsel %vm1474, %v1458, %v1461
        %v1479 = vsel %vm1477, %v1467, 2102212464
        %v1480 = vsel %vm1476, %v1464, %v1479
        %v1481 = vsel %vm1475, %v1478, %v1480
        %v1482 = vsel %vm1474, %v1461, %v1464
        %v1483 = vsel %vm1477, %v1470, 920167782
        %v1484 = vsel %vm1476, %v1467, %v1483
        %v1485 = vsel %vm1475, %v1482, %v1484
        %v1486 = vsel %vm1474, %v1464, %v1467
        %v1487 = vsel %vm1477, %v1473, 1326507024
        %v1488 = vsel %vm1476, %v1470, %v1487
        %v1489 = vsel %vm1475, %v1486, %v1488
        %v1490 = vshll.u32 %v1450, 8
        %v1491 = vand.u32 %v1490, 65535
        %v1492 = vshrl.u32 %v1490, 16
        %v1493 = vand.u32 %v1489, 65535
        %v1494 = vshrl.u32 %v1489, 16
        %v1495 = vmul.u32 %v1491, %v1493
        %v1496 = vmul.u32 %v1491, %v1494
        %v1497 = vmul.u32 %v1492, %v1493
        %v1498 = vmul.u32 %v1492, %v1494
        %v1499 = vshll.u32 %v1496, 16
        %v1500 = vshrl.u32 %v1496, 16
        %v1501 = vshll.u32 %v1497, 16
        %v1502 = vshrl.u32 %v1497, 16
        %vm1503 = vc.u32 %v1495, %v1499
        %v1504 = vsel %vm1503, 1, 0
        %v1505 = vadd.s32 %v1495, %v1499
        %v1506 = vadd.s32 %v1498, %v1504
        %vm1507 = vc.u32 %v1505, %v1501
        %v1508 = vsel %vm1507, 1, 0
        %v1509 = vadd.s32 %v1505, %v1501
        %v1510 = vadd.s32 %v1506, %v1508
        %v1511 = vadd.s32 %v1510, %v1500
        %v1512 = vadd.s32 %v1511, %v1502
        %v1513 = vand.u32 %v1490, 65535
        %v1514 = vshrl.u32 %v1490, 16
        %v1515 = vand.u32 %v1485, 65535
        %v1516 = vshrl.u32 %v1485, 16
        %v1517 = vmul.u32 %v1513, %v1515
        %v1518 = vmul.u32 %v1513, %v1516
        %v1519 = vmul.u32 %v1514, %v1515
        %v1520 = vmul.u32 %v1514, %v1516
        %v1521 = vshll.u32 %v1518, 16
        %v1522 = vshrl.u32 %v1518, 16
        %v1523 = vshll.u32 %v1519, 16
        %v1524 = vshrl.u32 %v1519, 16
        %vm1525 = vc.u32 %v1517, %v1521
        %v1526 = vsel %vm1525, 1, 0
        %v1527 = vadd.s32 %v1517, %v1521
        %v1528 = vadd.s32 %v1520, %v1526
        %vm1529 = vc.u32 %v1527, %v1523
        %v1530 = vsel %vm1529, 1, 0
        %v1531 = vadd.s32 %v1527, %v1523
        %v1532 = vadd.s32 %v1528, %v1530
        %v1533 = vadd.s32 %v1532, %v1522
        %v1534 = vadd.s32 %v1533, %v1524
        %v1535 = vmul.u32 %v1490, %v1481
        %v1536 = vadd.s32 %v1512, %v1531
        %vm1537 = vc.u32 %v1512, %v1531
        %v1538 = vadd.s32 %v1534, 1
        %v1539 = vsel %vm1537, %v1538, %v1534
        %v1540 = vadd.s32 %v1535, %v1539
        %v1541 = vadd.s32 %v1540, 536870912
        %v1542 = vshrl.u32 %v1541, 30
        %v1543 = vshll.u32 %v1542, 30
        %v1544 = vsub.s32 %v1540, %v1543
        %vm1545 = vcmp.lt.s32.totalorder %v1544, 0
        %v1546 = vsub.s32 0, %v1544
        %v1547 = vsel %vm1545, %v1546, %v1544
        %v1548 = vclz %v1547
        %v1549 = vsub.s32 %v1548, 2
        %vm1550 = vcmp.gt.s32.totalorder 0, %v1549
        %v1551 = vsel %vm1550, 0, %v1549
        %v1552 = vsub.s32 32, %v1551
        %v1553 = vshll.u32 %v1544, %v1551
        %v1554 = vshrl.u32 %v1536, %v1552
        %v1555 = vor.u32 %v1553, %v1554
        %v1556 = vsub.s32 4294967266, %v1551
        %v1557 = vadd.s32 %v1556, 127
        %v1558 = vshll.u32 %v1557, 23
        %v1559 = vor.u32 4788187, %v1558
        %v1560 = vand.u32 2147483647, %v1559
        %v1562 = vcvt.s32.f32 %v1555
        %v1563 = vmul.f32 %v1562, %v1560
        %v1564 = vxor.u32 %v1563, 2147483648
        %v1565 = vsel %vm1444, %v1564, %v1563
        %v1566 = vsub.s32 4, %v1542
        %v1567 = vsel %vm1444, %v1566, %v1542
        %v1568 = vsel %vm1443, %v1284, %v1565
        %v1569 = vsel %vm1443, 0, %v1567
        %v1570 = vmul.f32 %v1568, %v1568
        %v1571 = vmul.f32 %v1570, -0.001358992
        %v1572 = vadd.f32 %v1571, 0.041655596
        %v1573 = vmul.f32 %v1570, %v1572
        %v1574 = vadd.f32 %v1573, -0.4999988
        %v1575 = vmul.f32 %v1570, %v1574
        %v1576 = vadd.f32 1.0, %v1575
        %v1577 = vmul.f32 %v1568, %v1568
        %v1578 = vmul.f32 %v1577, -0.00019511016
        %v1579 = vadd.f32 %v1578, 0.008332121
        %v1580 = vmul.f32 %v1577, %v1579
        %v1581 = vadd.f32 %v1580, -0.16666654
        %v1582 = vmul.f32 %v1577, %v1581
        %v1583 = vadd.f32 %v1582, 1.0
        %v1584 = vmul.f32 %v1583, %v1568
        %vm1585 = vweird.f32 %v1284
        %v1586 = vadd.s32 %v1569, 3
        %v1587 = vand.u32 %v1586, 3
        %vm1588 = vcmp.lt.s32.totalorder %v1587, 2
        %vm1589 = vcmp.eq.s32.totalorder %v1587, 0
        %v1590 = vxor.u32 %v1584, 2147483648
        %v1591 = vsel %vm1589, %v1576, %v1590
        %vm1592 = vcmp.eq.s32.totalorder %v1587, 2
        %v1593 = vxor.u32 %v1576, 2147483648
        %v1594 = vsel %vm1592, %v1593, %v1584
        %v1595 = vsel %vm1588, %v1591, %v1594
        %v1596 = vsel %vm1585, nan, %v1595
        %v1597 = vand.u32 2147483647, %v1285
        %vm1598 = vcmp.le.f32.partialorder %v1597, 0.7853982
        %vm1599 = vcmp.lt.s32.totalorder %v1285, 0
        %v1600 = vand.u32 %v1285, 2139095040
        %v1601 = vshrl.u32 %v1600, 23
        %v1602 = vsub.s32 %v1601, 127
        %v1603 = vand.u32 2147483647, %v1285
        %v1604 = vand.u32 %v1603, 8388607
        %v1605 = vor.u32 %v1604, 8388608
        %v1606 = vsub.s32 0, %v1605
        %v1607 = vadd.s32 %v1602, 1
        %vm1608 = vcmp.gt.s32.totalorder %v1607, 0
        %v1609 = vsel %vm1608, %v1607, 0
        %v1610 = vshrl.u32 %v1609, 5
        %v1611 = vand.u32 %v1609, 31
        %v1612 = vsub.s32 32, %v1611
        %v1613 = vshrl.u32 683565275, %v1612
        %v1614 = vshll.u32 683565275, %v1611
        %v1615 = vshrl.u32 2475754826, %v1612
        %v1616 = vor.u32 %v1614, %v1615
        %v1617 = vshll.u32 2475754826, %v1611
        %v1618 = vshrl.u32 2131351028, %v1612
        %v1619 = vor.u32 %v1617, %v1618
        %v1620 = vshll.u32 2131351028, %v1611
        %v1621 = vshrl.u32 2102212464, %v1612
        %v1622 = vor.u32 %v1620, %v1621
        %v1623 = vshll.u32 2102212464, %v1611
        %v1624 = vshrl.u32 920167782, %v1612
        %v1625 = vor.u32 %v1623, %v1624
        %v1626 = vshll.u32 920167782, %v1611
        %v1627 = vshrl.u32 1326507024, %v1612
        %v1628 = vor.u32 %v1626, %v1627
        %vm1629 = vcmp.lt.s32.totalorder %v1610, 1
        %vm1630 = vcmp.lt.s32.totalorder %v1610, 2
        %vm1631 = vcmp.lt.s32.totalorder %v1610, 3
        %vm1632 = vcmp.lt.s32.totalorder %v1610, 4
        %v1633 = vsel %vm1629, %v1613, %v1616
        %v1634 = vsel %vm1632, %v1622, 2102212464
        %v1635 = vsel %vm1631, %v1619, %v1634
        %v1636 = vsel %vm1630, %v1633, %v1635
        %v1637 = vsel %vm1629, %v1616, %v1619
        %v1638 = vsel %vm1632, %v1625, 920167782
        %v1639 = vsel %vm1631, %v1622, %v1638
        %v1640 = vsel %vm1630, %v1637, %v1639
        %v1641 = vsel %vm1629, %v1619, %v1622
        %v1642 = vsel %vm1632, %v1628, 1326507024
        %v1643 = vsel %vm1631, %v1625, %v1642
        %v1644 = vsel %vm1630, %v1641, %v1643
        %v1645 = vshll.u32 %v1605, 8
        %v1646 = vand.u32 %v1645, 65535
        %v1647 = vshrl.u32 %v1645, 16
        %v1648 = vand.u32 %v1644, 65535
        %v1649 = vshrl.u32 %v1644, 16
        %v1650 = vmul.u32 %v1646, %v1648
        %v1651 = vmul.u32 %v1646, %v1649
        %v1652 = vmul.u32 %v1647, %v1648
        %v1653 = vmul.u32 %v1647, %v1649
        %v1654 = vshll.u32 %v1651, 16
        %v1655 = vshrl.u32 %v1651, 16
        %v1656 = vshll.u32 %v1652, 16
        %v1657 = vshrl.u32 %v1652, 16
        %vm1658 = vc.u32 %v1650, %v1654
        %v1659 = vsel %vm1658, 1, 0
        %v1660 = vadd.s32 %v1650, %v1654
        %v1661 = vadd.s32 %v1653, %v1659
        %vm1662 = vc.u32 %v1660, %v1656
        %v1663 = vsel %vm1662, 1, 0
        %v1664 = vadd.s32 %v1660, %v1656
        %v1665 = vadd.s32 %v1661, %v1663
        %v1666 = vadd.s32 %v1665, %v1655
        %v1667 = vadd.s32 %v1666, %v1657
        %v1668 = vand.u32 %v1645, 65535
        %v1669 = vshrl.u32 %v1645, 16
        %v1670 = vand.u32 %v1640, 65535
        %v1671 = vshrl.u32 %v1640, 16
        %v1672 = vmul.u32 %v1668, %v1670
        %v1673 = vmul.u32 %v1668, %v1671
        %v1674 = vmul.u32 %v1669, %v1670
        %v1675 = vmul.u32 %v1669, %v1671
        %v1676 = vshll.u32 %v1673, 16
        %v1677 = vshrl.u32 %v1673, 16
        %v1678 = vshll.u32 %v1674, 16
        %v1679 = vshrl.u32 %v1674, 16
        %vm1680 = vc.u32 %v1672, %v1676
        %v1681 = vsel %vm1680, 1, 0
        %v1682 = vadd.s32 %v1672, %v1676
        %v1683 = vadd.s32 %v1675, %v1681
        %vm1684 = vc.u32 %v1682, %v1678
        %v1685 = vsel %vm1684, 1, 0
        %v1686 = vadd.s32 %v1682, %v1678
        %v1687 = vadd.s32 %v1683, %v1685
        %v1688 = vadd.s32 %v1687, %v1677
        %v1689 = vadd.s32 %v1688, %v1679
        %v1690 = vmul.u32 %v1645, %v1636
        %v1691 = vadd.s32 %v1667, %v1686
        %vm1692 = vc.u32 %v1667, %v1686
        %v1693 = vadd.s32 %v1689, 1
        %v1694 = vsel %vm1692, %v1693, %v1689
        %v1695 = vadd.s32 %v1690, %v1694
        %v1696 = vadd.s32 %v1695, 536870912
        %v1697 = vshrl.u32 %v1696, 30
        %v1698 = vshll.u32 %v1697, 30
        %v1699 = vsub.s32 %v1695, %v1698
        %vm1700 = vcmp.lt.s32.totalorder %v1699, 0
        %v1701 = vsub.s32 0, %v1699
        %v1702 = vsel %vm1700, %v1701, %v1699
        %v1703 = vclz %v1702
        %v1704 = vsub.s32 %v1703, 2
        %vm1705 = vcmp.gt.s32.totalorder 0, %v1704
        %v1706 = vsel %vm1705, 0, %v1704
        %v1707 = vsub.s32 32, %v1706
        %v1708 = vshll.u32 %v1699, %v1706
        %v1709 = vshrl.u32 %v1691, %v1707
        %v1710 = vor.u32 %v1708, %v1709
        %v1711 = vsub.s32 4294967266, %v1706
        %v1712 = vadd.s32 %v1711, 127
        %v1713 = vshll.u32 %v1712, 23
        %v1714 = vor.u32 4788187, %v1713
        %v1715 = vand.u32 2147483647, %v1714
        %v1717 = vcvt.s32.f32 %v1710
        %v1718 = vmul.f32 %v1717, %v1715
        %v1719 = vxor.u32 %v1718, 2147483648
        %v1720 = vsel %vm1599, %v1719, %v1718
        %v1721 = vsub.s32 4, %v1697
        %v1722 = vsel %vm1599, %v1721, %v1697
        %v1723 = vsel %vm1598, %v1285, %v1720
        %v1724 = vsel %vm1598, 0, %v1722
        %v1725 = vmul.f32 %v1723, %v1723
        %v1726 = vmul.f32 %v1725, -0.001358992
        %v1727 = vadd.f32 %v1726, 0.041655596
        %v1728 = vmul.f32 %v1725, %v1727
        %v1729 = vadd.f32 %v1728, -0.4999988
        %v1730 = vmul.f32 %v1725, %v1729
        %v1731 = vadd.f32 1.0, %v1730
        %v1732 = vmul.f32 %v1723, %v1723
        %v1733 = vmul.f32 %v1732, -0.00019511016
        %v1734 = vadd.f32 %v1733, 0.008332121
        %v1735 = vmul.f32 %v1732, %v1734
        %v1736 = vadd.f32 %v1735, -0.16666654
        %v1737 = vmul.f32 %v1732, %v1736
        %v1738 = vadd.f32 %v1737, 1.0
        %v1739 = vmul.f32 %v1738, %v1723
        %vm1740 = vweird.f32 %v1285
        %v1741 = vadd.s32 %v1724, 3
        %v1742 = vand.u32 %v1741, 3
        %vm1743 = vcmp.lt.s32.totalorder %v1742, 2
        %vm1744 = vcmp.eq.s32.totalorder %v1742, 0
        %v1745 = vxor.u32 %v1739, 2147483648
        %v1746 = vsel %vm1744, %v1731, %v1745
        %vm1747 = vcmp.eq.s32.totalorder %v1742, 2
        %v1748 = vxor.u32 %v1731, 2147483648
        %v1749 = vsel %vm1747, %v1748, %v1739
        %v1750 = vsel %vm1743, %v1746, %v1749
        %v1751 = vsel %vm1740, nan, %v1750
        %v1752 = vand.u32 2147483647, %v1286
        %vm1753 = vcmp.le.f32.partialorder %v1752, 0.7853982
        %vm1754 = vcmp.lt.s32.totalorder %v1286, 0
        %v1755 = vand.u32 %v1286, 2139095040
        %v1756 = vshrl.u32 %v1755, 23
        %v1757 = vsub.s32 %v1756, 127
        %v1758 = vand.u32 2147483647, %v1286
        %v1759 = vand.u32 %v1758, 8388607
        %v1760 = vor.u32 %v1759, 8388608
        %v1761 = vsub.s32 0, %v1760
        %v1762 = vadd.s32 %v1757, 1
        %vm1763 = vcmp.gt.s32.totalorder %v1762, 0
        %v1764 = vsel %vm1763, %v1762, 0
        %v1765 = vshrl.u32 %v1764, 5
        %v1766 = vand.u32 %v1764, 31
        %v1767 = vsub.s32 32, %v1766
        %v1768 = vshrl.u32 683565275, %v1767
        %v1769 = vshll.u32 683565275, %v1766
        %v1770 = vshrl.u32 2475754826, %v1767
        %v1771 = vor.u32 %v1769, %v1770
        %v1772 = vshll.u32 2475754826, %v1766
        %v1773 = vshrl.u32 2131351028, %v1767
        %v1774 = vor.u32 %v1772, %v1773
        %v1775 = vshll.u32 2131351028, %v1766
        %v1776 = vshrl.u32 2102212464, %v1767
        %v1777 = vor.u32 %v1775, %v1776
        %v1778 = vshll.u32 2102212464, %v1766
        %v1779 = vshrl.u32 920167782, %v1767
        %v1780 = vor.u32 %v1778, %v1779
        %v1781 = vshll.u32 920167782, %v1766
        %v1782 = vshrl.u32 1326507024, %v1767
        %v1783 = vor.u32 %v1781, %v1782
        %vm1784 = vcmp.lt.s32.totalorder %v1765, 1
        %vm1785 = vcmp.lt.s32.totalorder %v1765, 2
        %vm1786 = vcmp.lt.s32.totalorder %v1765, 3
        %vm1787 = vcmp.lt.s32.totalorder %v1765, 4
        %v1788 = vsel %vm1784, %v1768, %v1771
        %v1789 = vsel %vm1787, %v1777, 2102212464
        %v1790 = vsel %vm1786, %v1774, %v1789
        %v1791 = vsel %vm1785, %v1788, %v1790
        %v1792 = vsel %vm1784, %v1771, %v1774
        %v1793 = vsel %vm1787, %v1780, 920167782
        %v1794 = vsel %vm1786, %v1777, %v1793
        %v1795 = vsel %vm1785, %v1792, %v1794
        %v1796 = vsel %vm1784, %v1774, %v1777
        %v1797 = vsel %vm1787, %v1783, 1326507024
        %v1798 = vsel %vm1786, %v1780, %v1797
        %v1799 = vsel %vm1785, %v1796, %v1798
        %v1800 = vshll.u32 %v1760, 8
        %v1801 = vand.u32 %v1800, 65535
        %v1802 = vshrl.u32 %v1800, 16
        %v1803 = vand.u32 %v1799, 65535
        %v1804 = vshrl.u32 %v1799, 16
        %v1805 = vmul.u32 %v1801, %v1803
        %v1806 = vmul.u32 %v1801, %v1804
        %v1807 = vmul.u32 %v1802, %v1803
        %v1808 = vmul.u32 %v1802, %v1804
        %v1809 = vshll.u32 %v1806, 16
        %v1810 = vshrl.u32 %v1806, 16
        %v1811 = vshll.u32 %v1807, 16
        %v1812 = vshrl.u32 %v1807, 16
        %vm1813 = vc.u32 %v1805, %v1809
        %v1814 = vsel %vm1813, 1, 0
        %v1815 = vadd.s32 %v1805, %v1809
        %v1816 = vadd.s32 %v1808, %v1814
        %vm1817 = vc.u32 %v1815, %v1811
        %v1818 = vsel %vm1817, 1, 0
        %v1819 = vadd.s32 %v1815, %v1811
        %v1820 = vadd.s32 %v1816, %v1818
        %v1821 = vadd.s32 %v1820, %v1810
        %v1822 = vadd.s32 %v1821, %v1812
        %v1823 = vand.u32 %v1800, 65535
        %v1824 = vshrl.u32 %v1800, 16
        %v1825 = vand.u32 %v1795, 65535
        %v1826 = vshrl.u32 %v1795, 16
        %v1827 = vmul.u32 %v1823, %v1825
        %v1828 = vmul.u32 %v1823, %v1826
        %v1829 = vmul.u32 %v1824, %v1825
        %v1830 = vmul.u32 %v1824, %v1826
        %v1831 = vshll.u32 %v1828, 16
        %v1832 = vshrl.u32 %v1828, 16
        %v1833 = vshll.u32 %v1829, 16
        %v1834 = vshrl.u32 %v1829, 16
        %vm1835 = vc.u32 %v1827, %v1831
        %v1836 = vsel %vm1835, 1, 0
        %v1837 = vadd.s32 %v1827, %v1831
        %v1838 = vadd.s32 %v1830, %v1836
        %vm1839 = vc.u32 %v1837, %v1833
        %v1840 = vsel %vm1839, 1, 0
        %v1841 = vadd.s32 %v1837, %v1833
        %v1842 = vadd.s32 %v1838, %v1840
        %v1843 = vadd.s32 %v1842, %v1832
        %v1844 = vadd.s32 %v1843, %v1834
        %v1845 = vmul.u32 %v1800, %v1791
        %v1846 = vadd.s32 %v1822, %v1841
        %vm1847 = vc.u32 %v1822, %v1841
        %v1848 = vadd.s32 %v1844, 1
        %v1849 = vsel %vm1847, %v1848, %v1844
        %v1850 = vadd.s32 %v1845, %v1849
        %v1851 = vadd.s32 %v1850, 536870912
        %v1852 = vshrl.u32 %v1851, 30
        %v1853 = vshll.u32 %v1852, 30
        %v1854 = vsub.s32 %v1850, %v1853
        %vm1855 = vcmp.lt.s32.totalorder %v1854, 0
        %v1856 = vsub.s32 0, %v1854
        %v1857 = vsel %vm1855, %v1856, %v1854
        %v1858 = vclz %v1857
        %v1859 = vsub.s32 %v1858, 2
        %vm1860 = vcmp.gt.s32.totalorder 0, %v1859
        %v1861 = vsel %vm1860, 0, %v1859
        %v1862 = vsub.s32 32, %v1861
        %v1863 = vshll.u32 %v1854, %v1861
        %v1864 = vshrl.u32 %v1846, %v1862
        %v1865 = vor.u32 %v1863, %v1864
        %v1866 = vsub.s32 4294967266, %v1861
        %v1867 = vadd.s32 %v1866, 127
        %v1868 = vshll.u32 %v1867, 23
        %v1869 = vor.u32 4788187, %v1868
        %v1870 = vand.u32 2147483647, %v1869
        %v1872 = vcvt.s32.f32 %v1865
        %v1873 = vmul.f32 %v1872, %v1870
        %v1874 = vxor.u32 %v1873, 2147483648
        %v1875 = vsel %vm1754, %v1874, %v1873
        %v1876 = vsub.s32 4, %v1852
        %v1877 = vsel %vm1754, %v1876, %v1852
        %v1878 = vsel %vm1753, %v1286, %v1875
        %v1879 = vsel %vm1753, 0, %v1877
        %v1880 = vmul.f32 %v1878, %v1878
        %v1881 = vmul.f32 %v1880, -0.001358992
        %v1882 = vadd.f32 %v1881, 0.041655596
        %v1883 = vmul.f32 %v1880, %v1882
        %v1884 = vadd.f32 %v1883, -0.4999988
        %v1885 = vmul.f32 %v1880, %v1884
        %v1886 = vadd.f32 1.0, %v1885
        %v1887 = vmul.f32 %v1878, %v1878
        %v1888 = vmul.f32 %v1887, -0.00019511016
        %v1889 = vadd.f32 %v1888, 0.008332121
        %v1890 = vmul.f32 %v1887, %v1889
        %v1891 = vadd.f32 %v1890, -0.16666654
        %v1892 = vmul.f32 %v1887, %v1891
        %v1893 = vadd.f32 %v1892, 1.0
        %v1894 = vmul.f32 %v1893, %v1878
        %vm1895 = vweird.f32 %v1286
        %v1896 = vadd.s32 %v1879, 3
        %v1897 = vand.u32 %v1896, 3
        %vm1898 = vcmp.lt.s32.totalorder %v1897, 2
        %vm1899 = vcmp.eq.s32.totalorder %v1897, 0
        %v1900 = vxor.u32 %v1894, 2147483648
        %v1901 = vsel %vm1899, %v1886, %v1900
        %vm1902 = vcmp.eq.s32.totalorder %v1897, 2
        %v1903 = vxor.u32 %v1886, 2147483648
        %v1904 = vsel %vm1902, %v1903, %v1894
        %v1905 = vsel %vm1898, %v1901, %v1904
        %v1906 = vsel %vm1895, nan, %v1905
        %1908 = vset.pattern.permute.xlu0 0
        %1909 = vperm.xlu0 %1908, %v1258
        %v1910 = vpop.permute.xlu0 %1909
        %1913 = vset.pattern.permute.xlu0 0
        %1914 = vperm.xlu0 %1913, %v1259
        %v1915 = vpop.permute.xlu0 %1914
        %1918 = vset.pattern.permute.xlu0 0
        %1919 = vperm.xlu0 %1918, %v1260
        %v1920 = vpop.permute.xlu0 %1919
        %1923 = vset.pattern.permute.xlu0 0
        %1924 = vperm.xlu0 %1923, %v1261
        %v1925 = vpop.permute.xlu0 %1924
        %v1927 = vrcp.pop %v1910
        %v1928 = vmul.f32 %v1910, %v1927
        %v1929 = vsub.f32 1.0, %v1928
        %v1930 = vmul.f32 %v1927, %v1929
        %v1931 = vadd.f32 %v1927, %v1930
        %vm1932 = vweird.f32 %v1910
        %vm1933 = vweird.f32 %v1927
        %vm1934 = vmor %vm1932, %vm1933
        %v1935 = vsel %vm1934, %v1927, %v1931
        %v1936 = vand.u32 2147483647, %v1910
        %vm1937 = vcmp.eq.f32.partialorder %v1936, 8.507059e+37
        %v1938 = vand.u32 %v1910, 2147483648
        %v1939 = vor.u32 1.1754944e-38, %v1938
        %v1940 = vsel %vm1937, %v1939, %v1935
        %v1941 = vmul.f32 %v1441, %v1940
        %v1942 = vrcp.pop %v1915
        %v1943 = vmul.f32 %v1915, %v1942
        %v1944 = vsub.f32 1.0, %v1943
        %v1945 = vmul.f32 %v1942, %v1944
        %v1946 = vadd.f32 %v1942, %v1945
        %vm1947 = vweird.f32 %v1915
        %vm1948 = vweird.f32 %v1942
        %vm1949 = vmor %vm1947, %vm1948
        %v1950 = vsel %vm1949, %v1942, %v1946
        %v1951 = vand.u32 2147483647, %v1915
        %vm1952 = vcmp.eq.f32.partialorder %v1951, 8.507059e+37
        %v1953 = vand.u32 %v1915, 2147483648
        %v1954 = vor.u32 1.1754944e-38, %v1953
        %v1955 = vsel %vm1952, %v1954, %v1950
        %v1956 = vmul.f32 %v1596, %v1955
        %v1957 = vrcp.pop %v1920
        %v1958 = vmul.f32 %v1920, %v1957
        %v1959 = vsub.f32 1.0, %v1958
        %v1960 = vmul.f32 %v1957, %v1959
        %v1961 = vadd.f32 %v1957, %v1960
        %vm1962 = vweird.f32 %v1920
        %vm1963 = vweird.f32 %v1957
        %vm1964 = vmor %vm1962, %vm1963
        %v1965 = vsel %vm1964, %v1957, %v1961
        %v1966 = vand.u32 2147483647, %v1920
        %vm1967 = vcmp.eq.f32.partialorder %v1966, 8.507059e+37
        %v1968 = vand.u32 %v1920, 2147483648
        %v1969 = vor.u32 1.1754944e-38, %v1968
        %v1970 = vsel %vm1967, %v1969, %v1965
        %v1971 = vmul.f32 %v1751, %v1970
        %v1972 = vrcp.pop %v1925
        %v1973 = vmul.f32 %v1925, %v1972
        %v1974 = vsub.f32 1.0, %v1973
        %v1975 = vmul.f32 %v1972, %v1974
        %v1976 = vadd.f32 %v1972, %v1975
        %vm1977 = vweird.f32 %v1925
        %vm1978 = vweird.f32 %v1972
        %vm1979 = vmor %vm1977, %vm1978
        %v1980 = vsel %vm1979, %v1972, %v1976
        %v1981 = vand.u32 2147483647, %v1925
        %vm1982 = vcmp.eq.f32.partialorder %v1981, 8.507059e+37
        %v1983 = vand.u32 %v1925, 2147483648
        %v1984 = vor.u32 1.1754944e-38, %v1983
        %v1985 = vsel %vm1982, %v1984, %v1980
        %v1986 = vmul.f32 %v1906, %v1985
        %v1987 = vsel %vm1254, 1, 0
        %v1988 = vsel %vm1255, 1, 0
        %v1989 = vsel %vm1256, 1, 0
        %v1990 = vsel %vm1257, 1, 0
        %1991 = vset.pattern.permute.xlu0 0
        %1992 = vperm.xlu0 %1991, %v1987
        %v1993 = vpop.permute.xlu0 %1992
        %1994 = vset.pattern.permute.xlu0 0
        %1995 = vperm.xlu0 %1994, %v1988
        %v1996 = vpop.permute.xlu0 %1995
        %1997 = vset.pattern.permute.xlu0 0
        %1998 = vperm.xlu0 %1997, %v1989
        %v1999 = vpop.permute.xlu0 %1998
        %2000 = vset.pattern.permute.xlu0 0
        %2001 = vperm.xlu0 %2000, %v1990
        %v2002 = vpop.permute.xlu0 %2001
        %vm2003 = vcmp.eq.s32.totalorder %v1993, 1
        %vm2004 = vcmp.eq.s32.totalorder %v1996, 1
        %vm2005 = vcmp.eq.s32.totalorder %v1999, 1
        %vm2006 = vcmp.eq.s32.totalorder %v2002, 1
        %v2007 = vsel %vm2003, %v1941, %v1262
        %v2008 = vsel %vm2004, %v1956, %v1262
        %v2009 = vsel %vm2005, %v1971, %v1262
        %v2010 = vsel %vm2006, %v1986, %v1262
        %vm2011 = vcmp.lt.f32.partialorder %v1246, 4.0
        %vm2012 = vcmp.lt.f32.partialorder %v1247, 4.0
        %vm2013 = vcmp.lt.f32.partialorder %v1248, 4.0
        %vm2014 = vcmp.lt.f32.partialorder %v1249, 4.0
        %v2015 = vmul.f32 %v1246, 3.1415927
        %v2016 = vmul.f32 %v1247, 3.1415927
        %v2017 = vmul.f32 %v1248, 3.1415927
        %v2018 = vmul.f32 %v1249, 3.1415927
        %v2019 = vrcp.pop 4.0
        %v2020 = vmul.f32 4.0, %v2019
        %v2021 = vsub.f32 1.0, %v2020
        %v2022 = vmul.f32 %v2019, %v2021
        %v2023 = vadd.f32 %v2019, %v2022
        %vm2024 = vweird.f32 %v2019
        %v2025 = vsel %vm2024, %v2019, %v2023
        %v2026 = vmul.f32 %v2015, %v2025
        %v2027 = vmul.f32 %v2016, %v2025
        %v2028 = vmul.f32 %v2017, %v2025
        %v2029 = vmul.f32 %v2018, %v2025
        %v2030 = vand.u32 2147483647, %v2026
        %vm2031 = vcmp.le.f32.partialorder %v2030, 0.7853982
        %vm2032 = vcmp.lt.s32.totalorder %v2026, 0
        %v2033 = vand.u32 %v2026, 2139095040
        %v2034 = vshrl.u32 %v2033, 23
        %v2035 = vsub.s32 %v2034, 127
        %v2036 = vand.u32 2147483647, %v2026
        %v2037 = vand.u32 %v2036, 8388607
        %v2038 = vor.u32 %v2037, 8388608
        %v2039 = vsub.s32 0, %v2038
        %v2040 = vadd.s32 %v2035, 1
        %vm2041 = vcmp.gt.s32.totalorder %v2040, 0
        %v2042 = vsel %vm2041, %v2040, 0
        %v2043 = vshrl.u32 %v2042, 5
        %v2044 = vand.u32 %v2042, 31
        %v2045 = vsub.s32 32, %v2044
        %v2046 = vshrl.u32 683565275, %v2045
        %v2047 = vshll.u32 683565275, %v2044
        %v2048 = vshrl.u32 2475754826, %v2045
        %v2049 = vor.u32 %v2047, %v2048
        %v2050 = vshll.u32 2475754826, %v2044
        %v2051 = vshrl.u32 2131351028, %v2045
        %v2052 = vor.u32 %v2050, %v2051
        %v2053 = vshll.u32 2131351028, %v2044
        %v2054 = vshrl.u32 2102212464, %v2045
        %v2055 = vor.u32 %v2053, %v2054
        %v2056 = vshll.u32 2102212464, %v2044
        %v2057 = vshrl.u32 920167782, %v2045
        %v2058 = vor.u32 %v2056, %v2057
        %v2059 = vshll.u32 920167782, %v2044
        %v2060 = vshrl.u32 1326507024, %v2045
        %v2061 = vor.u32 %v2059, %v2060
        %vm2062 = vcmp.lt.s32.totalorder %v2043, 1
        %vm2063 = vcmp.lt.s32.totalorder %v2043, 2
        %vm2064 = vcmp.lt.s32.totalorder %v2043, 3
        %vm2065 = vcmp.lt.s32.totalorder %v2043, 4
        %v2066 = vsel %vm2062, %v2046, %v2049
        %v2067 = vsel %vm2065, %v2055, 2102212464
        %v2068 = vsel %vm2064, %v2052, %v2067
        %v2069 = vsel %vm2063, %v2066, %v2068
        %v2070 = vsel %vm2062, %v2049, %v2052
        %v2071 = vsel %vm2065, %v2058, 920167782
        %v2072 = vsel %vm2064, %v2055, %v2071
        %v2073 = vsel %vm2063, %v2070, %v2072
        %v2074 = vsel %vm2062, %v2052, %v2055
        %v2075 = vsel %vm2065, %v2061, 1326507024
        %v2076 = vsel %vm2064, %v2058, %v2075
        %v2077 = vsel %vm2063, %v2074, %v2076
        %v2078 = vshll.u32 %v2038, 8
        %v2079 = vand.u32 %v2078, 65535
        %v2080 = vshrl.u32 %v2078, 16
        %v2081 = vand.u32 %v2077, 65535
        %v2082 = vshrl.u32 %v2077, 16
        %v2083 = vmul.u32 %v2079, %v2081
        %v2084 = vmul.u32 %v2079, %v2082
        %v2085 = vmul.u32 %v2080, %v2081
        %v2086 = vmul.u32 %v2080, %v2082
        %v2087 = vshll.u32 %v2084, 16
        %v2088 = vshrl.u32 %v2084, 16
        %v2089 = vshll.u32 %v2085, 16
        %v2090 = vshrl.u32 %v2085, 16
        %vm2091 = vc.u32 %v2083, %v2087
        %v2092 = vsel %vm2091, 1, 0
        %v2093 = vadd.s32 %v2083, %v2087
        %v2094 = vadd.s32 %v2086, %v2092
        %vm2095 = vc.u32 %v2093, %v2089
        %v2096 = vsel %vm2095, 1, 0
        %v2097 = vadd.s32 %v2093, %v2089
        %v2098 = vadd.s32 %v2094, %v2096
        %v2099 = vadd.s32 %v2098, %v2088
        %v2100 = vadd.s32 %v2099, %v2090
        %v2101 = vand.u32 %v2078, 65535
        %v2102 = vshrl.u32 %v2078, 16
        %v2103 = vand.u32 %v2073, 65535
        %v2104 = vshrl.u32 %v2073, 16
        %v2105 = vmul.u32 %v2101, %v2103
        %v2106 = vmul.u32 %v2101, %v2104
        %v2107 = vmul.u32 %v2102, %v2103
        %v2108 = vmul.u32 %v2102, %v2104
        %v2109 = vshll.u32 %v2106, 16
        %v2110 = vshrl.u32 %v2106, 16
        %v2111 = vshll.u32 %v2107, 16
        %v2112 = vshrl.u32 %v2107, 16
        %vm2113 = vc.u32 %v2105, %v2109
        %v2114 = vsel %vm2113, 1, 0
        %v2115 = vadd.s32 %v2105, %v2109
        %v2116 = vadd.s32 %v2108, %v2114
        %vm2117 = vc.u32 %v2115, %v2111
        %v2118 = vsel %vm2117, 1, 0
        %v2119 = vadd.s32 %v2115, %v2111
        %v2120 = vadd.s32 %v2116, %v2118
        %v2121 = vadd.s32 %v2120, %v2110
        %v2122 = vadd.s32 %v2121, %v2112
        %v2123 = vmul.u32 %v2078, %v2069
        %v2124 = vadd.s32 %v2100, %v2119
        %vm2125 = vc.u32 %v2100, %v2119
        %v2126 = vadd.s32 %v2122, 1
        %v2127 = vsel %vm2125, %v2126, %v2122
        %v2128 = vadd.s32 %v2123, %v2127
        %v2129 = vadd.s32 %v2128, 536870912
        %v2130 = vshrl.u32 %v2129, 30
        %v2131 = vshll.u32 %v2130, 30
        %v2132 = vsub.s32 %v2128, %v2131
        %vm2133 = vcmp.lt.s32.totalorder %v2132, 0
        %v2134 = vsub.s32 0, %v2132
        %v2135 = vsel %vm2133, %v2134, %v2132
        %v2136 = vclz %v2135
        %v2137 = vsub.s32 %v2136, 2
        %vm2138 = vcmp.gt.s32.totalorder 0, %v2137
        %v2139 = vsel %vm2138, 0, %v2137
        %v2140 = vsub.s32 32, %v2139
        %v2141 = vshll.u32 %v2132, %v2139
        %v2142 = vshrl.u32 %v2124, %v2140
        %v2143 = vor.u32 %v2141, %v2142
        %v2144 = vsub.s32 4294967266, %v2139
        %v2145 = vadd.s32 %v2144, 127
        %v2146 = vshll.u32 %v2145, 23
        %v2147 = vor.u32 4788187, %v2146
        %v2148 = vand.u32 2147483647, %v2147
        %v2150 = vcvt.s32.f32 %v2143
        %v2151 = vmul.f32 %v2150, %v2148
        %v2152 = vxor.u32 %v2151, 2147483648
        %v2153 = vsel %vm2032, %v2152, %v2151
        %v2154 = vsub.s32 4, %v2130
        %v2155 = vsel %vm2032, %v2154, %v2130
        %v2156 = vsel %vm2031, %v2026, %v2153
        %v2157 = vsel %vm2031, 0, %v2155
        %v2158 = vmul.f32 %v2156, %v2156
        %v2159 = vmul.f32 %v2158, -0.001358992
        %v2160 = vadd.f32 %v2159, 0.041655596
        %v2161 = vmul.f32 %v2158, %v2160
        %v2162 = vadd.f32 %v2161, -0.4999988
        %v2163 = vmul.f32 %v2158, %v2162
        %v2164 = vadd.f32 1.0, %v2163
        %v2165 = vmul.f32 %v2156, %v2156
        %v2166 = vmul.f32 %v2165, -0.00019511016
        %v2167 = vadd.f32 %v2166, 0.008332121
        %v2168 = vmul.f32 %v2165, %v2167
        %v2169 = vadd.f32 %v2168, -0.16666654
        %v2170 = vmul.f32 %v2165, %v2169
        %v2171 = vadd.f32 %v2170, 1.0
        %v2172 = vmul.f32 %v2171, %v2156
        %vm2173 = vweird.f32 %v2026
        %v2174 = vand.u32 %v2157, 3
        %vm2175 = vcmp.lt.s32.totalorder %v2174, 2
        %vm2176 = vcmp.eq.s32.totalorder %v2174, 0
        %v2177 = vxor.u32 %v2172, 2147483648
        %v2178 = vsel %vm2176, %v2164, %v2177
        %vm2179 = vcmp.eq.s32.totalorder %v2174, 2
        %v2180 = vxor.u32 %v2164, 2147483648
        %v2181 = vsel %vm2179, %v2180, %v2172
        %v2182 = vsel %vm2175, %v2178, %v2181
        %v2183 = vsel %vm2173, nan, %v2182
        %v2184 = vand.u32 2147483647, %v2027
        %vm2185 = vcmp.le.f32.partialorder %v2184, 0.7853982
        %vm2186 = vcmp.lt.s32.totalorder %v2027, 0
        %v2187 = vand.u32 %v2027, 2139095040
        %v2188 = vshrl.u32 %v2187, 23
        %v2189 = vsub.s32 %v2188, 127
        %v2190 = vand.u32 2147483647, %v2027
        %v2191 = vand.u32 %v2190, 8388607
        %v2192 = vor.u32 %v2191, 8388608
        %v2193 = vsub.s32 0, %v2192
        %v2194 = vadd.s32 %v2189, 1
        %vm2195 = vcmp.gt.s32.totalorder %v2194, 0
        %v2196 = vsel %vm2195, %v2194, 0
        %v2197 = vshrl.u32 %v2196, 5
        %v2198 = vand.u32 %v2196, 31
        %v2199 = vsub.s32 32, %v2198
        %v2200 = vshrl.u32 683565275, %v2199
        %v2201 = vshll.u32 683565275, %v2198
        %v2202 = vshrl.u32 2475754826, %v2199
        %v2203 = vor.u32 %v2201, %v2202
        %v2204 = vshll.u32 2475754826, %v2198
        %v2205 = vshrl.u32 2131351028, %v2199
        %v2206 = vor.u32 %v2204, %v2205
        %v2207 = vshll.u32 2131351028, %v2198
        %v2208 = vshrl.u32 2102212464, %v2199
        %v2209 = vor.u32 %v2207, %v2208
        %v2210 = vshll.u32 2102212464, %v2198
        %v2211 = vshrl.u32 920167782, %v2199
        %v2212 = vor.u32 %v2210, %v2211
        %v2213 = vshll.u32 920167782, %v2198
        %v2214 = vshrl.u32 1326507024, %v2199
        %v2215 = vor.u32 %v2213, %v2214
        %vm2216 = vcmp.lt.s32.totalorder %v2197, 1
        %vm2217 = vcmp.lt.s32.totalorder %v2197, 2
        %vm2218 = vcmp.lt.s32.totalorder %v2197, 3
        %vm2219 = vcmp.lt.s32.totalorder %v2197, 4
        %v2220 = vsel %vm2216, %v2200, %v2203
        %v2221 = vsel %vm2219, %v2209, 2102212464
        %v2222 = vsel %vm2218, %v2206, %v2221
        %v2223 = vsel %vm2217, %v2220, %v2222
        %v2224 = vsel %vm2216, %v2203, %v2206
        %v2225 = vsel %vm2219, %v2212, 920167782
        %v2226 = vsel %vm2218, %v2209, %v2225
        %v2227 = vsel %vm2217, %v2224, %v2226
        %v2228 = vsel %vm2216, %v2206, %v2209
        %v2229 = vsel %vm2219, %v2215, 1326507024
        %v2230 = vsel %vm2218, %v2212, %v2229
        %v2231 = vsel %vm2217, %v2228, %v2230
        %v2232 = vshll.u32 %v2192, 8
        %v2233 = vand.u32 %v2232, 65535
        %v2234 = vshrl.u32 %v2232, 16
        %v2235 = vand.u32 %v2231, 65535
        %v2236 = vshrl.u32 %v2231, 16
        %v2237 = vmul.u32 %v2233, %v2235
        %v2238 = vmul.u32 %v2233, %v2236
        %v2239 = vmul.u32 %v2234, %v2235
        %v2240 = vmul.u32 %v2234, %v2236
        %v2241 = vshll.u32 %v2238, 16
        %v2242 = vshrl.u32 %v2238, 16
        %v2243 = vshll.u32 %v2239, 16
        %v2244 = vshrl.u32 %v2239, 16
        %vm2245 = vc.u32 %v2237, %v2241
        %v2246 = vsel %vm2245, 1, 0
        %v2247 = vadd.s32 %v2237, %v2241
        %v2248 = vadd.s32 %v2240, %v2246
        %vm2249 = vc.u32 %v2247, %v2243
        %v2250 = vsel %vm2249, 1, 0
        %v2251 = vadd.s32 %v2247, %v2243
        %v2252 = vadd.s32 %v2248, %v2250
        %v2253 = vadd.s32 %v2252, %v2242
        %v2254 = vadd.s32 %v2253, %v2244
        %v2255 = vand.u32 %v2232, 65535
        %v2256 = vshrl.u32 %v2232, 16
        %v2257 = vand.u32 %v2227, 65535
        %v2258 = vshrl.u32 %v2227, 16
        %v2259 = vmul.u32 %v2255, %v2257
        %v2260 = vmul.u32 %v2255, %v2258
        %v2261 = vmul.u32 %v2256, %v2257
        %v2262 = vmul.u32 %v2256, %v2258
        %v2263 = vshll.u32 %v2260, 16
        %v2264 = vshrl.u32 %v2260, 16
        %v2265 = vshll.u32 %v2261, 16
        %v2266 = vshrl.u32 %v2261, 16
        %vm2267 = vc.u32 %v2259, %v2263
        %v2268 = vsel %vm2267, 1, 0
        %v2269 = vadd.s32 %v2259, %v2263
        %v2270 = vadd.s32 %v2262, %v2268
        %vm2271 = vc.u32 %v2269, %v2265
        %v2272 = vsel %vm2271, 1, 0
        %v2273 = vadd.s32 %v2269, %v2265
        %v2274 = vadd.s32 %v2270, %v2272
        %v2275 = vadd.s32 %v2274, %v2264
        %v2276 = vadd.s32 %v2275, %v2266
        %v2277 = vmul.u32 %v2232, %v2223
        %v2278 = vadd.s32 %v2254, %v2273
        %vm2279 = vc.u32 %v2254, %v2273
        %v2280 = vadd.s32 %v2276, 1
        %v2281 = vsel %vm2279, %v2280, %v2276
        %v2282 = vadd.s32 %v2277, %v2281
        %v2283 = vadd.s32 %v2282, 536870912
        %v2284 = vshrl.u32 %v2283, 30
        %v2285 = vshll.u32 %v2284, 30
        %v2286 = vsub.s32 %v2282, %v2285
        %vm2287 = vcmp.lt.s32.totalorder %v2286, 0
        %v2288 = vsub.s32 0, %v2286
        %v2289 = vsel %vm2287, %v2288, %v2286
        %v2290 = vclz %v2289
        %v2291 = vsub.s32 %v2290, 2
        %vm2292 = vcmp.gt.s32.totalorder 0, %v2291
        %v2293 = vsel %vm2292, 0, %v2291
        %v2294 = vsub.s32 32, %v2293
        %v2295 = vshll.u32 %v2286, %v2293
        %v2296 = vshrl.u32 %v2278, %v2294
        %v2297 = vor.u32 %v2295, %v2296
        %v2298 = vsub.s32 4294967266, %v2293
        %v2299 = vadd.s32 %v2298, 127
        %v2300 = vshll.u32 %v2299, 23
        %v2301 = vor.u32 4788187, %v2300
        %v2302 = vand.u32 2147483647, %v2301
        %v2304 = vcvt.s32.f32 %v2297
        %v2305 = vmul.f32 %v2304, %v2302
        %v2306 = vxor.u32 %v2305, 2147483648
        %v2307 = vsel %vm2186, %v2306, %v2305
        %v2308 = vsub.s32 4, %v2284
        %v2309 = vsel %vm2186, %v2308, %v2284
        %v2310 = vsel %vm2185, %v2027, %v2307
        %v2311 = vsel %vm2185, 0, %v2309
        %v2312 = vmul.f32 %v2310, %v2310
        %v2313 = vmul.f32 %v2312, -0.001358992
        %v2314 = vadd.f32 %v2313, 0.041655596
        %v2315 = vmul.f32 %v2312, %v2314
        %v2316 = vadd.f32 %v2315, -0.4999988
        %v2317 = vmul.f32 %v2312, %v2316
        %v2318 = vadd.f32 1.0, %v2317
        %v2319 = vmul.f32 %v2310, %v2310
        %v2320 = vmul.f32 %v2319, -0.00019511016
        %v2321 = vadd.f32 %v2320, 0.008332121
        %v2322 = vmul.f32 %v2319, %v2321
        %v2323 = vadd.f32 %v2322, -0.16666654
        %v2324 = vmul.f32 %v2319, %v2323
        %v2325 = vadd.f32 %v2324, 1.0
        %v2326 = vmul.f32 %v2325, %v2310
        %vm2327 = vweird.f32 %v2027
        %v2328 = vand.u32 %v2311, 3
        %vm2329 = vcmp.lt.s32.totalorder %v2328, 2
        %vm2330 = vcmp.eq.s32.totalorder %v2328, 0
        %v2331 = vxor.u32 %v2326, 2147483648
        %v2332 = vsel %vm2330, %v2318, %v2331
        %vm2333 = vcmp.eq.s32.totalorder %v2328, 2
        %v2334 = vxor.u32 %v2318, 2147483648
        %v2335 = vsel %vm2333, %v2334, %v2326
        %v2336 = vsel %vm2329, %v2332, %v2335
        %v2337 = vsel %vm2327, nan, %v2336
        %v2338 = vand.u32 2147483647, %v2028
        %vm2339 = vcmp.le.f32.partialorder %v2338, 0.7853982
        %vm2340 = vcmp.lt.s32.totalorder %v2028, 0
        %v2341 = vand.u32 %v2028, 2139095040
        %v2342 = vshrl.u32 %v2341, 23
        %v2343 = vsub.s32 %v2342, 127
        %v2344 = vand.u32 2147483647, %v2028
        %v2345 = vand.u32 %v2344, 8388607
        %v2346 = vor.u32 %v2345, 8388608
        %v2347 = vsub.s32 0, %v2346
        %v2348 = vadd.s32 %v2343, 1
        %vm2349 = vcmp.gt.s32.totalorder %v2348, 0
        %v2350 = vsel %vm2349, %v2348, 0
        %v2351 = vshrl.u32 %v2350, 5
        %v2352 = vand.u32 %v2350, 31
        %v2353 = vsub.s32 32, %v2352
        %v2354 = vshrl.u32 683565275, %v2353
        %v2355 = vshll.u32 683565275, %v2352
        %v2356 = vshrl.u32 2475754826, %v2353
        %v2357 = vor.u32 %v2355, %v2356
        %v2358 = vshll.u32 2475754826, %v2352
        %v2359 = vshrl.u32 2131351028, %v2353
        %v2360 = vor.u32 %v2358, %v2359
        %v2361 = vshll.u32 2131351028, %v2352
        %v2362 = vshrl.u32 2102212464, %v2353
        %v2363 = vor.u32 %v2361, %v2362
        %v2364 = vshll.u32 2102212464, %v2352
        %v2365 = vshrl.u32 920167782, %v2353
        %v2366 = vor.u32 %v2364, %v2365
        %v2367 = vshll.u32 920167782, %v2352
        %v2368 = vshrl.u32 1326507024, %v2353
        %v2369 = vor.u32 %v2367, %v2368
        %vm2370 = vcmp.lt.s32.totalorder %v2351, 1
        %vm2371 = vcmp.lt.s32.totalorder %v2351, 2
        %vm2372 = vcmp.lt.s32.totalorder %v2351, 3
        %vm2373 = vcmp.lt.s32.totalorder %v2351, 4
        %v2374 = vsel %vm2370, %v2354, %v2357
        %v2375 = vsel %vm2373, %v2363, 2102212464
        %v2376 = vsel %vm2372, %v2360, %v2375
        %v2377 = vsel %vm2371, %v2374, %v2376
        %v2378 = vsel %vm2370, %v2357, %v2360
        %v2379 = vsel %vm2373, %v2366, 920167782
        %v2380 = vsel %vm2372, %v2363, %v2379
        %v2381 = vsel %vm2371, %v2378, %v2380
        %v2382 = vsel %vm2370, %v2360, %v2363
        %v2383 = vsel %vm2373, %v2369, 1326507024
        %v2384 = vsel %vm2372, %v2366, %v2383
        %v2385 = vsel %vm2371, %v2382, %v2384
        %v2386 = vshll.u32 %v2346, 8
        %v2387 = vand.u32 %v2386, 65535
        %v2388 = vshrl.u32 %v2386, 16
        %v2389 = vand.u32 %v2385, 65535
        %v2390 = vshrl.u32 %v2385, 16
        %v2391 = vmul.u32 %v2387, %v2389
        %v2392 = vmul.u32 %v2387, %v2390
        %v2393 = vmul.u32 %v2388, %v2389
        %v2394 = vmul.u32 %v2388, %v2390
        %v2395 = vshll.u32 %v2392, 16
        %v2396 = vshrl.u32 %v2392, 16
        %v2397 = vshll.u32 %v2393, 16
        %v2398 = vshrl.u32 %v2393, 16
        %vm2399 = vc.u32 %v2391, %v2395
        %v2400 = vsel %vm2399, 1, 0
        %v2401 = vadd.s32 %v2391, %v2395
        %v2402 = vadd.s32 %v2394, %v2400
        %vm2403 = vc.u32 %v2401, %v2397
        %v2404 = vsel %vm2403, 1, 0
        %v2405 = vadd.s32 %v2401, %v2397
        %v2406 = vadd.s32 %v2402, %v2404
        %v2407 = vadd.s32 %v2406, %v2396
        %v2408 = vadd.s32 %v2407, %v2398
        %v2409 = vand.u32 %v2386, 65535
        %v2410 = vshrl.u32 %v2386, 16
        %v2411 = vand.u32 %v2381, 65535
        %v2412 = vshrl.u32 %v2381, 16
        %v2413 = vmul.u32 %v2409, %v2411
        %v2414 = vmul.u32 %v2409, %v2412
        %v2415 = vmul.u32 %v2410, %v2411
        %v2416 = vmul.u32 %v2410, %v2412
        %v2417 = vshll.u32 %v2414, 16
        %v2418 = vshrl.u32 %v2414, 16
        %v2419 = vshll.u32 %v2415, 16
        %v2420 = vshrl.u32 %v2415, 16
        %vm2421 = vc.u32 %v2413, %v2417
        %v2422 = vsel %vm2421, 1, 0
        %v2423 = vadd.s32 %v2413, %v2417
        %v2424 = vadd.s32 %v2416, %v2422
        %vm2425 = vc.u32 %v2423, %v2419
        %v2426 = vsel %vm2425, 1, 0
        %v2427 = vadd.s32 %v2423, %v2419
        %v2428 = vadd.s32 %v2424, %v2426
        %v2429 = vadd.s32 %v2428, %v2418
        %v2430 = vadd.s32 %v2429, %v2420
        %v2431 = vmul.u32 %v2386, %v2377
        %v2432 = vadd.s32 %v2408, %v2427
        %vm2433 = vc.u32 %v2408, %v2427
        %v2434 = vadd.s32 %v2430, 1
        %v2435 = vsel %vm2433, %v2434, %v2430
        %v2436 = vadd.s32 %v2431, %v2435
        %v2437 = vadd.s32 %v2436, 536870912
        %v2438 = vshrl.u32 %v2437, 30
        %v2439 = vshll.u32 %v2438, 30
        %v2440 = vsub.s32 %v2436, %v2439
        %vm2441 = vcmp.lt.s32.totalorder %v2440, 0
        %v2442 = vsub.s32 0, %v2440
        %v2443 = vsel %vm2441, %v2442, %v2440
        %v2444 = vclz %v2443
        %v2445 = vsub.s32 %v2444, 2
        %vm2446 = vcmp.gt.s32.totalorder 0, %v2445
        %v2447 = vsel %vm2446, 0, %v2445
        %v2448 = vsub.s32 32, %v2447
        %v2449 = vshll.u32 %v2440, %v2447
        %v2450 = vshrl.u32 %v2432, %v2448
        %v2451 = vor.u32 %v2449, %v2450
        %v2452 = vsub.s32 4294967266, %v2447
        %v2453 = vadd.s32 %v2452, 127
        %v2454 = vshll.u32 %v2453, 23
        %v2455 = vor.u32 4788187, %v2454
        %v2456 = vand.u32 2147483647, %v2455
        %v2458 = vcvt.s32.f32 %v2451
        %v2459 = vmul.f32 %v2458, %v2456
        %v2460 = vxor.u32 %v2459, 2147483648
        %v2461 = vsel %vm2340, %v2460, %v2459
        %v2462 = vsub.s32 4, %v2438
        %v2463 = vsel %vm2340, %v2462, %v2438
        %v2464 = vsel %vm2339, %v2028, %v2461
        %v2465 = vsel %vm2339, 0, %v2463
        %v2466 = vmul.f32 %v2464, %v2464
        %v2467 = vmul.f32 %v2466, -0.001358992
        %v2468 = vadd.f32 %v2467, 0.041655596
        %v2469 = vmul.f32 %v2466, %v2468
        %v2470 = vadd.f32 %v2469, -0.4999988
        %v2471 = vmul.f32 %v2466, %v2470
        %v2472 = vadd.f32 1.0, %v2471
        %v2473 = vmul.f32 %v2464, %v2464
        %v2474 = vmul.f32 %v2473, -0.00019511016
        %v2475 = vadd.f32 %v2474, 0.008332121
        %v2476 = vmul.f32 %v2473, %v2475
        %v2477 = vadd.f32 %v2476, -0.16666654
        %v2478 = vmul.f32 %v2473, %v2477
        %v2479 = vadd.f32 %v2478, 1.0
        %v2480 = vmul.f32 %v2479, %v2464
        %vm2481 = vweird.f32 %v2028
        %v2482 = vand.u32 %v2465, 3
        %vm2483 = vcmp.lt.s32.totalorder %v2482, 2
        %vm2484 = vcmp.eq.s32.totalorder %v2482, 0
        %v2485 = vxor.u32 %v2480, 2147483648
        %v2486 = vsel %vm2484, %v2472, %v2485
        %vm2487 = vcmp.eq.s32.totalorder %v2482, 2
        %v2488 = vxor.u32 %v2472, 2147483648
        %v2489 = vsel %vm2487, %v2488, %v2480
        %v2490 = vsel %vm2483, %v2486, %v2489
        %v2491 = vsel %vm2481, nan, %v2490
        %v2492 = vand.u32 2147483647, %v2029
        %vm2493 = vcmp.le.f32.partialorder %v2492, 0.7853982
        %vm2494 = vcmp.lt.s32.totalorder %v2029, 0
        %v2495 = vand.u32 %v2029, 2139095040
        %v2496 = vshrl.u32 %v2495, 23
        %v2497 = vsub.s32 %v2496, 127
        %v2498 = vand.u32 2147483647, %v2029
        %v2499 = vand.u32 %v2498, 8388607
        %v2500 = vor.u32 %v2499, 8388608
        %v2501 = vsub.s32 0, %v2500
        %v2502 = vadd.s32 %v2497, 1
        %vm2503 = vcmp.gt.s32.totalorder %v2502, 0
        %v2504 = vsel %vm2503, %v2502, 0
        %v2505 = vshrl.u32 %v2504, 5
        %v2506 = vand.u32 %v2504, 31
        %v2507 = vsub.s32 32, %v2506
        %v2508 = vshrl.u32 683565275, %v2507
        %v2509 = vshll.u32 683565275, %v2506
        %v2510 = vshrl.u32 2475754826, %v2507
        %v2511 = vor.u32 %v2509, %v2510
        %v2512 = vshll.u32 2475754826, %v2506
        %v2513 = vshrl.u32 2131351028, %v2507
        %v2514 = vor.u32 %v2512, %v2513
        %v2515 = vshll.u32 2131351028, %v2506
        %v2516 = vshrl.u32 2102212464, %v2507
        %v2517 = vor.u32 %v2515, %v2516
        %v2518 = vshll.u32 2102212464, %v2506
        %v2519 = vshrl.u32 920167782, %v2507
        %v2520 = vor.u32 %v2518, %v2519
        %v2521 = vshll.u32 920167782, %v2506
        %v2522 = vshrl.u32 1326507024, %v2507
        %v2523 = vor.u32 %v2521, %v2522
        %vm2524 = vcmp.lt.s32.totalorder %v2505, 1
        %vm2525 = vcmp.lt.s32.totalorder %v2505, 2
        %vm2526 = vcmp.lt.s32.totalorder %v2505, 3
        %vm2527 = vcmp.lt.s32.totalorder %v2505, 4
        %v2528 = vsel %vm2524, %v2508, %v2511
        %v2529 = vsel %vm2527, %v2517, 2102212464
        %v2530 = vsel %vm2526, %v2514, %v2529
        %v2531 = vsel %vm2525, %v2528, %v2530
        %v2532 = vsel %vm2524, %v2511, %v2514
        %v2533 = vsel %vm2527, %v2520, 920167782
        %v2534 = vsel %vm2526, %v2517, %v2533
        %v2535 = vsel %vm2525, %v2532, %v2534
        %v2536 = vsel %vm2524, %v2514, %v2517
        %v2537 = vsel %vm2527, %v2523, 1326507024
        %v2538 = vsel %vm2526, %v2520, %v2537
        %v2539 = vsel %vm2525, %v2536, %v2538
        %v2540 = vshll.u32 %v2500, 8
        %v2541 = vand.u32 %v2540, 65535
        %v2542 = vshrl.u32 %v2540, 16
        %v2543 = vand.u32 %v2539, 65535
        %v2544 = vshrl.u32 %v2539, 16
        %v2545 = vmul.u32 %v2541, %v2543
        %v2546 = vmul.u32 %v2541, %v2544
        %v2547 = vmul.u32 %v2542, %v2543
        %v2548 = vmul.u32 %v2542, %v2544
        %v2549 = vshll.u32 %v2546, 16
        %v2550 = vshrl.u32 %v2546, 16
        %v2551 = vshll.u32 %v2547, 16
        %v2552 = vshrl.u32 %v2547, 16
        %vm2553 = vc.u32 %v2545, %v2549
        %v2554 = vsel %vm2553, 1, 0
        %v2555 = vadd.s32 %v2545, %v2549
        %v2556 = vadd.s32 %v2548, %v2554
        %vm2557 = vc.u32 %v2555, %v2551
        %v2558 = vsel %vm2557, 1, 0
        %v2559 = vadd.s32 %v2555, %v2551
        %v2560 = vadd.s32 %v2556, %v2558
        %v2561 = vadd.s32 %v2560, %v2550
        %v2562 = vadd.s32 %v2561, %v2552
        %v2563 = vand.u32 %v2540, 65535
        %v2564 = vshrl.u32 %v2540, 16
        %v2565 = vand.u32 %v2535, 65535
        %v2566 = vshrl.u32 %v2535, 16
        %v2567 = vmul.u32 %v2563, %v2565
        %v2568 = vmul.u32 %v2563, %v2566
        %v2569 = vmul.u32 %v2564, %v2565
        %v2570 = vmul.u32 %v2564, %v2566
        %v2571 = vshll.u32 %v2568, 16
        %v2572 = vshrl.u32 %v2568, 16
        %v2573 = vshll.u32 %v2569, 16
        %v2574 = vshrl.u32 %v2569, 16
        %vm2575 = vc.u32 %v2567, %v2571
        %v2576 = vsel %vm2575, 1, 0
        %v2577 = vadd.s32 %v2567, %v2571
        %v2578 = vadd.s32 %v2570, %v2576
        %vm2579 = vc.u32 %v2577, %v2573
        %v2580 = vsel %vm2579, 1, 0
        %v2581 = vadd.s32 %v2577, %v2573
        %v2582 = vadd.s32 %v2578, %v2580
        %v2583 = vadd.s32 %v2582, %v2572
        %v2584 = vadd.s32 %v2583, %v2574
        %v2585 = vmul.u32 %v2540, %v2531
        %v2586 = vadd.s32 %v2562, %v2581
        %vm2587 = vc.u32 %v2562, %v2581
        %v2588 = vadd.s32 %v2584, 1
        %v2589 = vsel %vm2587, %v2588, %v2584
        %v2590 = vadd.s32 %v2585, %v2589
        %v2591 = vadd.s32 %v2590, 536870912
        %v2592 = vshrl.u32 %v2591, 30
        %v2593 = vshll.u32 %v2592, 30
        %v2594 = vsub.s32 %v2590, %v2593
        %vm2595 = vcmp.lt.s32.totalorder %v2594, 0
        %v2596 = vsub.s32 0, %v2594
        %v2597 = vsel %vm2595, %v2596, %v2594
        %v2598 = vclz %v2597
        %v2599 = vsub.s32 %v2598, 2
        %vm2600 = vcmp.gt.s32.totalorder 0, %v2599
        %v2601 = vsel %vm2600, 0, %v2599
        %v2602 = vsub.s32 32, %v2601
        %v2603 = vshll.u32 %v2594, %v2601
        %v2604 = vshrl.u32 %v2586, %v2602
        %v2605 = vor.u32 %v2603, %v2604
        %v2606 = vsub.s32 4294967266, %v2601
        %v2607 = vadd.s32 %v2606, 127
        %v2608 = vshll.u32 %v2607, 23
        %v2609 = vor.u32 4788187, %v2608
        %v2610 = vand.u32 2147483647, %v2609
        %v2612 = vcvt.s32.f32 %v2605
        %v2613 = vmul.f32 %v2612, %v2610
        %v2614 = vxor.u32 %v2613, 2147483648
        %v2615 = vsel %vm2494, %v2614, %v2613
        %v2616 = vsub.s32 4, %v2592
        %v2617 = vsel %vm2494, %v2616, %v2592
        %v2618 = vsel %vm2493, %v2029, %v2615
        %v2619 = vsel %vm2493, 0, %v2617
        %v2620 = vmul.f32 %v2618, %v2618
        %v2621 = vmul.f32 %v2620, -0.001358992
        %v2622 = vadd.f32 %v2621, 0.041655596
        %v2623 = vmul.f32 %v2620, %v2622
        %v2624 = vadd.f32 %v2623, -0.4999988
        %v2625 = vmul.f32 %v2620, %v2624
        %v2626 = vadd.f32 1.0, %v2625
        %v2627 = vmul.f32 %v2618, %v2618
        %v2628 = vmul.f32 %v2627, -0.00019511016
        %v2629 = vadd.f32 %v2628, 0.008332121
        %v2630 = vmul.f32 %v2627, %v2629
        %v2631 = vadd.f32 %v2630, -0.16666654
        %v2632 = vmul.f32 %v2627, %v2631
        %v2633 = vadd.f32 %v2632, 1.0
        %v2634 = vmul.f32 %v2633, %v2618
        %vm2635 = vweird.f32 %v2029
        %v2636 = vand.u32 %v2619, 3
        %vm2637 = vcmp.lt.s32.totalorder %v2636, 2
        %vm2638 = vcmp.eq.s32.totalorder %v2636, 0
        %v2639 = vxor.u32 %v2634, 2147483648
        %v2640 = vsel %vm2638, %v2626, %v2639
        %vm2641 = vcmp.eq.s32.totalorder %v2636, 2
        %v2642 = vxor.u32 %v2626, 2147483648
        %v2643 = vsel %vm2641, %v2642, %v2634
        %v2644 = vsel %vm2637, %v2640, %v2643
        %v2645 = vsel %vm2635, nan, %v2644
        %v2646 = vadd.f32 %v2183, 1.0
        %v2647 = vadd.f32 %v2337, 1.0
        %v2648 = vadd.f32 %v2491, 1.0
        %v2649 = vadd.f32 %v2645, 1.0
        %v2650 = vmul.f32 %v2646, 0.5
        %v2651 = vmul.f32 %v2647, 0.5
        %v2652 = vmul.f32 %v2648, 0.5
        %v2653 = vmul.f32 %v2649, 0.5
        %v2654 = vsel %vm2011, %v2650, 0.0
        %v2655 = vsel %vm2012, %v2651, 0.0
        %v2656 = vsel %vm2013, %v2652, 0.0
        %v2657 = vsel %vm2014, %v2653, 0.0
        %v2658 = vld [vmem:[#allocation9] sm:$0xf]
        %v2659 = vld [vmem:[#allocation9 + $0x4] sm:$0xf]
        %v2660 = vpack.c.bf16 %v2008, %v2007
        %v2661 = vpack.c.bf16 %v2010, %v2009
        %v2662 = vld [vmem:[#allocation12] sm:$0x1]
        %v2664 = vperm.slane %v2662, 0
        %v2668 = vunpack.c.l.b16 %v2658
        %v2669 = vunpack.c.l.b16 %v2659
        %v2670 = vpack.c.b16 %v2669, %v2668
        %vm2672 = vcmask 130048
        %v2674 = vsel %vm2672, %v2660, 0
        %v2677 = vsel %vm2672, %v2661, 0
        %2679 = vmatpush.bf16.msra.mxu0 0
        %2680 = vmatpush.bf16.msra.mxu0 0
        %2681 = vmatpush.bf16.msra.mxu0 0
        %2682 = vmatpush.bf16.msra.mxu0 0
        %2683 = vmatpush.bf16.msra.mxu0 0
        %2684 = vmatpush.bf16.msra.mxu0 0
        %2685 = vmatpush.bf16.msra.mxu0 0
        %2686 = vmatpush.bf16.msra.mxu0 %v2670
        %2687 = vmatmul.bf16.gmra.mxu0 %v2674
        %v2688 = vpop.f32.mrf.mxu0
        %v2689 = vadd.f32 %v2664, %v2688
        %v2690 = vpop.f32.mrf.mxu0
        %v2691 = vadd.f32 %v2664, %v2690
        %2692 = vmatmul.bf16.gmra.mxu0 %v2677
        %v2693 = vpop.f32.mrf.mxu0
        %v2694 = vadd.f32 %v2664, %v2693
        %v2695 = vpop.f32.mrf.mxu0
        %v2696 = vadd.f32 %v2664, %v2695
        %2697 = vdwg.mxu0
        %2699 = vset.pattern.permute.xlu0 0
        %2700 = vperm.xlu0 %2699, %v2654
        %v2701 = vpop.permute.xlu0 %2700
        %2704 = vset.pattern.permute.xlu0 0
        %2705 = vperm.xlu0 %2704, %v2655
        %v2706 = vpop.permute.xlu0 %2705
        %2709 = vset.pattern.permute.xlu0 0
        %2710 = vperm.xlu0 %2709, %v2656
        %v2711 = vpop.permute.xlu0 %2710
        %2714 = vset.pattern.permute.xlu0 0
        %2715 = vperm.xlu0 %2714, %v2657
        %v2716 = vpop.permute.xlu0 %2715
        %v2718 = vmul.f32 %v2689, %v2701
        %v2719 = vmul.f32 %v2691, %v2706
        %v2720 = vmul.f32 %v2694, %v2711
        %v2721 = vmul.f32 %v2696, %v2716
        %v2722 = vld [vmem:[#allocation4] sm:$0xff]
        %v2723 = vld [vmem:[#allocation4 + $0x8] sm:$0xff]
        %v2724 = vld [vmem:[#allocation4 + $0x10] sm:$0xff]
        %v2725 = vld [vmem:[#allocation4 + $0x18] sm:$0xff]
        %v2726 = vld [vmem:[#allocation4 + $0x20] sm:$0xff]
        %v2727 = vld [vmem:[#allocation4 + $0x28] sm:$0xff]
        %v2728 = vld [vmem:[#allocation4 + $0x30] sm:$0xff]
        %v2729 = vld [vmem:[#allocation4 + $0x38] sm:$0xff]
        %2734 = vrot.lane.b32.xlu0 %v2722, 96
        %v2735 = vpop.permute.xlu0 %2734
        %2736 = vrot.lane.b32.xlu0 %v2724, 96
        %v2737 = vpop.permute.xlu0 %2736
        %2738 = vrot.lane.b32.xlu0 %v2726, 96
        %v2739 = vpop.permute.xlu0 %2738
        %2740 = vrot.lane.b32.xlu0 %v2728, 96
        %v2741 = vpop.permute.xlu0 %2740
        %v2746 = vmul.f32 %v2718, %v2735
        %v2747 = vmul.f32 %v2719, %v2737
        %v2748 = vmul.f32 %v2720, %v2739
        %v2749 = vmul.f32 %v2721, %v2741
        %v2750 = vmul.f32 %v1246, %v1246
        %v2751 = vmul.f32 %v1247, %v1247
        %v2752 = vmul.f32 %v1248, %v1248
        %v2753 = vmul.f32 %v1249, %v1249
        %2758 = vrot.lane.b32.xlu0 %v2750, 127
        %v2759 = vpop.permute.xlu0 %2758
        %2760 = vrot.lane.b32.xlu0 %v2751, 127
        %v2761 = vpop.permute.xlu0 %2760
        %2762 = vrot.lane.b32.xlu0 %v2752, 127
        %v2763 = vpop.permute.xlu0 %2762
        %2764 = vrot.lane.b32.xlu0 %v2753, 127
        %v2765 = vpop.permute.xlu0 %2764
        %v2770 = vadd.f32 %v2750, %v2759
        %v2771 = vadd.f32 %v2751, %v2761
        %v2772 = vadd.f32 %v2752, %v2763
        %v2773 = vadd.f32 %v2753, %v2765
        %2774 = vrot.lane.b32.xlu0 %v2750, 126
        %v2775 = vpop.permute.xlu0 %2774
        %2776 = vrot.lane.b32.xlu0 %v2751, 126
        %v2777 = vpop.permute.xlu0 %2776
        %2778 = vrot.lane.b32.xlu0 %v2752, 126
        %v2779 = vpop.permute.xlu0 %2778
        %2780 = vrot.lane.b32.xlu0 %v2753, 126
        %v2781 = vpop.permute.xlu0 %2780
        %v2786 = vadd.f32 %v2770, %v2775
        %v2787 = vadd.f32 %v2771, %v2777
        %v2788 = vadd.f32 %v2772, %v2779
        %v2789 = vadd.f32 %v2773, %v2781
        %v2790 = vrsqrt.pop %v2786
        %v2791 = vmul.f32 %v2790, %v2786
        %v2792 = vmul.f32 %v2791, %v2790
        %v2793 = vmul.f32 0.5, %v2792
        %v2794 = vsub.f32 1.5, %v2793
        %v2795 = vmul.f32 %v2790, %v2794
        %v2796 = vmul.f32 %v2786, %v2795
        %vm2797 = vcmp.eq.f32.partialorder %v2786, inf
        %v2798 = vsel %vm2797, %v2786, %v2796
        %vm2799 = vcmp.eq.f32.partialorder %v2786, 0.0
        %v2800 = vand.u32 %v2786, 2147483648
        %v2801 = vsel %vm2799, %v2800, %v2798
        %v2802 = vrsqrt.pop %v2787
        %v2803 = vmul.f32 %v2802, %v2787
        %v2804 = vmul.f32 %v2803, %v2802
        %v2805 = vmul.f32 0.5, %v2804
        %v2806 = vsub.f32 1.5, %v2805
        %v2807 = vmul.f32 %v2802, %v2806
        %v2808 = vmul.f32 %v2787, %v2807
        %vm2809 = vcmp.eq.f32.partialorder %v2787, inf
        %v2810 = vsel %vm2809, %v2787, %v2808
        %vm2811 = vcmp.eq.f32.partialorder %v2787, 0.0
        %v2812 = vand.u32 %v2787, 2147483648
        %v2813 = vsel %vm2811, %v2812, %v2810
        %v2814 = vrsqrt.pop %v2788
        %v2815 = vmul.f32 %v2814, %v2788
        %v2816 = vmul.f32 %v2815, %v2814
        %v2817 = vmul.f32 0.5, %v2816
        %v2818 = vsub.f32 1.5, %v2817
        %v2819 = vmul.f32 %v2814, %v2818
        %v2820 = vmul.f32 %v2788, %v2819
        %vm2821 = vcmp.eq.f32.partialorder %v2788, inf
        %v2822 = vsel %vm2821, %v2788, %v2820
        %vm2823 = vcmp.eq.f32.partialorder %v2788, 0.0
        %v2824 = vand.u32 %v2788, 2147483648
        %v2825 = vsel %vm2823, %v2824, %v2822
        %v2826 = vrsqrt.pop %v2789
        %v2827 = vmul.f32 %v2826, %v2789
        %v2828 = vmul.f32 %v2827, %v2826
        %v2829 = vmul.f32 0.5, %v2828
        %v2830 = vsub.f32 1.5, %v2829
        %v2831 = vmul.f32 %v2826, %v2830
        %v2832 = vmul.f32 %v2789, %v2831
        %vm2833 = vcmp.eq.f32.partialorder %v2789, inf
        %v2834 = vsel %vm2833, %v2789, %v2832
        %vm2835 = vcmp.eq.f32.partialorder %v2789, 0.0
        %v2836 = vand.u32 %v2789, 2147483648
        %v2837 = vsel %vm2835, %v2836, %v2834
        %v2838 = vmax.f32 %v2801, 1e-09
        %v2839 = vmax.f32 %v2813, 1e-09
        %v2840 = vmax.f32 %v2825, 1e-09
        %v2841 = vmax.f32 %v2837, 1e-09
        %v2842 = vrcp.pop %v2838
        %v2843 = vmul.f32 %v2838, %v2842
        %v2844 = vsub.f32 1.0, %v2843
        %v2845 = vmul.f32 %v2842, %v2844
        %v2846 = vadd.f32 %v2842, %v2845
        %vm2847 = vweird.f32 %v2838
        %vm2848 = vweird.f32 %v2842
        %vm2849 = vmor %vm2847, %vm2848
        %v2850 = vsel %vm2849, %v2842, %v2846
        %v2851 = vand.u32 2147483647, %v2838
        %vm2852 = vcmp.eq.f32.partialorder %v2851, 8.507059e+37
        %v2853 = vand.u32 %v2838, 2147483648
        %v2854 = vor.u32 1.1754944e-38, %v2853
        %v2855 = vsel %vm2852, %v2854, %v2850
        %v2856 = vmul.f32 %v1246, %v2855
        %v2857 = vrcp.pop %v2839
        %v2858 = vmul.f32 %v2839, %v2857
        %v2859 = vsub.f32 1.0, %v2858
        %v2860 = vmul.f32 %v2857, %v2859
        %v2861 = vadd.f32 %v2857, %v2860
        %vm2862 = vweird.f32 %v2839
        %vm2863 = vweird.f32 %v2857
        %vm2864 = vmor %vm2862, %vm2863
        %v2865 = vsel %vm2864, %v2857, %v2861
        %v2866 = vand.u32 2147483647, %v2839
        %vm2867 = vcmp.eq.f32.partialorder %v2866, 8.507059e+37
        %v2868 = vand.u32 %v2839, 2147483648
        %v2869 = vor.u32 1.1754944e-38, %v2868
        %v2870 = vsel %vm2867, %v2869, %v2865
        %v2871 = vmul.f32 %v1247, %v2870
        %v2872 = vrcp.pop %v2840
        %v2873 = vmul.f32 %v2840, %v2872
        %v2874 = vsub.f32 1.0, %v2873
        %v2875 = vmul.f32 %v2872, %v2874
        %v2876 = vadd.f32 %v2872, %v2875
        %vm2877 = vweird.f32 %v2840
        %vm2878 = vweird.f32 %v2872
        %vm2879 = vmor %vm2877, %vm2878
        %v2880 = vsel %vm2879, %v2872, %v2876
        %v2881 = vand.u32 2147483647, %v2840
        %vm2882 = vcmp.eq.f32.partialorder %v2881, 8.507059e+37
        %v2883 = vand.u32 %v2840, 2147483648
        %v2884 = vor.u32 1.1754944e-38, %v2883
        %v2885 = vsel %vm2882, %v2884, %v2880
        %v2886 = vmul.f32 %v1248, %v2885
        %v2887 = vrcp.pop %v2841
        %v2888 = vmul.f32 %v2841, %v2887
        %v2889 = vsub.f32 1.0, %v2888
        %v2890 = vmul.f32 %v2887, %v2889
        %v2891 = vadd.f32 %v2887, %v2890
        %vm2892 = vweird.f32 %v2841
        %vm2893 = vweird.f32 %v2887
        %vm2894 = vmor %vm2892, %vm2893
        %v2895 = vsel %vm2894, %v2887, %v2891
        %v2896 = vand.u32 2147483647, %v2841
        %vm2897 = vcmp.eq.f32.partialorder %v2896, 8.507059e+37
        %v2898 = vand.u32 %v2841, 2147483648
        %v2899 = vor.u32 1.1754944e-38, %v2898
        %v2900 = vsel %vm2897, %v2899, %v2895
        %v2901 = vmul.f32 %v1249, %v2900
        %2906 = vrot.lane.b32.xlu0 %v2838, 1
        %v2907 = vpop.permute.xlu0 %2906
        %2908 = vrot.lane.b32.xlu0 %v2839, 1
        %v2909 = vpop.permute.xlu0 %2908
        %2910 = vrot.lane.b32.xlu0 %v2840, 1
        %v2911 = vpop.permute.xlu0 %2910
        %2912 = vrot.lane.b32.xlu0 %v2841, 1
        %v2913 = vpop.permute.xlu0 %2912
        %v2918 = vrcp.pop %v2907
        %v2919 = vmul.f32 %v2907, %v2918
        %v2920 = vsub.f32 1.0, %v2919
        %v2921 = vmul.f32 %v2918, %v2920
        %v2922 = vadd.f32 %v2918, %v2921
        %vm2923 = vweird.f32 %v2907
        %vm2924 = vweird.f32 %v2918
        %vm2925 = vmor %vm2923, %vm2924
        %v2926 = vsel %vm2925, %v2918, %v2922
        %v2927 = vand.u32 2147483647, %v2907
        %vm2928 = vcmp.eq.f32.partialorder %v2927, 8.507059e+37
        %v2929 = vand.u32 %v2907, 2147483648
        %v2930 = vor.u32 1.1754944e-38, %v2929
        %v2931 = vsel %vm2928, %v2930, %v2926
        %v2932 = vmul.f32 %v1246, %v2931
        %v2933 = vrcp.pop %v2909
        %v2934 = vmul.f32 %v2909, %v2933
        %v2935 = vsub.f32 1.0, %v2934
        %v2936 = vmul.f32 %v2933, %v2935
        %v2937 = vadd.f32 %v2933, %v2936
        %vm2938 = vweird.f32 %v2909
        %vm2939 = vweird.f32 %v2933
        %vm2940 = vmor %vm2938, %vm2939
        %v2941 = vsel %vm2940, %v2933, %v2937
        %v2942 = vand.u32 2147483647, %v2909
        %vm2943 = vcmp.eq.f32.partialorder %v2942, 8.507059e+37
        %v2944 = vand.u32 %v2909, 2147483648
        %v2945 = vor.u32 1.1754944e-38, %v2944
        %v2946 = vsel %vm2943, %v2945, %v2941
        %v2947 = vmul.f32 %v1247, %v2946
        %v2948 = vrcp.pop %v2911
        %v2949 = vmul.f32 %v2911, %v2948
        %v2950 = vsub.f32 1.0, %v2949
        %v2951 = vmul.f32 %v2948, %v2950
        %v2952 = vadd.f32 %v2948, %v2951
        %vm2953 = vweird.f32 %v2911
        %vm2954 = vweird.f32 %v2948
        %vm2955 = vmor %vm2953, %vm2954
        %v2956 = vsel %vm2955, %v2948, %v2952
        %v2957 = vand.u32 2147483647, %v2911
        %vm2958 = vcmp.eq.f32.partialorder %v2957, 8.507059e+37
        %v2959 = vand.u32 %v2911, 2147483648
        %v2960 = vor.u32 1.1754944e-38, %v2959
        %v2961 = vsel %vm2958, %v2960, %v2956
        %v2962 = vmul.f32 %v1248, %v2961
        %v2963 = vrcp.pop %v2913
        %v2964 = vmul.f32 %v2913, %v2963
        %v2965 = vsub.f32 1.0, %v2964
        %v2966 = vmul.f32 %v2963, %v2965
        %v2967 = vadd.f32 %v2963, %v2966
        %vm2968 = vweird.f32 %v2913
        %vm2969 = vweird.f32 %v2963
        %vm2970 = vmor %vm2968, %vm2969
        %v2971 = vsel %vm2970, %v2963, %v2967
        %v2972 = vand.u32 2147483647, %v2913
        %vm2973 = vcmp.eq.f32.partialorder %v2972, 8.507059e+37
        %v2974 = vand.u32 %v2913, 2147483648
        %v2975 = vor.u32 1.1754944e-38, %v2974
        %v2976 = vsel %vm2973, %v2975, %v2971
        %v2977 = vmul.f32 %v1249, %v2976
        %2978 = vrot.lane.b32.xlu0 %v2838, 2
        %v2979 = vpop.permute.xlu0 %2978
        %2980 = vrot.lane.b32.xlu0 %v2839, 2
        %v2981 = vpop.permute.xlu0 %2980
        %2982 = vrot.lane.b32.xlu0 %v2840, 2
        %v2983 = vpop.permute.xlu0 %2982
        %2984 = vrot.lane.b32.xlu0 %v2841, 2
        %v2985 = vpop.permute.xlu0 %2984
        %v2990 = vrcp.pop %v2979
        %v2991 = vmul.f32 %v2979, %v2990
        %v2992 = vsub.f32 1.0, %v2991
        %v2993 = vmul.f32 %v2990, %v2992
        %v2994 = vadd.f32 %v2990, %v2993
        %vm2995 = vweird.f32 %v2979
        %vm2996 = vweird.f32 %v2990
        %vm2997 = vmor %vm2995, %vm2996
        %v2998 = vsel %vm2997, %v2990, %v2994
        %v2999 = vand.u32 2147483647, %v2979
        %vm3000 = vcmp.eq.f32.partialorder %v2999, 8.507059e+37
        %v3001 = vand.u32 %v2979, 2147483648
        %v3002 = vor.u32 1.1754944e-38, %v3001
        %v3003 = vsel %vm3000, %v3002, %v2998
        %v3004 = vmul.f32 %v1246, %v3003
        %v3005 = vrcp.pop %v2981
        %v3006 = vmul.f32 %v2981, %v3005
        %v3007 = vsub.f32 1.0, %v3006
        %v3008 = vmul.f32 %v3005, %v3007
        %v3009 = vadd.f32 %v3005, %v3008
        %vm3010 = vweird.f32 %v2981
        %vm3011 = vweird.f32 %v3005
        %vm3012 = vmor %vm3010, %vm3011
        %v3013 = vsel %vm3012, %v3005, %v3009
        %v3014 = vand.u32 2147483647, %v2981
        %vm3015 = vcmp.eq.f32.partialorder %v3014, 8.507059e+37
        %v3016 = vand.u32 %v2981, 2147483648
        %v3017 = vor.u32 1.1754944e-38, %v3016
        %v3018 = vsel %vm3015, %v3017, %v3013
        %v3019 = vmul.f32 %v1247, %v3018
        %v3020 = vrcp.pop %v2983
        %v3021 = vmul.f32 %v2983, %v3020
        %v3022 = vsub.f32 1.0, %v3021
        %v3023 = vmul.f32 %v3020, %v3022
        %v3024 = vadd.f32 %v3020, %v3023
        %vm3025 = vweird.f32 %v2983
        %vm3026 = vweird.f32 %v3020
        %vm3027 = vmor %vm3025, %vm3026
        %v3028 = vsel %vm3027, %v3020, %v3024
        %v3029 = vand.u32 2147483647, %v2983
        %vm3030 = vcmp.eq.f32.partialorder %v3029, 8.507059e+37
        %v3031 = vand.u32 %v2983, 2147483648
        %v3032 = vor.u32 1.1754944e-38, %v3031
        %v3033 = vsel %vm3030, %v3032, %v3028
        %v3034 = vmul.f32 %v1248, %v3033
        %v3035 = vrcp.pop %v2985
        %v3036 = vmul.f32 %v2985, %v3035
        %v3037 = vsub.f32 1.0, %v3036
        %v3038 = vmul.f32 %v3035, %v3037
        %v3039 = vadd.f32 %v3035, %v3038
        %vm3040 = vweird.f32 %v2985
        %vm3041 = vweird.f32 %v3035
        %vm3042 = vmor %vm3040, %vm3041
        %v3043 = vsel %vm3042, %v3035, %v3039
        %v3044 = vand.u32 2147483647, %v2985
        %vm3045 = vcmp.eq.f32.partialorder %v3044, 8.507059e+37
        %v3046 = vand.u32 %v2985, 2147483648
        %v3047 = vor.u32 1.1754944e-38, %v3046
        %v3048 = vsel %vm3045, %v3047, %v3043
        %v3049 = vmul.f32 %v1249, %v3048
        %3054 = vrot.lane.b32.xlu0 %v2746, 64
        %v3055 = vpop.permute.xlu0 %3054
        %3056 = vrot.lane.b32.xlu0 %v2747, 64
        %v3057 = vpop.permute.xlu0 %3056
        %3058 = vrot.lane.b32.xlu0 %v2748, 64
        %v3059 = vpop.permute.xlu0 %3058
        %3060 = vrot.lane.b32.xlu0 %v2749, 64
        %v3061 = vpop.permute.xlu0 %3060
        %v3066 = vmul.f32 %v2722, %v3055
        %v3067 = vmul.f32 %v2724, %v3057
        %v3068 = vmul.f32 %v2726, %v3059
        %v3069 = vmul.f32 %v2728, %v3061
        %v3070 = vmul.f32 %v2723, %v2746
        %v3071 = vmul.f32 %v2725, %v2747
        %v3072 = vmul.f32 %v2727, %v2748
        %v3073 = vmul.f32 %v2729, %v2749
        %3075 = vset.pattern.permute.xlu0 1
        %3076 = vperm.xlu0 %3075, %v2856
        %v3077 = vpop.permute.xlu0 %3076
        %3080 = vset.pattern.permute.xlu0 1
        %3081 = vperm.xlu0 %3080, %v2871
        %v3082 = vpop.permute.xlu0 %3081
        %3085 = vset.pattern.permute.xlu0 1
        %3086 = vperm.xlu0 %3085, %v2886
        %v3087 = vpop.permute.xlu0 %3086
        %3090 = vset.pattern.permute.xlu0 1
        %3091 = vperm.xlu0 %3090, %v2901
        %v3092 = vpop.permute.xlu0 %3091
        %v3094 = vmul.f32 %v2746, %v3077
        %v3095 = vmul.f32 %v2747, %v3082
        %v3096 = vmul.f32 %v2748, %v3087
        %v3097 = vmul.f32 %v2749, %v3092
        %3102 = vrot.lane.b32.xlu0 %v3094, 96
        %v3103 = vpop.permute.xlu0 %3102
        %3104 = vrot.lane.b32.xlu0 %v3095, 96
        %v3105 = vpop.permute.xlu0 %3104
        %3106 = vrot.lane.b32.xlu0 %v3096, 96
        %v3107 = vpop.permute.xlu0 %3106
        %3108 = vrot.lane.b32.xlu0 %v3097, 96
        %v3109 = vpop.permute.xlu0 %3108
        %v3114 = vadd.f32 %v3070, %v3103
        %v3115 = vadd.f32 %v3071, %v3105
        %v3116 = vadd.f32 %v3072, %v3107
        %v3117 = vadd.f32 %v3073, %v3109
        %3118 = vrot.lane.b32.xlu0 %v2746, 32
        %v3119 = vpop.permute.xlu0 %3118
        %3120 = vrot.lane.b32.xlu0 %v2747, 32
        %v3121 = vpop.permute.xlu0 %3120
        %3122 = vrot.lane.b32.xlu0 %v2748, 32
        %v3123 = vpop.permute.xlu0 %3122
        %3124 = vrot.lane.b32.xlu0 %v2749, 32
        %v3125 = vpop.permute.xlu0 %3124
        %v3130 = vmul.f32 %v2723, %v3119
        %v3131 = vmul.f32 %v2725, %v3121
        %v3132 = vmul.f32 %v2727, %v3123
        %v3133 = vmul.f32 %v2729, %v3125
        %3135 = vset.pattern.permute.xlu0 2
        %3136 = vperm.xlu0 %3135, %v2932
        %v3137 = vpop.permute.xlu0 %3136
        %3140 = vset.pattern.permute.xlu0 2
        %3141 = vperm.xlu0 %3140, %v2947
        %v3142 = vpop.permute.xlu0 %3141
        %3145 = vset.pattern.permute.xlu0 2
        %3146 = vperm.xlu0 %3145, %v2962
        %v3147 = vpop.permute.xlu0 %3146
        %3150 = vset.pattern.permute.xlu0 2
        %3151 = vperm.xlu0 %3150, %v2977
        %v3152 = vpop.permute.xlu0 %3151
        %v3154 = vmul.f32 %v2746, %v3137
        %v3155 = vmul.f32 %v2747, %v3142
        %v3156 = vmul.f32 %v2748, %v3147
        %v3157 = vmul.f32 %v2749, %v3152
        %v3158 = vadd.f32 %v3130, %v3154
        %v3159 = vadd.f32 %v3131, %v3155
        %v3160 = vadd.f32 %v3132, %v3156
        %v3161 = vadd.f32 %v3133, %v3157
        %v3162 = vmul.f32 %v2723, %v3055
        %v3163 = vmul.f32 %v2725, %v3057
        %v3164 = vmul.f32 %v2727, %v3059
        %v3165 = vmul.f32 %v2729, %v3061
        %3167 = vset.pattern.permute.xlu0 3
        %3168 = vperm.xlu0 %3167, %v3004
        %v3169 = vpop.permute.xlu0 %3168
        %3172 = vset.pattern.permute.xlu0 3
        %3173 = vperm.xlu0 %3172, %v3019
        %v3174 = vpop.permute.xlu0 %3173
        %3177 = vset.pattern.permute.xlu0 3
        %3178 = vperm.xlu0 %3177, %v3034
        %v3179 = vpop.permute.xlu0 %3178
        %3182 = vset.pattern.permute.xlu0 3
        %3183 = vperm.xlu0 %3182, %v3049
        %v3184 = vpop.permute.xlu0 %3183
        %v3186 = vmul.f32 %v2746, %v3169
        %v3187 = vmul.f32 %v2747, %v3174
        %v3188 = vmul.f32 %v2748, %v3179
        %v3189 = vmul.f32 %v2749, %v3184
        %3194 = vrot.lane.b32.xlu0 %v3186, 32
        %v3195 = vpop.permute.xlu0 %3194
        %3196 = vrot.lane.b32.xlu0 %v3187, 32
        %v3197 = vpop.permute.xlu0 %3196
        %3198 = vrot.lane.b32.xlu0 %v3188, 32
        %v3199 = vpop.permute.xlu0 %3198
        %3200 = vrot.lane.b32.xlu0 %v3189, 32
        %v3201 = vpop.permute.xlu0 %3200
        %v3206 = vadd.f32 %v3162, %v3195
        %v3207 = vadd.f32 %v3163, %v3197
        %v3208 = vadd.f32 %v3164, %v3199
        %v3209 = vadd.f32 %v3165, %v3201
        %vm3210 = vcmask 261120
        %v3211 = vsel %vm3210, %v3114, %v3158
        %v3212 = vsel %vm3210, %v3115, %v3159
        %v3213 = vsel %vm3210, %v3116, %v3160
        %v3214 = vsel %vm3210, %v3117, %v3161
        %vm3215 = vcmask 523264
        %v3216 = vsel %vm3215, %v3211, %v3206
        %v3217 = vsel %vm3215, %v3212, %v3207
        %v3218 = vsel %vm3215, %v3213, %v3208
        %v3219 = vsel %vm3215, %v3214, %v3209
        %3224 = vrot.lane.b32.xlu0 %v3216, 32
        %v3225 = vpop.permute.xlu0 %3224
        %3226 = vrot.lane.b32.xlu0 %v3217, 32
        %v3227 = vpop.permute.xlu0 %3226
        %3228 = vrot.lane.b32.xlu0 %v3218, 32
        %v3229 = vpop.permute.xlu0 %3228
        %3230 = vrot.lane.b32.xlu0 %v3219, 32
        %v3231 = vpop.permute.xlu0 %3230
        %v3236 = vsel %vm3210, %v3066, %v3225
        %v3237 = vsel %vm3210, %v3067, %v3227
        %v3238 = vsel %vm3210, %v3068, %v3229
        %v3239 = vsel %vm3210, %v3069, %v3231
        %3240 = vst [vmem:[#allocation5] sm:$0xff] %v3236
        %3241 = vst [vmem:[#allocation5 + $0x8] sm:$0xff] %v3237
        %3242 = vst [vmem:[#allocation5 + $0x10] sm:$0xff] %v3238
        %3243 = vst [vmem:[#allocation5 + $0x18] sm:$0xff] %v3239
        %s3244 = sld [smem:[#allocation8 + %s795]]
        %s3245 = scalar_lea.vmem [#allocation3], %s3244
        %v3246 = vld [vmem:[%s3245] sm:$0x1]
        %v3247 = vld [vmem:[#allocation5] sm:$0x1]
        %v3248 = vadd.f32 %v3246, %v3247
        %3249 = vst [vmem:[%s3245] sm:$0x1] %v3248
        %s3250 = sld [smem:[#allocation8 + %s812]]
        %s3251 = scalar_lea.vmem [#allocation3], %s3250
        %v3252 = vld [vmem:[%s3251] sm:$0x1]
        %v3253 = vld [vmem:[#allocation5 + $0x1] sm:$0x1]
        %v3254 = vadd.f32 %v3252, %v3253
        %3255 = vst [vmem:[%s3251] sm:$0x1] %v3254
        %s3256 = sld [smem:[#allocation8 + %s826]]
        %s3257 = scalar_lea.vmem [#allocation3], %s3256
        %v3258 = vld [vmem:[%s3257] sm:$0x1]
        %v3259 = vld [vmem:[#allocation5 + $0x2] sm:$0x1]
        %v3260 = vadd.f32 %v3258, %v3259
        %3261 = vst [vmem:[%s3257] sm:$0x1] %v3260
        %s3262 = sld [smem:[#allocation8 + %s840]]
        %s3263 = scalar_lea.vmem [#allocation3], %s3262
        %v3264 = vld [vmem:[%s3263] sm:$0x1]
        %v3265 = vld [vmem:[#allocation5 + $0x3] sm:$0x1]
        %v3266 = vadd.f32 %v3264, %v3265
        %3267 = vst [vmem:[%s3263] sm:$0x1] %v3266
        %s3268 = sld [smem:[#allocation8 + %s854]]
        %s3269 = scalar_lea.vmem [#allocation3], %s3268
        %v3270 = vld [vmem:[%s3269] sm:$0x1]
        %v3271 = vld [vmem:[#allocation5 + $0x4] sm:$0x1]
        %v3272 = vadd.f32 %v3270, %v3271
        %3273 = vst [vmem:[%s3269] sm:$0x1] %v3272
        %s3274 = sld [smem:[#allocation8 + %s868]]
        %s3275 = scalar_lea.vmem [#allocation3], %s3274
        %v3276 = vld [vmem:[%s3275] sm:$0x1]
        %v3277 = vld [vmem:[#allocation5 + $0x5] sm:$0x1]
        %v3278 = vadd.f32 %v3276, %v3277
        %3279 = vst [vmem:[%s3275] sm:$0x1] %v3278
        %s3280 = sld [smem:[#allocation8 + %s882]]
        %s3281 = scalar_lea.vmem [#allocation3], %s3280
        %v3282 = vld [vmem:[%s3281] sm:$0x1]
        %v3283 = vld [vmem:[#allocation5 + $0x6] sm:$0x1]
        %v3284 = vadd.f32 %v3282, %v3283
        %3285 = vst [vmem:[%s3281] sm:$0x1] %v3284
        %s3286 = sld [smem:[#allocation8 + %s896]]
        %s3287 = scalar_lea.vmem [#allocation3], %s3286
        %v3288 = vld [vmem:[%s3287] sm:$0x1]
        %v3289 = vld [vmem:[#allocation5 + $0x7] sm:$0x1]
        %v3290 = vadd.f32 %v3288, %v3289
        %3291 = vst [vmem:[%s3287] sm:$0x1] %v3290
        %s3292 = sld [smem:[#allocation8 + %s910]]
        %s3293 = scalar_lea.vmem [#allocation3], %s3292
        %v3294 = vld [vmem:[%s3293] sm:$0x1]
        %v3295 = vld [vmem:[#allocation5 + $0x8] sm:$0x1]
        %v3296 = vadd.f32 %v3294, %v3295
        %3297 = vst [vmem:[%s3293] sm:$0x1] %v3296
        %s3298 = sld [smem:[#allocation8 + %s924]]
        %s3299 = scalar_lea.vmem [#allocation3], %s3298
        %v3300 = vld [vmem:[%s3299] sm:$0x1]
        %v3301 = vld [vmem:[#allocation5 + $0x9] sm:$0x1]
        %v3302 = vadd.f32 %v3300, %v3301
        %3303 = vst [vmem:[%s3299] sm:$0x1] %v3302
        %s3304 = sld [smem:[#allocation8 + %s938]]
        %s3305 = scalar_lea.vmem [#allocation3], %s3304
        %v3306 = vld [vmem:[%s3305] sm:$0x1]
        %v3307 = vld [vmem:[#allocation5 + $0xa] sm:$0x1]
        %v3308 = vadd.f32 %v3306, %v3307
        %3309 = vst [vmem:[%s3305] sm:$0x1] %v3308
        %s3310 = sld [smem:[#allocation8 + %s952]]
        %s3311 = scalar_lea.vmem [#allocation3], %s3310
        %v3312 = vld [vmem:[%s3311] sm:$0x1]
        %v3313 = vld [vmem:[#allocation5 + $0xb] sm:$0x1]
        %v3314 = vadd.f32 %v3312, %v3313
        %3315 = vst [vmem:[%s3311] sm:$0x1] %v3314
        %s3316 = sld [smem:[#allocation8 + %s966]]
        %s3317 = scalar_lea.vmem [#allocation3], %s3316
        %v3318 = vld [vmem:[%s3317] sm:$0x1]
        %v3319 = vld [vmem:[#allocation5 + $0xc] sm:$0x1]
        %v3320 = vadd.f32 %v3318, %v3319
        %3321 = vst [vmem:[%s3317] sm:$0x1] %v3320
        %s3322 = sld [smem:[#allocation8 + %s980]]
        %s3323 = scalar_lea.vmem [#allocation3], %s3322
        %v3324 = vld [vmem:[%s3323] sm:$0x1]
        %v3325 = vld [vmem:[#allocation5 + $0xd] sm:$0x1]
        %v3326 = vadd.f32 %v3324, %v3325
        %3327 = vst [vmem:[%s3323] sm:$0x1] %v3326
        %s3328 = sld [smem:[#allocation8 + %s994]]
        %s3329 = scalar_lea.vmem [#allocation3], %s3328
        %v3330 = vld [vmem:[%s3329] sm:$0x1]
        %v3331 = vld [vmem:[#allocation5 + $0xe] sm:$0x1]
        %v3332 = vadd.f32 %v3330, %v3331
        %3333 = vst [vmem:[%s3329] sm:$0x1] %v3332
        %s3334 = sld [smem:[#allocation8 + %s1008]]
        %s3335 = scalar_lea.vmem [#allocation3], %s3334
        %v3336 = vld [vmem:[%s3335] sm:$0x1]
        %v3337 = vld [vmem:[#allocation5 + $0xf] sm:$0x1]
        %v3338 = vadd.f32 %v3336, %v3337
        %3339 = vst [vmem:[%s3335] sm:$0x1] %v3338
        %s3340 = sld [smem:[#allocation8 + %s1022]]
        %s3341 = scalar_lea.vmem [#allocation3], %s3340
        %v3342 = vld [vmem:[%s3341] sm:$0x1]
        %v3343 = vld [vmem:[#allocation5 + $0x10] sm:$0x1]
        %v3344 = vadd.f32 %v3342, %v3343
        %3345 = vst [vmem:[%s3341] sm:$0x1] %v3344
        %s3346 = sld [smem:[#allocation8 + %s1036]]
        %s3347 = scalar_lea.vmem [#allocation3], %s3346
        %v3348 = vld [vmem:[%s3347] sm:$0x1]
        %v3349 = vld [vmem:[#allocation5 + $0x11] sm:$0x1]
        %v3350 = vadd.f32 %v3348, %v3349
        %3351 = vst [vmem:[%s3347] sm:$0x1] %v3350
        %s3352 = sld [smem:[#allocation8 + %s1050]]
        %s3353 = scalar_lea.vmem [#allocation3], %s3352
        %v3354 = vld [vmem:[%s3353] sm:$0x1]
        %v3355 = vld [vmem:[#allocation5 + $0x12] sm:$0x1]
        %v3356 = vadd.f32 %v3354, %v3355
        %3357 = vst [vmem:[%s3353] sm:$0x1] %v3356
        %s3358 = sld [smem:[#allocation8 + %s1064]]
        %s3359 = scalar_lea.vmem [#allocation3], %s3358
        %v3360 = vld [vmem:[%s3359] sm:$0x1]
        %v3361 = vld [vmem:[#allocation5 + $0x13] sm:$0x1]
        %v3362 = vadd.f32 %v3360, %v3361
        %3363 = vst [vmem:[%s3359] sm:$0x1] %v3362
        %s3364 = sld [smem:[#allocation8 + %s1078]]
        %s3365 = scalar_lea.vmem [#allocation3], %s3364
        %v3366 = vld [vmem:[%s3365] sm:$0x1]
        %v3367 = vld [vmem:[#allocation5 + $0x14] sm:$0x1]
        %v3368 = vadd.f32 %v3366, %v3367
        %3369 = vst [vmem:[%s3365] sm:$0x1] %v3368
        %s3370 = sld [smem:[#allocation8 + %s1092]]
        %s3371 = scalar_lea.vmem [#allocation3], %s3370
        %v3372 = vld [vmem:[%s3371] sm:$0x1]
        %v3373 = vld [vmem:[#allocation5 + $0x15] sm:$0x1]
        %v3374 = vadd.f32 %v3372, %v3373
        %3375 = vst [vmem:[%s3371] sm:$0x1] %v3374
        %s3376 = sld [smem:[#allocation8 + %s1106]]
        %s3377 = scalar_lea.vmem [#allocation3], %s3376
        %v3378 = vld [vmem:[%s3377] sm:$0x1]
        %v3379 = vld [vmem:[#allocation5 + $0x16] sm:$0x1]
        %v3380 = vadd.f32 %v3378, %v3379
        %3381 = vst [vmem:[%s3377] sm:$0x1] %v3380
        %s3382 = sld [smem:[#allocation8 + %s1120]]
        %s3383 = scalar_lea.vmem [#allocation3], %s3382
        %v3384 = vld [vmem:[%s3383] sm:$0x1]
        %v3385 = vld [vmem:[#allocation5 + $0x17] sm:$0x1]
        %v3386 = vadd.f32 %v3384, %v3385
        %3387 = vst [vmem:[%s3383] sm:$0x1] %v3386
        %s3388 = sld [smem:[#allocation8 + %s1134]]
        %s3389 = scalar_lea.vmem [#allocation3], %s3388
        %v3390 = vld [vmem:[%s3389] sm:$0x1]
        %v3391 = vld [vmem:[#allocation5 + $0x18] sm:$0x1]
        %v3392 = vadd.f32 %v3390, %v3391
        %3393 = vst [vmem:[%s3389] sm:$0x1] %v3392
        %s3394 = sld [smem:[#allocation8 + %s1148]]
        %s3395 = scalar_lea.vmem [#allocation3], %s3394
        %v3396 = vld [vmem:[%s3395] sm:$0x1]
        %v3397 = vld [vmem:[#allocation5 + $0x19] sm:$0x1]
        %v3398 = vadd.f32 %v3396, %v3397
        %3399 = vst [vmem:[%s3395] sm:$0x1] %v3398
        %s3400 = sld [smem:[#allocation8 + %s1162]]
        %s3401 = scalar_lea.vmem [#allocation3], %s3400
        %v3402 = vld [vmem:[%s3401] sm:$0x1]
        %v3403 = vld [vmem:[#allocation5 + $0x1a] sm:$0x1]
        %v3404 = vadd.f32 %v3402, %v3403
        %3405 = vst [vmem:[%s3401] sm:$0x1] %v3404
        %s3406 = sld [smem:[#allocation8 + %s1176]]
        %s3407 = scalar_lea.vmem [#allocation3], %s3406
        %v3408 = vld [vmem:[%s3407] sm:$0x1]
        %v3409 = vld [vmem:[#allocation5 + $0x1b] sm:$0x1]
        %v3410 = vadd.f32 %v3408, %v3409
        %3411 = vst [vmem:[%s3407] sm:$0x1] %v3410
        %s3412 = sld [smem:[#allocation8 + %s1190]]
        %s3413 = scalar_lea.vmem [#allocation3], %s3412
        %v3414 = vld [vmem:[%s3413] sm:$0x1]
        %v3415 = vld [vmem:[#allocation5 + $0x1c] sm:$0x1]
        %v3416 = vadd.f32 %v3414, %v3415
        %3417 = vst [vmem:[%s3413] sm:$0x1] %v3416
        %s3418 = sld [smem:[#allocation8 + %s1204]]
        %s3419 = scalar_lea.vmem [#allocation3], %s3418
        %v3420 = vld [vmem:[%s3419] sm:$0x1]
        %v3421 = vld [vmem:[#allocation5 + $0x1d] sm:$0x1]
        %v3422 = vadd.f32 %v3420, %v3421
        %3423 = vst [vmem:[%s3419] sm:$0x1] %v3422
        %s3424 = sld [smem:[#allocation8 + %s1218]]
        %s3425 = scalar_lea.vmem [#allocation3], %s3424
        %v3426 = vld [vmem:[%s3425] sm:$0x1]
        %v3427 = vld [vmem:[#allocation5 + $0x1e] sm:$0x1]
        %v3428 = vadd.f32 %v3426, %v3427
        %3429 = vst [vmem:[%s3425] sm:$0x1] %v3428
        %s3430 = sld [smem:[#allocation8 + %s1232]]
        %s3431 = scalar_lea.vmem [#allocation3], %s3430
        %v3432 = vld [vmem:[%s3431] sm:$0x1]
        %v3433 = vld [vmem:[#allocation5 + $0x1f] sm:$0x1]
        %v3434 = vadd.f32 %v3432, %v3433
        %3435 = vst [vmem:[%s3431] sm:$0x1] %v3434
        %p3436 = scmp.eq.s32.totalorder %s48, 1
        // Predicated region
        $region121: #{tpu_custom_call.1} parent=83 // pred_check
          %p3437 = pneg %p3436
        $region122: #{tpu_custom_call.1} parent=83 // pred_check_branch
          %3439 = sbr.rel (%p3437) target = $region124
        $region123: #{tpu_custom_call.1} parent=83 // pred_region
          %v3440 = vld [vmem:[#allocation3] sm:$0xff]
          %v3441 = vld [vmem:[#allocation3 + $0x8] sm:$0xff]
          %v3442 = vld [vmem:[%s2] sm:$0xff]
          %v3443 = vld [vmem:[%s2 + $0x8] sm:$0xff]
          %v3444 = vadd.f32 %v3442, %v3440
          %v3445 = vadd.f32 %v3443, %v3441
          %v3446 = vld [vmem:[%s3] sm:$0xff]
          %v3447 = vld [vmem:[%s3 + $0x8] sm:$0xff]
          %3450 = vrot.lane.b32.xlu0 %v3440, 96
          %v3451 = vpop.permute.xlu0 %3450
          %3452 = vrot.lane.b32.xlu0 %v3441, 96
          %v3453 = vpop.permute.xlu0 %3452
          %v3456 = vadd.f32 %v3446, %v3451
          %v3457 = vadd.f32 %v3447, %v3453
          %v3458 = vld [vmem:[#allocation17] sm:$0xf]
          %v3459 = vld [vmem:[#allocation17 + $0x4] sm:$0xf]
          %v3460 = vld [vmem:[#allocation17 + $0x8] sm:$0xf]
          %v3461 = vld [vmem:[#allocation17 + $0xc] sm:$0xf]
          %v3462 = vld [vmem:[#allocation18] sm:$0xf]
          %v3463 = vld [vmem:[#allocation18 + $0x4] sm:$0xf]
          %v3464 = vld [vmem:[#allocation18 + $0x8] sm:$0xf]
          %v3465 = vld [vmem:[#allocation18 + $0xc] sm:$0xf]
          %v3466 = vpack.c.bf16 %v3457, %v3456
          %v3471 = vunpack.c.l.b16 %v3458
          %v3472 = vunpack.c.l.b16 %v3459
          %v3473 = vunpack.c.l.b16 %v3460
          %v3474 = vunpack.c.l.b16 %v3461
          %v3475 = vpack.c.b16 %v3472, %v3471
          %v3476 = vpack.c.b16 %v3474, %v3473
          %v3480 = vsel %vm3210, %v3466, 0
          %3482 = vmatpush.bf16.msra.mxu0 0
          %3483 = vmatpush.bf16.msra.mxu0 0
          %3484 = vmatpush.bf16.msra.mxu0 0
          %3485 = vmatpush.bf16.msra.mxu0 0
          %3486 = vmatpush.bf16.msra.mxu0 0
          %3487 = vmatpush.bf16.msra.mxu0 0
          %3488 = vmatpush.bf16.msra.mxu0 %v3476
          %3489 = vmatpush.bf16.msra.mxu0 %v3475
          %3490 = vmatmul.bf16.gmra.mxu0 %v3480
          %v3491 = vpop.f32.mrf.mxu0
          %v3492 = vadd.f32 0.0, %v3491
          %v3493 = vpop.f32.mrf.mxu0
          %v3494 = vadd.f32 0.0, %v3493
          %3495 = vdwg.mxu0
          %3497 = vrot.lane.b32.xlu0 %v3466, 96
          %v3498 = vpop.permute.xlu0 %3497
          %v3500 = vsel %vm3210, %v3498, 0
          %3502 = vmatpush.bf16.msra.mxu0 0
          %3503 = vmatpush.bf16.msra.mxu0 0
          %3504 = vmatpush.bf16.msra.mxu0 0
          %3505 = vmatpush.bf16.msra.mxu0 0
          %3506 = vmatpush.bf16.msra.mxu0 0
          %3507 = vmatpush.bf16.msra.mxu0 0
          %3508 = vmatpush.bf16.msra.mxu0 %v3476
          %3509 = vmatpush.bf16.msra.mxu0 %v3475
          %3510 = vmatmul.bf16.gmra.mxu0 %v3500
          %v3511 = vpop.f32.mrf.mxu0
          %v3512 = vadd.f32 0.0, %v3511
          %v3513 = vpop.f32.mrf.mxu0
          %v3514 = vadd.f32 0.0, %v3513
          %3515 = vdwg.mxu0
          %3516 = vrot.lane.b32.xlu0 %v3466, 64
          %v3517 = vpop.permute.xlu0 %3516
          %v3519 = vsel %vm3210, %v3517, 0
          %3521 = vmatpush.bf16.msra.mxu0 0
          %3522 = vmatpush.bf16.msra.mxu0 0
          %3523 = vmatpush.bf16.msra.mxu0 0
          %3524 = vmatpush.bf16.msra.mxu0 0
          %3525 = vmatpush.bf16.msra.mxu0 0
          %3526 = vmatpush.bf16.msra.mxu0 0
          %3527 = vmatpush.bf16.msra.mxu0 %v3476
          %3528 = vmatpush.bf16.msra.mxu0 %v3475
          %3529 = vmatmul.bf16.gmra.mxu0 %v3519
          %v3530 = vpop.f32.mrf.mxu0
          %v3531 = vadd.f32 0.0, %v3530
          %v3532 = vpop.f32.mrf.mxu0
          %v3533 = vadd.f32 0.0, %v3532
          %3534 = vdwg.mxu0
          %v3539 = vunpack.c.l.b16 %v3462
          %v3540 = vunpack.c.l.b16 %v3463
          %v3541 = vunpack.c.l.b16 %v3464
          %v3542 = vunpack.c.l.b16 %v3465
          %v3543 = vpack.c.b16 %v3540, %v3539
          %v3544 = vpack.c.b16 %v3542, %v3541
          %3547 = vmatpush.bf16.msra.mxu0 0
          %3548 = vmatpush.bf16.msra.mxu0 0
          %3549 = vmatpush.bf16.msra.mxu0 0
          %3550 = vmatpush.bf16.msra.mxu0 0
          %3551 = vmatpush.bf16.msra.mxu0 0
          %3552 = vmatpush.bf16.msra.mxu0 0
          %3553 = vmatpush.bf16.msra.mxu0 %v3544
          %3554 = vmatpush.bf16.msra.mxu0 %v3543
          %3555 = vmatmul.bf16.gmra.mxu0 %v3480
          %v3556 = vpop.f32.mrf.mxu0
          %v3557 = vadd.f32 0.0, %v3556
          %v3558 = vpop.f32.mrf.mxu0
          %v3559 = vadd.f32 0.0, %v3558
          %3560 = vdwg.mxu0
          %3561 = vmatpush.bf16.msra.mxu0 0
          %3562 = vmatpush.bf16.msra.mxu0 0
          %3563 = vmatpush.bf16.msra.mxu0 0
          %3564 = vmatpush.bf16.msra.mxu0 0
          %3565 = vmatpush.bf16.msra.mxu0 0
          %3566 = vmatpush.bf16.msra.mxu0 0
          %3567 = vmatpush.bf16.msra.mxu0 %v3544
          %3568 = vmatpush.bf16.msra.mxu0 %v3543
          %3569 = vmatmul.bf16.gmra.mxu0 %v3500
          %v3570 = vpop.f32.mrf.mxu0
          %v3571 = vadd.f32 0.0, %v3570
          %v3572 = vpop.f32.mrf.mxu0
          %v3573 = vadd.f32 0.0, %v3572
          %3574 = vdwg.mxu0
          %3575 = vmatpush.bf16.msra.mxu0 0
          %3576 = vmatpush.bf16.msra.mxu0 0
          %3577 = vmatpush.bf16.msra.mxu0 0
          %3578 = vmatpush.bf16.msra.mxu0 0
          %3579 = vmatpush.bf16.msra.mxu0 0
          %3580 = vmatpush.bf16.msra.mxu0 0
          %3581 = vmatpush.bf16.msra.mxu0 %v3544
          %3582 = vmatpush.bf16.msra.mxu0 %v3543
          %3583 = vmatmul.bf16.gmra.mxu0 %v3519
          %v3584 = vpop.f32.mrf.mxu0
          %v3585 = vadd.f32 0.0, %v3584
          %v3586 = vpop.f32.mrf.mxu0
          %v3587 = vadd.f32 0.0, %v3586
          %3588 = vdwg.mxu0
          %v3589 = vmul.f32 %v3557, %v3557
          %v3590 = vmul.f32 %v3559, %v3559
          %v3591 = vmul.f32 %v3571, %v3571
          %v3592 = vmul.f32 %v3573, %v3573
          %v3593 = vadd.f32 %v3589, %v3591
          %v3594 = vadd.f32 %v3590, %v3592
          %v3595 = vmul.f32 %v3585, %v3585
          %v3596 = vmul.f32 %v3587, %v3587
          %v3597 = vadd.f32 %v3593, %v3595
          %v3598 = vadd.f32 %v3594, %v3596
          %v3599 = vrsqrt.pop %v3597
          %v3600 = vmul.f32 %v3599, %v3597
          %v3601 = vmul.f32 %v3600, %v3599
          %v3602 = vmul.f32 0.5, %v3601
          %v3603 = vsub.f32 1.5, %v3602
          %v3604 = vmul.f32 %v3599, %v3603
          %v3605 = vmul.f32 %v3597, %v3604
          %vm3606 = vcmp.eq.f32.partialorder %v3597, inf
          %v3607 = vsel %vm3606, %v3597, %v3605
          %vm3608 = vcmp.eq.f32.partialorder %v3597, 0.0
          %v3609 = vand.u32 %v3597, 2147483648
          %v3610 = vsel %vm3608, %v3609, %v3607
          %v3611 = vrsqrt.pop %v3598
          %v3612 = vmul.f32 %v3611, %v3598
          %v3613 = vmul.f32 %v3612, %v3611
          %v3614 = vmul.f32 0.5, %v3613
          %v3615 = vsub.f32 1.5, %v3614
          %v3616 = vmul.f32 %v3611, %v3615
          %v3617 = vmul.f32 %v3598, %v3616
          %vm3618 = vcmp.eq.f32.partialorder %v3598, inf
          %v3619 = vsel %vm3618, %v3598, %v3617
          %vm3620 = vcmp.eq.f32.partialorder %v3598, 0.0
          %v3621 = vand.u32 %v3598, 2147483648
          %v3622 = vsel %vm3620, %v3621, %v3619
          %v3623 = vld [vmem:[%s13] sm:$0xf]
          %v3624 = vld [vmem:[%s13 + $0x4] sm:$0xf]
          %v3625 = vld [vmem:[%s13 + $0x8] sm:$0xf]
          %v3626 = vld [vmem:[%s13 + $0xc] sm:$0xf]
          %v3627 = vpack.c.bf16 %v3445, %v3444
          %v3628 = vld [vmem:[#allocation20] sm:$0xf]
          %v3629 = vld [vmem:[#allocation20 + $0x4] sm:$0xf]
          %v3630 = vld [vmem:[#allocation20 + $0x8] sm:$0xf]
          %v3631 = vld [vmem:[#allocation20 + $0xc] sm:$0xf]
          %v3632 = vpack.c.bf16 %v3622, %v3610
          %v3637 = vunpack.c.l.b16 %v3628
          %v3638 = vunpack.c.l.b16 %v3629
          %v3639 = vunpack.c.l.b16 %v3630
          %v3640 = vunpack.c.l.b16 %v3631
          %v3641 = vpack.c.b16 %v3638, %v3637
          %v3642 = vpack.c.b16 %v3640, %v3639
          %v3646 = vsel %vm3210, %v3632, 0
          %3648 = vmatpush.bf16.msra.mxu0 0
          %3649 = vmatpush.bf16.msra.mxu0 0
          %3650 = vmatpush.bf16.msra.mxu0 0
          %3651 = vmatpush.bf16.msra.mxu0 0
          %3652 = vmatpush.bf16.msra.mxu0 0
          %3653 = vmatpush.bf16.msra.mxu0 0
          %3654 = vmatpush.bf16.msra.mxu0 %v3642
          %3655 = vmatpush.bf16.msra.mxu0 %v3641
          %3656 = vmatmul.bf16.gmra.mxu0 %v3646
          %v3657 = vpop.f32.mrf.mxu0
          %v3658 = vadd.f32 0.0, %v3657
          %v3659 = vpop.f32.mrf.mxu0
          %v3660 = vadd.f32 0.0, %v3659
          %3661 = vdwg.mxu0
          %v3666 = vunpack.c.l.b16 %v3623
          %v3667 = vunpack.c.l.b16 %v3624
          %v3668 = vunpack.c.l.b16 %v3625
          %v3669 = vunpack.c.l.b16 %v3626
          %v3670 = vpack.c.b16 %v3667, %v3666
          %v3671 = vpack.c.b16 %v3669, %v3668
          %v3675 = vsel %vm3210, %v3627, 0
          %3677 = vmatpush.bf16.msra.mxu0 0
          %3678 = vmatpush.bf16.msra.mxu0 0
          %3679 = vmatpush.bf16.msra.mxu0 0
          %3680 = vmatpush.bf16.msra.mxu0 0
          %3681 = vmatpush.bf16.msra.mxu0 0
          %3682 = vmatpush.bf16.msra.mxu0 0
          %3683 = vmatpush.bf16.msra.mxu0 %v3671
          %3684 = vmatpush.bf16.msra.mxu0 %v3670
          %3685 = vmatmul.bf16.gmra.mxu0 %v3675
          %v3686 = vpop.f32.mrf.mxu0
          %v3687 = vadd.f32 %v3658, %v3686
          %v3688 = vpop.f32.mrf.mxu0
          %v3689 = vadd.f32 %v3660, %v3688
          %3690 = vdwg.mxu0
          %v3691 = vld [vmem:[%s15] sm:$0x1]
          %v3693 = vperm.slane %v3691, 0
          %v3695 = vadd.f32 %v3687, %v3693
          %v3696 = vadd.f32 %v3689, %v3693
          %v3697 = vxor.u32 %v3695, 2147483648
          %v3698 = vxor.u32 %v3696, 2147483648
          %v3699 = vmul.f32 %v3697, 1.442695
          %v3700 = vpow.pop %v3699
          %v3701 = vmul.f32 %v3698, 1.442695
          %v3702 = vpow.pop %v3701
          %v3703 = vadd.f32 %v3700, 1.0
          %v3704 = vadd.f32 %v3702, 1.0
          %v3705 = vrcp.pop %v3703
          %v3706 = vmul.f32 %v3703, %v3705
          %v3707 = vsub.f32 1.0, %v3706
          %v3708 = vmul.f32 %v3705, %v3707
          %v3709 = vadd.f32 %v3705, %v3708
          %vm3710 = vweird.f32 %v3703
          %vm3711 = vweird.f32 %v3705
          %vm3712 = vmor %vm3710, %vm3711
          %v3713 = vsel %vm3712, %v3705, %v3709
          %v3714 = vand.u32 2147483647, %v3703
          %vm3715 = vcmp.eq.f32.partialorder %v3714, 8.507059e+37
          %v3716 = vand.u32 %v3703, 2147483648
          %v3717 = vor.u32 1.1754944e-38, %v3716
          %v3718 = vsel %vm3715, %v3717, %v3713
          %v3719 = vmul.f32 1.0, %v3718
          %v3720 = vrcp.pop %v3704
          %v3721 = vmul.f32 %v3704, %v3720
          %v3722 = vsub.f32 1.0, %v3721
          %v3723 = vmul.f32 %v3720, %v3722
          %v3724 = vadd.f32 %v3720, %v3723
          %vm3725 = vweird.f32 %v3704
          %vm3726 = vweird.f32 %v3720
          %vm3727 = vmor %vm3725, %vm3726
          %v3728 = vsel %vm3727, %v3720, %v3724
          %v3729 = vand.u32 2147483647, %v3704
          %vm3730 = vcmp.eq.f32.partialorder %v3729, 8.507059e+37
          %v3731 = vand.u32 %v3704, 2147483648
          %v3732 = vor.u32 1.1754944e-38, %v3731
          %v3733 = vsel %vm3730, %v3732, %v3728
          %v3734 = vmul.f32 1.0, %v3733
          %v3735 = vmul.f32 %v3695, %v3719
          %v3736 = vmul.f32 %v3696, %v3734
          %v3737 = vld [vmem:[#allocation21] sm:$0xf]
          %v3738 = vld [vmem:[#allocation21 + $0x4] sm:$0xf]
          %v3739 = vld [vmem:[#allocation21 + $0x8] sm:$0xf]
          %v3740 = vld [vmem:[#allocation21 + $0xc] sm:$0xf]
          %v3741 = vpack.c.bf16 %v3736, %v3735
          %v3742 = vld [vmem:[%s17] sm:$0x1]
          %v3744 = vperm.slane %v3742, 0
          %v3750 = vunpack.c.l.b16 %v3737
          %v3751 = vunpack.c.l.b16 %v3738
          %v3752 = vunpack.c.l.b16 %v3739
          %v3753 = vunpack.c.l.b16 %v3740
          %v3754 = vpack.c.b16 %v3751, %v3750
          %v3755 = vpack.c.b16 %v3753, %v3752
          %v3759 = vsel %vm3210, %v3741, 0
          %3761 = vmatpush.bf16.msra.mxu0 0
          %3762 = vmatpush.bf16.msra.mxu0 0
          %3763 = vmatpush.bf16.msra.mxu0 0
          %3764 = vmatpush.bf16.msra.mxu0 0
          %3765 = vmatpush.bf16.msra.mxu0 0
          %3766 = vmatpush.bf16.msra.mxu0 0
          %3767 = vmatpush.bf16.msra.mxu0 %v3755
          %3768 = vmatpush.bf16.msra.mxu0 %v3754
          %3769 = vmatmul.bf16.gmra.mxu0 %v3759
          %v3770 = vpop.f32.mrf.mxu0
          %v3771 = vadd.f32 %v3744, %v3770
          %v3772 = vpop.f32.mrf.mxu0
          %v3773 = vadd.f32 %v3744, %v3772
          %3774 = vdwg.mxu0
          %v3775 = vmul.f32 %v3492, %v3557
          %v3776 = vmul.f32 %v3494, %v3559
          %v3777 = vmul.f32 %v3512, %v3571
          %v3778 = vmul.f32 %v3514, %v3573
          %v3779 = vadd.f32 %v3775, %v3777
          %v3780 = vadd.f32 %v3776, %v3778
          %v3781 = vmul.f32 %v3531, %v3585
          %v3782 = vmul.f32 %v3533, %v3587
          %v3783 = vadd.f32 %v3779, %v3781
          %v3784 = vadd.f32 %v3780, %v3782
          %v3785 = vadd.f32 %v3444, %v3771
          %v3786 = vadd.f32 %v3445, %v3773
          %3789 = vrot.lane.b32.xlu0 %v3783, 32
          %v3790 = vpop.permute.xlu0 %3789
          %3791 = vrot.lane.b32.xlu0 %v3784, 32
          %v3792 = vpop.permute.xlu0 %3791
          %v3795 = vmul.f32 %v3771, %v3790
          %v3796 = vmul.f32 %v3773, %v3792
          %3799 = vrot.lane.b32.xlu0 %v3795, 96
          %v3800 = vpop.permute.xlu0 %3799
          %3801 = vrot.lane.b32.xlu0 %v3796, 96
          %v3802 = vpop.permute.xlu0 %3801
          %v3805 = vadd.f32 %v3785, %v3800
          %v3806 = vadd.f32 %v3786, %v3802
          %3809 = vrot.lane.b32.xlu0 %v3492, 64
          %v3810 = vpop.permute.xlu0 %3809
          %3811 = vrot.lane.b32.xlu0 %v3494, 64
          %v3812 = vpop.permute.xlu0 %3811
          %v3815 = vmul.f32 %v3771, %v3810
          %v3816 = vmul.f32 %v3773, %v3812
          %3819 = vrot.lane.b32.xlu0 %v3815, 64
          %v3820 = vpop.permute.xlu0 %3819
          %3821 = vrot.lane.b32.xlu0 %v3816, 64
          %v3822 = vpop.permute.xlu0 %3821
          %v3825 = vadd.f32 %v3456, %v3820
          %v3826 = vadd.f32 %v3457, %v3822
          %3829 = vrot.lane.b32.xlu0 %v3512, 64
          %v3830 = vpop.permute.xlu0 %3829
          %3831 = vrot.lane.b32.xlu0 %v3514, 64
          %v3832 = vpop.permute.xlu0 %3831
          %v3835 = vmul.f32 %v3771, %v3830
          %v3836 = vmul.f32 %v3773, %v3832
          %3839 = vrot.lane.b32.xlu0 %v3835, 96
          %v3840 = vpop.permute.xlu0 %3839
          %3841 = vrot.lane.b32.xlu0 %v3836, 96
          %v3842 = vpop.permute.xlu0 %3841
          %v3845 = vadd.f32 %v3456, %v3840
          %v3846 = vadd.f32 %v3457, %v3842
          %3849 = vrot.lane.b32.xlu0 %v3531, 64
          %v3850 = vpop.permute.xlu0 %3849
          %3851 = vrot.lane.b32.xlu0 %v3533, 64
          %v3852 = vpop.permute.xlu0 %3851
          %v3855 = vmul.f32 %v3771, %v3850
          %v3856 = vmul.f32 %v3773, %v3852
          %v3857 = vadd.f32 %v3456, %v3855
          %v3858 = vadd.f32 %v3457, %v3856
          %v3859 = vsel %vm3210, %v3825, %v3845
          %v3860 = vsel %vm3210, %v3826, %v3846
          %v3861 = vsel %vm3215, %v3859, %v3857
          %v3862 = vsel %vm3215, %v3860, %v3858
          %3865 = vrot.lane.b32.xlu0 %v3861, 32
          %v3866 = vpop.permute.xlu0 %3865
          %3867 = vrot.lane.b32.xlu0 %v3862, 32
          %v3868 = vpop.permute.xlu0 %3867
          %v3871 = vsel %vm3210, %v3805, %v3866
          %v3872 = vsel %vm3210, %v3806, %v3868
          %3873 = vst [vmem:[#allocation23] sm:$0xff] %v3871
          %3874 = vst [vmem:[#allocation23 + $0x8] sm:$0xff] %v3872
        $region124: #{tpu_custom_call.1} parent=83 // pred_fallthru
          _
        // Predicated region
        $region125: #{tpu_custom_call.1} parent=83 // pred_check
          %p3875 = pneg %p402
        $region126: #{tpu_custom_call.1} parent=83 // pred_check_branch
          %3877 = sbr.rel (%p3875) target = $region128
        $region127: #{tpu_custom_call.1} parent=83 // pred_region
          %3879 = vsyncadd [#allocation11], 0
          %s3880 = sshll.u32 [#allocation23], 4
          %s3881 = int_to_ptr.vmem [resolvable:$true] %s3880
          %s3882 = sshll.u32 %s18, 4
          %s3883 = int_to_ptr.hbm [resolvable:$true] %s3882
          %3888 = dma.vmem_to_hbm [thread:$0]  %s3881, 256, %s3883, [#allocation11], 128, 128, 8
        $region128: #{tpu_custom_call.1} parent=83 // pred_fallthru
          _
        // Predicated region
        $region129: #{tpu_custom_call.1} parent=83 // pred_check
          %p3889 = pneg %p402
        $region130: #{tpu_custom_call.1} parent=83 // pred_check_branch
          %3891 = sbr.rel (%p3889) target = $region132
        $region131: #{tpu_custom_call.1} parent=83 // pred_region
          %3893 = dma.done [#allocation11], 256
        $region132: #{tpu_custom_call.1} parent=83 // pred_fallthru
          _
      $region84: #{tpu_custom_call.1} parent=5 // pred_fallthru
        _
      %p3894 = scmp.le.s32.totalorder 2, %s43
      // Predicated region
      $region133: #{tpu_custom_call.1} parent=5 // pred_check
        %p3895 = pneg %p3894
      $region134: #{tpu_custom_call.1} parent=5 // pred_check_branch
        %3897 = sbr.rel (%p3895) target = $region136
      $region135: #{tpu_custom_call.1} parent=5 // pred_region
        %s3898 = ssub.s32 %s43, 2
      $region136: #{tpu_custom_call.1} parent=5 // pred_fallthru
        _
    $region6: #{tpu_custom_call.1} parent=1 // loop_footer
      %s47 = sadd.s32 1, %s43
    $region7: #{tpu_custom_call.1} parent=1 // loop_footer_branch
      %42 = sbr.rel target = $region3
    $region8: #{tpu_custom_call.1} parent=1 // loop_exit
      _
    %3899 = vsyncpa [#allocation10], 1
    %s3900 = scalar_lea.sflag [#allocation10], 1
    %3901 = vsyncpa %s3900, 1
    %3902 = vsyncpa [#allocation13], 1
    %3903 = vsyncpa [#allocation16], 1
    %3904 = vsyncpa [#allocation19], 1
    %3905 = vsyncpa [#allocation22], 1
    %3906 = vsyncpa [#allocation11], 1
    %s3907 = scalar_lea.sflag [#allocation11], 1
    %3908 = vsyncpa %s3907, 1

</llo_original>
